<compile_context>
chip_gen: v5e
topology: v5e:2x2
jax: 0.10.0
libtpu: 0.0.40
codegen_flags: <defaults>
</compile_context>

<pallas_src>
import functools
import math

import jax
import jax.numpy as jnp
from jax.experimental import pallas as pl
from jax.experimental.pallas import tpu as pltpu

FMNIST_INPUT_SIZE = 784
HIDDEN_LAYER_SIZE_1 = 512
HIDDEN_LAYER_SIZE_2 = 256

F_PAD = 896    # 784 padded to 7 * 128 (lane-dense input/output slabs)
D_PAD = 128    # latent dim padded to one full vreg lane width


def _round_up(x, m):
    return ((x + m - 1) // m) * m


def _choose_tb(batch):
    """Pick the batch tile (rows per grid step) — see header comment."""
    rows = _round_up(batch, 8)
    if rows <= 256:
        return rows                      # single tile, no wasted rows
    tb = 512                             # v7x-VMEM-safe upper bound
    while rows < 2 * tb:                 # guarantee >= 2 grid steps
        tb //= 2
    return tb


def vae_forward_kernel(
    x_ref,            # [TB, 896]   bf16 padded flattened input tile
    eps_ref,          # [TB, 128]   f32  padded standard-normal noise tile
    w1e, b1e,         # encoder fc1: [896, 512] bf16, [1, 512] f32
    w2e, b2e,         # encoder fc2: [512, 256] bf16, [1, 256] f32
    w3e, b3e,         # encoder fc3 fused [mu | log_sigma]: [256, 256] bf16, [1, 256] f32
    w1d, b1d,         # decoder fc1: [128, 256] bf16, [1, 256] f32
    w2d, b2d,         # decoder fc2: [256, 512] bf16, [1, 512] f32
    w3d, b3d,         # decoder fc3: [512, 896] bf16, [1, 896] f32
    img_ref,          # [TB, 896]   f32  output tile (sigmoid pixels, cols >=784 junk)
):
    bf16 = jnp.bfloat16
    f32 = jnp.float32

    # ----- encoder (bf16 MXU operands, f32 accumulation / elementwise) -----
    h = jnp.dot(x_ref[...], w1e[...], preferred_element_type=f32) + b1e[...]
    h = jnp.maximum(h, 0.0)
    h = jnp.dot(h.astype(bf16), w2e[...], preferred_element_type=f32) + b2e[...]
    h = jnp.maximum(h, 0.0)
    # fused projection: lanes [0:128) -> mu, lanes [128:256) -> log_sigma
    enc = jnp.dot(h.astype(bf16), w3e[...], preferred_element_type=f32) + b3e[...]
    mu = enc[:, :D_PAD]
    log_sigma = enc[:, D_PAD:]

    # ----- reparameterize: z = mu + exp(log_sigma) * eps -----
    # padded lanes: mu = 0, log_sigma = 0, eps = 0  =>  z = 0 exactly.
    z = mu + jnp.exp(log_sigma) * eps_ref[...]

    # ----- decoder (single full-K dot per layer; no accumulator traffic) -----
    h = jnp.dot(z.astype(bf16), w1d[...], preferred_element_type=f32) + b1d[...]
    h = jnp.maximum(h, 0.0)
    h = jnp.dot(h.astype(bf16), w2d[...], preferred_element_type=f32) + b2d[...]
    h = jnp.maximum(h, 0.0)
    logits = jnp.dot(h.astype(bf16), w3d[...], preferred_element_type=f32) + b3d[...]
    img_ref[...] = jax.nn.sigmoid(logits)


def init_params(key, dim_encoding):
    """Deterministic init mimicking nn.Linear default (U[-1/sqrt(fan_in), +]); f32."""
    def linear(k, fan_in, fan_out):
        kw, kb = jax.random.split(k)
        bound = 1.0 / math.sqrt(fan_in)
        w = jax.random.uniform(kw, (fan_in, fan_out), jnp.float32, -bound, bound)
        b = jax.random.uniform(kb, (1, fan_out), jnp.float32, -bound, bound)
        return w, b

    keys = jax.random.split(key, 6)
    w1e, b1e = linear(keys[0], FMNIST_INPUT_SIZE, HIDDEN_LAYER_SIZE_1)
    w2e, b2e = linear(keys[1], HIDDEN_LAYER_SIZE_1, HIDDEN_LAYER_SIZE_2)
    w3e, b3e = linear(keys[2], HIDDEN_LAYER_SIZE_2, dim_encoding * 2)
    w1d, b1d = linear(keys[3], dim_encoding, HIDDEN_LAYER_SIZE_2)
    w2d, b2d = linear(keys[4], HIDDEN_LAYER_SIZE_2, HIDDEN_LAYER_SIZE_1)
    w3d, b3d = linear(keys[5], HIDDEN_LAYER_SIZE_1, FMNIST_INPUT_SIZE)
    return (w1e, b1e, w2e, b2e, w3e, b3e, w1d, b1d, w2d, b2d, w3d, b3d)


def pack_params(raw, dim_encoding):
    """Zero-pad to lane-dense shapes and cast weight slabs to bf16 (biases f32)."""
    (w1e, b1e, w2e, b2e, w3e, b3e, w1d, b1d, w2d, b2d, w3d, b3d) = raw
    D = dim_encoding
    bf16, f32 = jnp.bfloat16, jnp.float32

    w1e_p = jnp.zeros((F_PAD, HIDDEN_LAYER_SIZE_1), bf16).at[:FMNIST_INPUT_SIZE].set(
        w1e.astype(bf16))
    w2e_p = w2e.astype(bf16)
    w3e_p = (jnp.zeros((HIDDEN_LAYER_SIZE_2, 2 * D_PAD), bf16)
             .at[:, :D].set(w3e[:, :D].astype(bf16))
             .at[:, D_PAD:D_PAD + D].set(w3e[:, D:].astype(bf16)))
    b3e_p = (jnp.zeros((1, 2 * D_PAD), f32)
             .at[:, :D].set(b3e[:, :D])
             .at[:, D_PAD:D_PAD + D].set(b3e[:, D:]))
    w1d_p = jnp.zeros((D_PAD, HIDDEN_LAYER_SIZE_2), bf16).at[:D].set(w1d.astype(bf16))
    w2d_p = w2d.astype(bf16)
    w3d_p = jnp.zeros((HIDDEN_LAYER_SIZE_1, F_PAD), bf16).at[:, :FMNIST_INPUT_SIZE].set(
        w3d.astype(bf16))
    b3d_p = jnp.zeros((1, F_PAD), f32).at[:, :FMNIST_INPUT_SIZE].set(b3d)

    return (w1e_p, b1e.astype(f32), w2e_p, b2e.astype(f32), w3e_p, b3e_p,
            w1d_p, b1d.astype(f32), w2d_p, b2d.astype(f32), w3d_p, b3d_p)


def vae_autoencoder_forward(x_nchw, packed_params, eps, dim_encoding):
    """x_nchw: [B, 1, 28, 28] f32, eps: [B, D] f32 -> [B, 1, 28, 28] f32."""
    B = x_nchw.shape[0]
    D = dim_encoding
    x_flat = x_nchw.reshape(B, FMNIST_INPUT_SIZE)

    # Adaptive batch tile; pad batch to a multiple of it, pad feature / latent lanes.
    TB = _choose_tb(B)
    Bp = pl.cdiv(B, TB) * TB

    # Input slab stored bf16 (kernel consumed bf16 anyway -> bit-identical,
    # half the DMA bytes, cast fused into the pad copy).  eps stays f32
    # because it feeds f32 elementwise math.
    x_pad = (jnp.zeros((Bp, F_PAD), jnp.bfloat16)
             .at[:B, :FMNIST_INPUT_SIZE].set(x_flat.astype(jnp.bfloat16)))
    eps_pad = jnp.zeros((Bp, D_PAD), jnp.float32).at[:B, :D].set(eps.astype(jnp.float32))

    weights = packed_params
    grid = (Bp // TB,)

    def row_spec(cols):
        return pl.BlockSpec((TB, cols), lambda i: (i, 0))

    def resident_spec(arr):
        # Full array, constant block index -> stays resident in VMEM across grid steps.
        return pl.BlockSpec(arr.shape, lambda i: (0, 0))

    in_specs = [row_spec(F_PAD), row_spec(D_PAD)] + [resident_spec(w) for w in weights]

    flops_per_row = 2 * (F_PAD * 512 + 512 * 256 + 256 * 2 * D_PAD
                         + D_PAD * 256 + 256 * 512 + 512 * F_PAD)
    weight_bytes = sum(int(w.size) * w.dtype.itemsize for w in weights)
    cost = pl.CostEstimate(
        flops=int(Bp) * flops_per_row,
        transcendentals=int(Bp) * (D_PAD + F_PAD),
        bytes_accessed=weight_bytes + int(Bp) * (F_PAD * 2 + D_PAD * 4 + F_PAD * 4),
    )

    img_pad = pl.pallas_call(
        vae_forward_kernel,
        out_shape=jax.ShapeDtypeStruct((Bp, F_PAD), jnp.float32),
        grid=grid,
        in_specs=in_specs,
        out_specs=row_spec(F_PAD),
        compiler_params=pltpu.CompilerParams(
            # batch tiles are independent -> megacore / dual-TC sharding on v7x.
            dimension_semantics=("parallel",),
            # NOTE: no vmem_limit_bytes override; at TB<=512 the resident
            # weights + double-buffered tiles are ~15 MiB, under every
            # generation's default scoped VMEM limit (incl. v7x's ~32 MiB).
        ),
        cost_estimate=cost,
    )(x_pad, eps_pad, *weights)

    return img_pad[:B, :FMNIST_INPUT_SIZE].reshape(B, 1, 28, 28)


def reference_forward(x_nchw, raw_params, eps, dim_encoding):
    """Pure-JAX reference with the same bf16-weight / f32-accumulate semantics."""
    (w1e, b1e, w2e, b2e, w3e, b3e, w1d, b1d, w2d, b2d, w3d, b3d) = raw_params
    D = dim_encoding
    bf16, f32 = jnp.bfloat16, jnp.float32
    B = x_nchw.shape[0]
    dot = functools.partial(jnp.dot, preferred_element_type=f32)

    xf = x_nchw.reshape(B, FMNIST_INPUT_SIZE)
    h = jax.nn.relu(dot(xf.astype(bf16), w1e.astype(bf16)) + b1e)
    h = jax.nn.relu(dot(h.astype(bf16), w2e.astype(bf16)) + b2e)
    enc = dot(h.astype(bf16), w3e.astype(bf16)) + b3e
    mu, ls = enc[:, :D], enc[:, D:]
    z = mu + jnp.exp(ls) * eps
    h = jax.nn.relu(dot(z.astype(bf16), w1d.astype(bf16)) + b1d)
    h = jax.nn.relu(dot(h.astype(bf16), w2d.astype(bf16)) + b2d)
    img = jax.nn.sigmoid(dot(h.astype(bf16), w3d.astype(bf16)) + b3d)
    return img.reshape(B, 1, 28, 28)


if __name__ == "__main__":
    B = 8             # small demo batch -> adaptive TB picks an 8-row tile
                      # (no wasted rows); large batches get 256-512 row tiles.
    DIM_ENCODING = 2

    key = jax.random.PRNGKey(0)
    k_params, k_x, k_eps = jax.random.split(key, 3)

    raw_params = init_params(k_params, DIM_ENCODING)
    packed_params = pack_params(raw_params, DIM_ENCODING)

    x = jax.random.uniform(k_x, (B, 1, 28, 28), jnp.float32)        # image-like input
    # TODO(synk): torch Normal(mu, sigma).rsample() draws noise internally; here the
    # standard-normal eps is an explicit input (same reparameterization semantics).
    eps = jax.random.normal(k_eps, (B, DIM_ENCODING), jnp.float32)

    out = vae_autoencoder_forward(x, packed_params, eps, DIM_ENCODING)
    out = jax.block_until_ready(out)

    assert out.shape == (B, 1, 28, 28), out.shape
    assert out.dtype == jnp.float32
    assert bool(jnp.all((out >= 0.0) & (out <= 1.0)))  # sigmoid output range

    ref = reference_forward(x, raw_params, eps, DIM_ENCODING)
    assert jnp.allclose(out, ref, atol=1e-3, rtol=1e-3), float(jnp.max(jnp.abs(out - ref)))

    print("KERNEL_OK")
</pallas_src>

<mosaic_0001>
module attributes {stable_mosaic.version = 11 : i64} {
  func.func @vae_forward_kernel(%arg0: i32, %arg1: memref<8x896xbf16, #tpu.memory_space<vmem>>, %arg2: memref<8x128xf32, #tpu.memory_space<vmem>>, %arg3: memref<896x512xbf16, #tpu.memory_space<vmem>>, %arg4: memref<1x512xf32, #tpu.memory_space<vmem>>, %arg5: memref<512x256xbf16, #tpu.memory_space<vmem>>, %arg6: memref<1x256xf32, #tpu.memory_space<vmem>>, %arg7: memref<256x256xbf16, #tpu.memory_space<vmem>>, %arg8: memref<1x256xf32, #tpu.memory_space<vmem>>, %arg9: memref<128x256xbf16, #tpu.memory_space<vmem>>, %arg10: memref<1x256xf32, #tpu.memory_space<vmem>>, %arg11: memref<256x512xbf16, #tpu.memory_space<vmem>>, %arg12: memref<1x512xf32, #tpu.memory_space<vmem>>, %arg13: memref<512x896xbf16, #tpu.memory_space<vmem>>, %arg14: memref<1x896xf32, #tpu.memory_space<vmem>>, %arg15: memref<8x896xf32, #tpu.memory_space<vmem>>) attributes {dimension_semantics = [#tpu.dimension_semantics<parallel>], iteration_bounds = array<i64: 1>, scalar_prefetch = 0 : i64, scratch_operands = 0 : i64, tpu.core_type = #tpu.core_type<tc>, window_params = [{transform_indices = @transform_0, window_bounds = array<i64: 8, 896>}, {transform_indices = @transform_1, window_bounds = array<i64: 8, 128>}, {pipeline_mode = #tpu.pipeline_mode<synchronous>, transform_indices = @transform_2, window_bounds = array<i64: 896, 512>}, {pipeline_mode = #tpu.pipeline_mode<synchronous>, transform_indices = @transform_3, window_bounds = array<i64: 1, 512>}, {pipeline_mode = #tpu.pipeline_mode<synchronous>, transform_indices = @transform_4, window_bounds = array<i64: 512, 256>}, {pipeline_mode = #tpu.pipeline_mode<synchronous>, transform_indices = @transform_5, window_bounds = array<i64: 1, 256>}, {pipeline_mode = #tpu.pipeline_mode<synchronous>, transform_indices = @transform_6, window_bounds = array<i64: 256, 256>}, {pipeline_mode = #tpu.pipeline_mode<synchronous>, transform_indices = @transform_7, window_bounds = array<i64: 1, 256>}, {pipeline_mode = #tpu.pipeline_mode<synchronous>, transform_indices = @transform_8, window_bounds = array<i64: 128, 256>}, {pipeline_mode = #tpu.pipeline_mode<synchronous>, transform_indices = @transform_9, window_bounds = array<i64: 1, 256>}, {pipeline_mode = #tpu.pipeline_mode<synchronous>, transform_indices = @transform_10, window_bounds = array<i64: 256, 512>}, {pipeline_mode = #tpu.pipeline_mode<synchronous>, transform_indices = @transform_11, window_bounds = array<i64: 1, 512>}, {pipeline_mode = #tpu.pipeline_mode<synchronous>, transform_indices = @transform_12, window_bounds = array<i64: 512, 896>}, {pipeline_mode = #tpu.pipeline_mode<synchronous>, transform_indices = @transform_13, window_bounds = array<i64: 1, 896>}, {transform_indices = @transform_14, window_bounds = array<i64: 8, 896>}]} {
    %c0 = arith.constant 0 : index
    %c0_0 = arith.constant 0 : index
    %0 = vector.load %arg1[%c0, %c0_0] : memref<8x896xbf16, #tpu.memory_space<vmem>>, vector<8x896xbf16>
    %c0_1 = arith.constant 0 : index
    %c0_2 = arith.constant 0 : index
    %1 = vector.load %arg3[%c0_1, %c0_2] : memref<896x512xbf16, #tpu.memory_space<vmem>>, vector<896x512xbf16>
    %cst = arith.constant dense<0.000000e+00> : vector<8x512xf32>
    %2 = tpu.matmul %0, %1, %cst {dimension_numbers = #tpu.dot_dimension_numbers<[1], [0], [0], [1], [0, 0, 1, 1], [], []>} : vector<8x896xbf16>, vector<896x512xbf16>, vector<8x512xf32> -> vector<8x512xf32>
    %c0_3 = arith.constant 0 : index
    %c0_4 = arith.constant 0 : index
    %3 = vector.load %arg4[%c0_3, %c0_4] : memref<1x512xf32, #tpu.memory_space<vmem>>, vector<1x512xf32>
    %4 = vector.broadcast %3 : vector<1x512xf32> to vector<8x512xf32>
    %5 = arith.addf %2, %4 : vector<8x512xf32>
    %cst_5 = arith.constant 0.000000e+00 : f32
    %6 = vector.broadcast %cst_5 : f32 to vector<8x512xf32>
    %7 = arith.maximumf %5, %6 : vector<8x512xf32>
    %8 = arith.truncf %7 : vector<8x512xf32> to vector<8x512xbf16>
    %c0_6 = arith.constant 0 : index
    %c0_7 = arith.constant 0 : index
    %9 = vector.load %arg5[%c0_6, %c0_7] : memref<512x256xbf16, #tpu.memory_space<vmem>>, vector<512x256xbf16>
    %cst_8 = arith.constant dense<0.000000e+00> : vector<8x256xf32>
    %10 = tpu.matmul %8, %9, %cst_8 {dimension_numbers = #tpu.dot_dimension_numbers<[1], [0], [0], [1], [0, 0, 1, 1], [], []>} : vector<8x512xbf16>, vector<512x256xbf16>, vector<8x256xf32> -> vector<8x256xf32>
    %c0_9 = arith.constant 0 : index
    %c0_10 = arith.constant 0 : index
    %11 = vector.load %arg6[%c0_9, %c0_10] : memref<1x256xf32, #tpu.memory_space<vmem>>, vector<1x256xf32>
    %12 = vector.broadcast %11 : vector<1x256xf32> to vector<8x256xf32>
    %13 = arith.addf %10, %12 : vector<8x256xf32>
    %cst_11 = arith.constant 0.000000e+00 : f32
    %14 = vector.broadcast %cst_11 : f32 to vector<8x256xf32>
    %15 = arith.maximumf %13, %14 : vector<8x256xf32>
    %16 = arith.truncf %15 : vector<8x256xf32> to vector<8x256xbf16>
    %c0_12 = arith.constant 0 : index
    %c0_13 = arith.constant 0 : index
    %17 = vector.load %arg7[%c0_12, %c0_13] : memref<256x256xbf16, #tpu.memory_space<vmem>>, vector<256x256xbf16>
    %cst_14 = arith.constant dense<0.000000e+00> : vector<8x256xf32>
    %18 = tpu.matmul %16, %17, %cst_14 {dimension_numbers = #tpu.dot_dimension_numbers<[1], [0], [0], [1], [0, 0, 1, 1], [], []>} : vector<8x256xbf16>, vector<256x256xbf16>, vector<8x256xf32> -> vector<8x256xf32>
    %c0_15 = arith.constant 0 : index
    %c0_16 = arith.constant 0 : index
    %19 = vector.load %arg8[%c0_15, %c0_16] : memref<1x256xf32, #tpu.memory_space<vmem>>, vector<1x256xf32>
    %20 = vector.broadcast %19 : vector<1x256xf32> to vector<8x256xf32>
    %21 = arith.addf %18, %20 : vector<8x256xf32>
    %22 = vector.extract_strided_slice %21 {offsets = [0, 0], sizes = [8, 128], strides = [1, 1]} : vector<8x256xf32> to vector<8x128xf32>
    %23 = vector.extract_strided_slice %21 {offsets = [0, 128], sizes = [8, 128], strides = [1, 1]} : vector<8x256xf32> to vector<8x128xf32>
    %24 = math.exp %23 : vector<8x128xf32>
    %c0_17 = arith.constant 0 : index
    %c0_18 = arith.constant 0 : index
    %25 = vector.load %arg2[%c0_17, %c0_18] : memref<8x128xf32, #tpu.memory_space<vmem>>, vector<8x128xf32>
    %26 = arith.mulf %24, %25 : vector<8x128xf32>
    %27 = arith.addf %22, %26 : vector<8x128xf32>
    %28 = arith.truncf %27 : vector<8x128xf32> to vector<8x128xbf16>
    %c0_19 = arith.constant 0 : index
    %c0_20 = arith.constant 0 : index
    %29 = vector.load %arg9[%c0_19, %c0_20] : memref<128x256xbf16, #tpu.memory_space<vmem>>, vector<128x256xbf16>
    %cst_21 = arith.constant dense<0.000000e+00> : vector<8x256xf32>
    %30 = tpu.matmul %28, %29, %cst_21 {dimension_numbers = #tpu.dot_dimension_numbers<[1], [0], [0], [1], [0, 0, 1, 1], [], []>} : vector<8x128xbf16>, vector<128x256xbf16>, vector<8x256xf32> -> vector<8x256xf32>
    %c0_22 = arith.constant 0 : index
    %c0_23 = arith.constant 0 : index
    %31 = vector.load %arg10[%c0_22, %c0_23] : memref<1x256xf32, #tpu.memory_space<vmem>>, vector<1x256xf32>
    %32 = vector.broadcast %31 : vector<1x256xf32> to vector<8x256xf32>
    %33 = arith.addf %30, %32 : vector<8x256xf32>
    %cst_24 = arith.constant 0.000000e+00 : f32
    %34 = vector.broadcast %cst_24 : f32 to vector<8x256xf32>
    %35 = arith.maximumf %33, %34 : vector<8x256xf32>
    %36 = arith.truncf %35 : vector<8x256xf32> to vector<8x256xbf16>
    %c0_25 = arith.constant 0 : index
    %c0_26 = arith.constant 0 : index
    %37 = vector.load %arg11[%c0_25, %c0_26] : memref<256x512xbf16, #tpu.memory_space<vmem>>, vector<256x512xbf16>
    %cst_27 = arith.constant dense<0.000000e+00> : vector<8x512xf32>
    %38 = tpu.matmul %36, %37, %cst_27 {dimension_numbers = #tpu.dot_dimension_numbers<[1], [0], [0], [1], [0, 0, 1, 1], [], []>} : vector<8x256xbf16>, vector<256x512xbf16>, vector<8x512xf32> -> vector<8x512xf32>
    %c0_28 = arith.constant 0 : index
    %c0_29 = arith.constant 0 : index
    %39 = vector.load %arg12[%c0_28, %c0_29] : memref<1x512xf32, #tpu.memory_space<vmem>>, vector<1x512xf32>
    %40 = vector.broadcast %39 : vector<1x512xf32> to vector<8x512xf32>
    %41 = arith.addf %38, %40 : vector<8x512xf32>
    %cst_30 = arith.constant 0.000000e+00 : f32
    %42 = vector.broadcast %cst_30 : f32 to vector<8x512xf32>
    %43 = arith.maximumf %41, %42 : vector<8x512xf32>
    %44 = arith.truncf %43 : vector<8x512xf32> to vector<8x512xbf16>
    %c0_31 = arith.constant 0 : index
    %c0_32 = arith.constant 0 : index
    %45 = vector.load %arg13[%c0_31, %c0_32] : memref<512x896xbf16, #tpu.memory_space<vmem>>, vector<512x896xbf16>
    %cst_33 = arith.constant dense<0.000000e+00> : vector<8x896xf32>
    %46 = tpu.matmul %44, %45, %cst_33 {dimension_numbers = #tpu.dot_dimension_numbers<[1], [0], [0], [1], [0, 0, 1, 1], [], []>} : vector<8x512xbf16>, vector<512x896xbf16>, vector<8x896xf32> -> vector<8x896xf32>
    %c0_34 = arith.constant 0 : index
    %c0_35 = arith.constant 0 : index
    %47 = vector.load %arg14[%c0_34, %c0_35] : memref<1x896xf32, #tpu.memory_space<vmem>>, vector<1x896xf32>
    %48 = vector.broadcast %47 : vector<1x896xf32> to vector<8x896xf32>
    %49 = arith.addf %46, %48 : vector<8x896xf32>
    %50 = arith.negf %49 : vector<8x896xf32>
    %51 = math.exp %50 : vector<8x896xf32>
    %cst_36 = arith.constant 1.000000e+00 : f32
    %52 = vector.broadcast %cst_36 : f32 to vector<8x896xf32>
    %53 = arith.addf %52, %51 : vector<8x896xf32>
    %54 = arith.divf %52, %53 : vector<8x896xf32>
    %c0_37 = arith.constant 0 : index
    %c0_38 = arith.constant 0 : index
    %55 = vector.load %arg15[%c0_37, %c0_38] : memref<8x896xf32, #tpu.memory_space<vmem>>, vector<8x896xf32>
    tpu.vector_store %arg15[%c0_37, %c0_38], %54 {strides = array<i32>} : memref<8x896xf32, #tpu.memory_space<vmem>>, vector<8x896xf32>,
    return
  }
  func.func @transform_0(%arg0: i32) -> (i32, i32) {
    %c0_i32 = arith.constant 0 : i32
    %c0_i32_0 = arith.constant 0 : i32
    return %arg0, %c0_i32 : i32, i32
  }
  func.func @transform_1(%arg0: i32) -> (i32, i32) {
    %c0_i32 = arith.constant 0 : i32
    %c0_i32_0 = arith.constant 0 : i32
    return %arg0, %c0_i32 : i32, i32
  }
  func.func @transform_2(%arg0: i32) -> (i32, i32) {
    %c0_i32 = arith.constant 0 : i32
    %c0_i32_0 = arith.constant 0 : i32
    %c0_i32_1 = arith.constant 0 : i32
    return %c0_i32, %c0_i32_0 : i32, i32
  }
  func.func @transform_3(%arg0: i32) -> (i32, i32) {
    %c0_i32 = arith.constant 0 : i32
    %c0_i32_0 = arith.constant 0 : i32
    %c0_i32_1 = arith.constant 0 : i32
    return %c0_i32, %c0_i32_0 : i32, i32
  }
  func.func @transform_4(%arg0: i32) -> (i32, i32) {
    %c0_i32 = arith.constant 0 : i32
    %c0_i32_0 = arith.constant 0 : i32
    %c0_i32_1 = arith.constant 0 : i32
    return %c0_i32, %c0_i32_0 : i32, i32
  }
  func.func @transform_5(%arg0: i32) -> (i32, i32) {
    %c0_i32 = arith.constant 0 : i32
    %c0_i32_0 = arith.constant 0 : i32
    %c0_i32_1 = arith.constant 0 : i32
    return %c0_i32, %c0_i32_0 : i32, i32
  }
  func.func @transform_6(%arg0: i32) -> (i32, i32) {
    %c0_i32 = arith.constant 0 : i32
    %c0_i32_0 = arith.constant 0 : i32
    %c0_i32_1 = arith.constant 0 : i32
    return %c0_i32, %c0_i32_0 : i32, i32
  }
  func.func @transform_7(%arg0: i32) -> (i32, i32) {
    %c0_i32 = arith.constant 0 : i32
    %c0_i32_0 = arith.constant 0 : i32
    %c0_i32_1 = arith.constant 0 : i32
    return %c0_i32, %c0_i32_0 : i32, i32
  }
  func.func @transform_8(%arg0: i32) -> (i32, i32) {
    %c0_i32 = arith.constant 0 : i32
    %c0_i32_0 = arith.constant 0 : i32
    %c0_i32_1 = arith.constant 0 : i32
    return %c0_i32, %c0_i32_0 : i32, i32
  }
  func.func @transform_9(%arg0: i32) -> (i32, i32) {
    %c0_i32 = arith.constant 0 : i32
    %c0_i32_0 = arith.constant 0 : i32
    %c0_i32_1 = arith.constant 0 : i32
    return %c0_i32, %c0_i32_0 : i32, i32
  }
  func.func @transform_10(%arg0: i32) -> (i32, i32) {
    %c0_i32 = arith.constant 0 : i32
    %c0_i32_0 = arith.constant 0 : i32
    %c0_i32_1 = arith.constant 0 : i32
    return %c0_i32, %c0_i32_0 : i32, i32
  }
  func.func @transform_11(%arg0: i32) -> (i32, i32) {
    %c0_i32 = arith.constant 0 : i32
    %c0_i32_0 = arith.constant 0 : i32
    %c0_i32_1 = arith.constant 0 : i32
    return %c0_i32, %c0_i32_0 : i32, i32
  }
  func.func @transform_12(%arg0: i32) -> (i32, i32) {
    %c0_i32 = arith.constant 0 : i32
    %c0_i32_0 = arith.constant 0 : i32
    %c0_i32_1 = arith.constant 0 : i32
    return %c0_i32, %c0_i32_0 : i32, i32
  }
  func.func @transform_13(%arg0: i32) -> (i32, i32) {
    %c0_i32 = arith.constant 0 : i32
    %c0_i32_0 = arith.constant 0 : i32
    %c0_i32_1 = arith.constant 0 : i32
    return %c0_i32, %c0_i32_0 : i32, i32
  }
  func.func @transform_14(%arg0: i32) -> (i32, i32) {
    %c0_i32 = arith.constant 0 : i32
    %c0_i32_0 = arith.constant 0 : i32
    return %arg0, %c0_i32 : i32, i32
  }
}

</mosaic_0001>

<llo_original>
// kernel: tpu_custom_call.1
$region0: #{tpu_custom_call.1}
  #allocation0 [shape = 'u32[]', space=smem, size = 0x4, offset = 0x4, fixed_abs, tag = 'smem constant byte address 0x4 - core index']
  #allocation1 [shape = 'u32[72,128]{1,0:T(1,128)}', space=vmem, size = 0x9000, scoped, tag = 'internal scratch']
  %s0 = inlined_call_operand.hbm [shape: bf16[8,896], index: 0, kind: input, shape index: {}]
  %s1 = inlined_call_operand.hbm [shape: f32[8,128], index: 1, kind: input, shape index: {}]
  %s2 = inlined_call_operand.hbm [shape: bf16[896,512], index: 2, kind: input, shape index: {}]
  %s3 = inlined_call_operand.hbm [shape: f32[1,512], index: 3, kind: input, shape index: {}]
  %s4 = inlined_call_operand.hbm [shape: bf16[512,256], index: 4, kind: input, shape index: {}]
  %s5 = inlined_call_operand.hbm [shape: f32[1,256], index: 5, kind: input, shape index: {}]
  %s6 = inlined_call_operand.hbm [shape: bf16[256,256], index: 6, kind: input, shape index: {}]
  %s7 = inlined_call_operand.hbm [shape: f32[1,256], index: 7, kind: input, shape index: {}]
  %s8 = inlined_call_operand.hbm [shape: bf16[128,256], index: 8, kind: input, shape index: {}]
  %s9 = inlined_call_operand.hbm [shape: f32[1,256], index: 9, kind: input, shape index: {}]
  %s10 = inlined_call_operand.hbm [shape: bf16[256,512], index: 10, kind: input, shape index: {}]
  %s11 = inlined_call_operand.vmem [shape: f32[1,512], index: 11, kind: input, shape index: {}]
  %s12 = inlined_call_operand.hbm [shape: bf16[512,896], index: 12, kind: input, shape index: {}]
  %s13 = inlined_call_operand.vmem [shape: f32[1,896], index: 13, kind: input, shape index: {}]
  %s14 = inlined_call_operand.hbm [shape: f32[8,896], index: 14, kind: output, shape index: {}]
  %s15 = sld [smem:[#allocation0]]
  $region114: #{tpu_custom_call.1} parent=0
    _
  %s17 = ssub.s32 1, %s15
  %s18 = scalar_select 0, %s17, %s15
  $region1: #{tpu_custom_call.1} parent=0
    #allocation2 [shape = 'u8[14336]{0}', space=vmem, size = 0x3800, scoped, tag = 'input window, operand 0, single buffered']
    #allocation3 [shape = 's32[1]{0}', space=sflag, size = 0x4, scoped, tag = 'scoped memory for tpu_custom_call.1']
    #allocation4 [shape = 's32[1]{0}', space=sflag, size = 0x4, scoped, tag = 'scoped memory for tpu_custom_call.1']
    #allocation5 [shape = 'u8[4096]{0}', space=vmem, size = 0x1000, scoped, tag = 'input window, operand 1, single buffered']
    #allocation6 [shape = 's32[1]{0}', space=sflag, size = 0x4, scoped, tag = 'scoped memory for tpu_custom_call.1']
    #allocation7 [shape = 'u8[917504]{0}', space=vmem, size = 0xe0000, scoped, tag = 'input window, operand 2, single buffered']
    #allocation8 [shape = 'u8[2048]{0}', space=vmem, size = 0x800, scoped, tag = 'input window, operand 3, single buffered']
    #allocation9 [shape = 's32[1]{0}', space=sflag, size = 0x4, scoped, tag = 'scoped memory for tpu_custom_call.1']
    #allocation10 [shape = 'u8[262144]{0}', space=vmem, size = 0x40000, scoped, tag = 'input window, operand 4, single buffered']
    #allocation11 [shape = 'u8[1024]{0}', space=vmem, size = 0x400, scoped, tag = 'input window, operand 5, single buffered']
    #allocation12 [shape = 's32[1]{0}', space=sflag, size = 0x4, scoped, tag = 'scoped memory for tpu_custom_call.1']
    #allocation13 [shape = 'u8[131072]{0}', space=vmem, size = 0x20000, scoped, tag = 'input window, operand 6, single buffered']
    #allocation14 [shape = 'u8[1024]{0}', space=vmem, size = 0x400, scoped, tag = 'input window, operand 7, single buffered']
    #allocation15 [shape = 's32[1]{0}', space=sflag, size = 0x4, scoped, tag = 'scoped memory for tpu_custom_call.1']
    #allocation16 [shape = 'u8[65536]{0}', space=vmem, size = 0x10000, scoped, tag = 'input window, operand 8, single buffered']
    #allocation17 [shape = 'u8[1024]{0}', space=vmem, size = 0x400, scoped, tag = 'input window, operand 9, single buffered']
    #allocation18 [shape = 's32[1]{0}', space=sflag, size = 0x4, scoped, tag = 'scoped memory for tpu_custom_call.1']
    #allocation19 [shape = 'u8[262144]{0}', space=vmem, size = 0x40000, scoped, tag = 'input window, operand 10, single buffered']
    #allocation20 [shape = 'u8[917504]{0}', space=vmem, size = 0xe0000, scoped, tag = 'input window, operand 12, single buffered']
    #allocation21 [shape = 's32[1]{0}', space=sflag, size = 0x4, scoped, tag = 'scoped memory for tpu_custom_call.1']
    #allocation22 [shape = 'u8[28672]{0}', space=vmem, size = 0x7000, scoped, tag = 'output window, operand 0, single buffered']
    %19 = vsyncpa [#allocation3], 0
    %20 = vsyncpa [#allocation6], 0
    %21 = vsyncpa [#allocation9], 0
    %22 = vsyncpa [#allocation12], 0
    %23 = vsyncpa [#allocation15], 0
    %24 = vsyncpa [#allocation18], 0
    %25 = vsyncpa [#allocation21], 0
    %26 = vsyncpa [#allocation4], 0
    // Predicated region
    $region2: #{tpu_custom_call.1} parent=1 // pred_check
      _
    $region3: #{tpu_custom_call.1} parent=1 // pred_check_branch
      %28 = sbr.rel (0) target = $region5
    $region4: #{tpu_custom_call.1} parent=1 // pred_region
      %30 = vsyncadd [#allocation3], 0
      %s32 = sshll.u32 %s0, 4
      %s33 = int_to_ptr.hbm [resolvable:$true] %s32
      %s34 = sshll.u32 [#allocation2], 4
      %s35 = int_to_ptr.vmem [resolvable:$true] %s34
      %37 = dma.hbm_to_vmem [thread:$0]  %s33, 448, %s35, [#allocation3]
    $region5: #{tpu_custom_call.1} parent=1 // pred_fallthru
      _
    // Predicated region
    $region6: #{tpu_custom_call.1} parent=1 // pred_check
      _
    $region7: #{tpu_custom_call.1} parent=1 // pred_check_branch
      %39 = sbr.rel (0) target = $region9
    $region8: #{tpu_custom_call.1} parent=1 // pred_region
      %41 = vsyncadd [#allocation6], 0
      %s43 = sshll.u32 %s1, 4
      %s44 = int_to_ptr.hbm [resolvable:$true] %s43
      %s45 = sshll.u32 [#allocation5], 4
      %s46 = int_to_ptr.vmem [resolvable:$true] %s45
      %48 = dma.hbm_to_vmem [thread:$0]  %s44, 128, %s46, [#allocation6]
    $region9: #{tpu_custom_call.1} parent=1 // pred_fallthru
      _
    // Predicated region
    $region10: #{tpu_custom_call.1} parent=1 // pred_check
      _
    $region11: #{tpu_custom_call.1} parent=1 // pred_check_branch
      %50 = sbr.rel (0) target = $region13
    $region12: #{tpu_custom_call.1} parent=1 // pred_region
      %52 = vsyncadd [#allocation6], 0
      %s53 = sshll.u32 %s2, 4
      %s54 = int_to_ptr.hbm [resolvable:$true] %s53
      %s55 = sshll.u32 [#allocation7], 4
      %s56 = int_to_ptr.vmem [resolvable:$true] %s55
      %61 = dma.hbm_to_vmem [thread:$0]  %s54, 28672, %s56, [#allocation6], 256, 256, 16
    $region13: #{tpu_custom_call.1} parent=1 // pred_fallthru
      _
    // Predicated region
    $region14: #{tpu_custom_call.1} parent=1 // pred_check
      _
    $region15: #{tpu_custom_call.1} parent=1 // pred_check_branch
      %63 = sbr.rel (0) target = $region17
    $region16: #{tpu_custom_call.1} parent=1 // pred_region
      %65 = vsyncadd [#allocation9], 0
      %s67 = sshll.u32 %s3, 4
      %s68 = int_to_ptr.hbm [resolvable:$true] %s67
      %s69 = sshll.u32 [#allocation8], 4
      %s70 = int_to_ptr.vmem [resolvable:$true] %s69
      %72 = dma.hbm_to_vmem [thread:$0]  %s68, 64, %s70, [#allocation9]
    $region17: #{tpu_custom_call.1} parent=1 // pred_fallthru
      _
    // Predicated region
    $region18: #{tpu_custom_call.1} parent=1 // pred_check
      _
    $region19: #{tpu_custom_call.1} parent=1 // pred_check_branch
      %74 = sbr.rel (0) target = $region21
    $region20: #{tpu_custom_call.1} parent=1 // pred_region
      %76 = vsyncadd [#allocation9], 0
      %s77 = sshll.u32 %s4, 4
      %s78 = int_to_ptr.hbm [resolvable:$true] %s77
      %s79 = sshll.u32 [#allocation10], 4
      %s80 = int_to_ptr.vmem [resolvable:$true] %s79
      %85 = dma.hbm_to_vmem [thread:$0]  %s78, 8192, %s80, [#allocation9], 128, 128, 8
    $region21: #{tpu_custom_call.1} parent=1 // pred_fallthru
      _
    // Predicated region
    $region22: #{tpu_custom_call.1} parent=1 // pred_check
      _
    $region23: #{tpu_custom_call.1} parent=1 // pred_check_branch
      %87 = sbr.rel (0) target = $region25
    $region24: #{tpu_custom_call.1} parent=1 // pred_region
      %89 = vsyncadd [#allocation12], 0
      %s91 = sshll.u32 %s5, 4
      %s92 = int_to_ptr.hbm [resolvable:$true] %s91
      %s93 = sshll.u32 [#allocation11], 4
      %s94 = int_to_ptr.vmem [resolvable:$true] %s93
      %96 = dma.hbm_to_vmem [thread:$0]  %s92, 32, %s94, [#allocation12]
    $region25: #{tpu_custom_call.1} parent=1 // pred_fallthru
      _
    // Predicated region
    $region26: #{tpu_custom_call.1} parent=1 // pred_check
      _
    $region27: #{tpu_custom_call.1} parent=1 // pred_check_branch
      %98 = sbr.rel (0) target = $region29
    $region28: #{tpu_custom_call.1} parent=1 // pred_region
      %100 = vsyncadd [#allocation12], 0
      %s101 = sshll.u32 %s6, 4
      %s102 = int_to_ptr.hbm [resolvable:$true] %s101
      %s103 = sshll.u32 [#allocation13], 4
      %s104 = int_to_ptr.vmem [resolvable:$true] %s103
      %109 = dma.hbm_to_vmem [thread:$0]  %s102, 4096, %s104, [#allocation12], 128, 128, 8
    $region29: #{tpu_custom_call.1} parent=1 // pred_fallthru
      _
    // Predicated region
    $region30: #{tpu_custom_call.1} parent=1 // pred_check
      _
    $region31: #{tpu_custom_call.1} parent=1 // pred_check_branch
      %111 = sbr.rel (0) target = $region33
    $region32: #{tpu_custom_call.1} parent=1 // pred_region
      %113 = vsyncadd [#allocation15], 0
      %s115 = sshll.u32 %s7, 4
      %s116 = int_to_ptr.hbm [resolvable:$true] %s115
      %s117 = sshll.u32 [#allocation14], 4
      %s118 = int_to_ptr.vmem [resolvable:$true] %s117
      %120 = dma.hbm_to_vmem [thread:$0]  %s116, 32, %s118, [#allocation15]
    $region33: #{tpu_custom_call.1} parent=1 // pred_fallthru
      _
    // Predicated region
    $region34: #{tpu_custom_call.1} parent=1 // pred_check
      _
    $region35: #{tpu_custom_call.1} parent=1 // pred_check_branch
      %122 = sbr.rel (0) target = $region37
    $region36: #{tpu_custom_call.1} parent=1 // pred_region
      %124 = vsyncadd [#allocation15], 0
      %s125 = sshll.u32 %s8, 4
      %s126 = int_to_ptr.hbm [resolvable:$true] %s125
      %s127 = sshll.u32 [#allocation16], 4
      %s128 = int_to_ptr.vmem [resolvable:$true] %s127
      %133 = dma.hbm_to_vmem [thread:$0]  %s126, 2048, %s128, [#allocation15], 128, 128, 8
    $region37: #{tpu_custom_call.1} parent=1 // pred_fallthru
      _
    // Predicated region
    $region38: #{tpu_custom_call.1} parent=1 // pred_check
      _
    $region39: #{tpu_custom_call.1} parent=1 // pred_check_branch
      %135 = sbr.rel (0) target = $region41
    $region40: #{tpu_custom_call.1} parent=1 // pred_region
      %137 = vsyncadd [#allocation18], 0
      %s139 = sshll.u32 %s9, 4
      %s140 = int_to_ptr.hbm [resolvable:$true] %s139
      %s141 = sshll.u32 [#allocation17], 4
      %s142 = int_to_ptr.vmem [resolvable:$true] %s141
      %144 = dma.hbm_to_vmem [thread:$0]  %s140, 32, %s142, [#allocation18]
    $region41: #{tpu_custom_call.1} parent=1 // pred_fallthru
      _
    // Predicated region
    $region42: #{tpu_custom_call.1} parent=1 // pred_check
      _
    $region43: #{tpu_custom_call.1} parent=1 // pred_check_branch
      %146 = sbr.rel (0) target = $region45
    $region44: #{tpu_custom_call.1} parent=1 // pred_region
      %148 = vsyncadd [#allocation18], 0
      %s149 = sshll.u32 %s10, 4
      %s150 = int_to_ptr.hbm [resolvable:$true] %s149
      %s151 = sshll.u32 [#allocation19], 4
      %s152 = int_to_ptr.vmem [resolvable:$true] %s151
      %157 = dma.hbm_to_vmem [thread:$0]  %s150, 8192, %s152, [#allocation18], 256, 256, 16
    $region45: #{tpu_custom_call.1} parent=1 // pred_fallthru
      _
    // Predicated region
    $region46: #{tpu_custom_call.1} parent=1 // pred_check
      _
    $region47: #{tpu_custom_call.1} parent=1 // pred_check_branch
      %159 = sbr.rel (0) target = $region49
    $region48: #{tpu_custom_call.1} parent=1 // pred_region
      _
    $region49: #{tpu_custom_call.1} parent=1 // pred_fallthru
      _
    // Predicated region
    $region50: #{tpu_custom_call.1} parent=1 // pred_check
      _
    $region51: #{tpu_custom_call.1} parent=1 // pred_check_branch
      %161 = sbr.rel (0) target = $region53
    $region52: #{tpu_custom_call.1} parent=1 // pred_region
      %163 = vsyncadd [#allocation21], 0
      %s164 = sshll.u32 %s12, 4
      %s165 = int_to_ptr.hbm [resolvable:$true] %s164
      %s166 = sshll.u32 [#allocation20], 4
      %s167 = int_to_ptr.vmem [resolvable:$true] %s166
      %172 = dma.hbm_to_vmem [thread:$0]  %s165, 28672, %s167, [#allocation21], 448, 448, 28
    $region53: #{tpu_custom_call.1} parent=1 // pred_fallthru
      _
    // Predicated region
    $region54: #{tpu_custom_call.1} parent=1 // pred_check
      _
    $region55: #{tpu_custom_call.1} parent=1 // pred_check_branch
      %174 = sbr.rel (0) target = $region57
    $region56: #{tpu_custom_call.1} parent=1 // pred_region
      _
    $region57: #{tpu_custom_call.1} parent=1 // pred_fallthru
      _
    // Predicated region
    $region58: #{tpu_custom_call.1} parent=1 // pred_check
      _
    $region59: #{tpu_custom_call.1} parent=1 // pred_check_branch
      %176 = sbr.rel (0) target = $region61
    $region60: #{tpu_custom_call.1} parent=1 // pred_region
      %178 = dma.done [#allocation3], 448
    $region61: #{tpu_custom_call.1} parent=1 // pred_fallthru
      _
    // Predicated region
    $region62: #{tpu_custom_call.1} parent=1 // pred_check
      _
    $region63: #{tpu_custom_call.1} parent=1 // pred_check_branch
      %180 = sbr.rel (0) target = $region65
    $region64: #{tpu_custom_call.1} parent=1 // pred_region
      %182 = dma.done [#allocation6], 128
    $region65: #{tpu_custom_call.1} parent=1 // pred_fallthru
      _
    // Predicated region
    $region66: #{tpu_custom_call.1} parent=1 // pred_check
      _
    $region67: #{tpu_custom_call.1} parent=1 // pred_check_branch
      %184 = sbr.rel (0) target = $region69
    $region68: #{tpu_custom_call.1} parent=1 // pred_region
      %186 = dma.done [#allocation6], 28672
    $region69: #{tpu_custom_call.1} parent=1 // pred_fallthru
      _
    // Predicated region
    $region70: #{tpu_custom_call.1} parent=1 // pred_check
      _
    $region71: #{tpu_custom_call.1} parent=1 // pred_check_branch
      %188 = sbr.rel (0) target = $region73
    $region72: #{tpu_custom_call.1} parent=1 // pred_region
      %190 = dma.done [#allocation9], 64
    $region73: #{tpu_custom_call.1} parent=1 // pred_fallthru
      _
    // Predicated region
    $region74: #{tpu_custom_call.1} parent=1 // pred_check
      _
    $region75: #{tpu_custom_call.1} parent=1 // pred_check_branch
      %192 = sbr.rel (0) target = $region77
    $region76: #{tpu_custom_call.1} parent=1 // pred_region
      %194 = dma.done [#allocation9], 8192
    $region77: #{tpu_custom_call.1} parent=1 // pred_fallthru
      _
    // Predicated region
    $region78: #{tpu_custom_call.1} parent=1 // pred_check
      _
    $region79: #{tpu_custom_call.1} parent=1 // pred_check_branch
      %196 = sbr.rel (0) target = $region81
    $region80: #{tpu_custom_call.1} parent=1 // pred_region
      %198 = dma.done [#allocation12], 32
    $region81: #{tpu_custom_call.1} parent=1 // pred_fallthru
      _
    // Predicated region
    $region82: #{tpu_custom_call.1} parent=1 // pred_check
      _
    $region83: #{tpu_custom_call.1} parent=1 // pred_check_branch
      %200 = sbr.rel (0) target = $region85
    $region84: #{tpu_custom_call.1} parent=1 // pred_region
      %202 = dma.done [#allocation12], 4096
    $region85: #{tpu_custom_call.1} parent=1 // pred_fallthru
      _
    // Predicated region
    $region86: #{tpu_custom_call.1} parent=1 // pred_check
      _
    $region87: #{tpu_custom_call.1} parent=1 // pred_check_branch
      %204 = sbr.rel (0) target = $region89
    $region88: #{tpu_custom_call.1} parent=1 // pred_region
      %206 = dma.done [#allocation15], 32
    $region89: #{tpu_custom_call.1} parent=1 // pred_fallthru
      _
    // Predicated region
    $region90: #{tpu_custom_call.1} parent=1 // pred_check
      _
    $region91: #{tpu_custom_call.1} parent=1 // pred_check_branch
      %208 = sbr.rel (0) target = $region93
    $region92: #{tpu_custom_call.1} parent=1 // pred_region
      %210 = dma.done [#allocation15], 2048
    $region93: #{tpu_custom_call.1} parent=1 // pred_fallthru
      _
    // Predicated region
    $region94: #{tpu_custom_call.1} parent=1 // pred_check
      _
    $region95: #{tpu_custom_call.1} parent=1 // pred_check_branch
      %212 = sbr.rel (0) target = $region97
    $region96: #{tpu_custom_call.1} parent=1 // pred_region
      %214 = dma.done [#allocation18], 32
    $region97: #{tpu_custom_call.1} parent=1 // pred_fallthru
      _
    // Predicated region
    $region98: #{tpu_custom_call.1} parent=1 // pred_check
      _
    $region99: #{tpu_custom_call.1} parent=1 // pred_check_branch
      %216 = sbr.rel (0) target = $region101
    $region100: #{tpu_custom_call.1} parent=1 // pred_region
      %218 = dma.done [#allocation18], 8192
    $region101: #{tpu_custom_call.1} parent=1 // pred_fallthru
      _
    // Predicated region
    $region102: #{tpu_custom_call.1} parent=1 // pred_check
      _
    $region103: #{tpu_custom_call.1} parent=1 // pred_check_branch
      %220 = sbr.rel (0) target = $region105
    $region104: #{tpu_custom_call.1} parent=1 // pred_region
      %222 = dma.done [#allocation21], 28672
    $region105: #{tpu_custom_call.1} parent=1 // pred_fallthru
      _
    %v223 = vld [vmem:[#allocation2] sm:$0xff]
    %v224 = vld [vmem:[#allocation2 + $0x8] sm:$0xff]
    %v225 = vld [vmem:[#allocation2 + $0x10] sm:$0xff]
    %v226 = vld [vmem:[#allocation2 + $0x18] sm:$0xf]
    %v227 = vld [vmem:[#allocation7] sm:$0xff]
    %v228 = vld [vmem:[#allocation7 + $0x8] sm:$0xff]
    %v229 = vld [vmem:[#allocation7 + $0x10] sm:$0xff]
    %v230 = vld [vmem:[#allocation7 + $0x18] sm:$0xff]
    %v231 = vld [vmem:[#allocation7 + $0x20] sm:$0xff]
    %v232 = vld [vmem:[#allocation7 + $0x28] sm:$0xff]
    %v233 = vld [vmem:[#allocation7 + $0x30] sm:$0xff]
    %v234 = vld [vmem:[#allocation7 + $0x38] sm:$0xff]
    %v235 = vld [vmem:[#allocation7 + $0x40] sm:$0xff]
    %v236 = vld [vmem:[#allocation7 + $0x48] sm:$0xff]
    %v237 = vld [vmem:[#allocation7 + $0x50] sm:$0xff]
    %v238 = vld [vmem:[#allocation7 + $0x58] sm:$0xff]
    %v239 = vld [vmem:[#allocation7 + $0x60] sm:$0xff]
    %v240 = vld [vmem:[#allocation7 + $0x68] sm:$0xff]
    %v241 = vld [vmem:[#allocation7 + $0x70] sm:$0xff]
    %v242 = vld [vmem:[#allocation7 + $0x78] sm:$0xff]
    %v243 = vld [vmem:[#allocation7 + $0x80] sm:$0xff]
    %v244 = vld [vmem:[#allocation7 + $0x88] sm:$0xff]
    %v245 = vld [vmem:[#allocation7 + $0x90] sm:$0xff]
    %v246 = vld [vmem:[#allocation7 + $0x98] sm:$0xff]
    %v247 = vld [vmem:[#allocation7 + $0xa0] sm:$0xff]
    %v248 = vld [vmem:[#allocation7 + $0xa8] sm:$0xff]
    %v249 = vld [vmem:[#allocation7 + $0xb0] sm:$0xff]
    %v250 = vld [vmem:[#allocation7 + $0xb8] sm:$0xff]
    %v251 = vld [vmem:[#allocation7 + $0xc0] sm:$0xff]
    %v252 = vld [vmem:[#allocation7 + $0xc8] sm:$0xff]
    %v253 = vld [vmem:[#allocation7 + $0xd0] sm:$0xff]
    %v254 = vld [vmem:[#allocation7 + $0xd8] sm:$0xff]
    %v255 = vld [vmem:[#allocation7 + $0xe0] sm:$0xff]
    %v256 = vld [vmem:[#allocation7 + $0xe8] sm:$0xff]
    %v257 = vld [vmem:[#allocation7 + $0xf0] sm:$0xff]
    %v258 = vld [vmem:[#allocation7 + $0xf8] sm:$0xff]
    %v259 = vld [vmem:[#allocation7 + $0x100] sm:$0xff]
    %v260 = vld [vmem:[#allocation7 + $0x108] sm:$0xff]
    %v261 = vld [vmem:[#allocation7 + $0x110] sm:$0xff]
    %v262 = vld [vmem:[#allocation7 + $0x118] sm:$0xff]
    %v263 = vld [vmem:[#allocation7 + $0x120] sm:$0xff]
    %v264 = vld [vmem:[#allocation7 + $0x128] sm:$0xff]
    %v265 = vld [vmem:[#allocation7 + $0x130] sm:$0xff]
    %v266 = vld [vmem:[#allocation7 + $0x138] sm:$0xff]
    %v267 = vld [vmem:[#allocation7 + $0x140] sm:$0xff]
    %v268 = vld [vmem:[#allocation7 + $0x148] sm:$0xff]
    %v269 = vld [vmem:[#allocation7 + $0x150] sm:$0xff]
    %v270 = vld [vmem:[#allocation7 + $0x158] sm:$0xff]
    %v271 = vld [vmem:[#allocation7 + $0x160] sm:$0xff]
    %v272 = vld [vmem:[#allocation7 + $0x168] sm:$0xff]
    %v273 = vld [vmem:[#allocation7 + $0x170] sm:$0xff]
    %v274 = vld [vmem:[#allocation7 + $0x178] sm:$0xff]
    %v275 = vld [vmem:[#allocation7 + $0x180] sm:$0xff]
    %v276 = vld [vmem:[#allocation7 + $0x188] sm:$0xff]
    %v277 = vld [vmem:[#allocation7 + $0x190] sm:$0xff]
    %v278 = vld [vmem:[#allocation7 + $0x198] sm:$0xff]
    %v279 = vld [vmem:[#allocation7 + $0x1a0] sm:$0xff]
    %v280 = vld [vmem:[#allocation7 + $0x1a8] sm:$0xff]
    %v281 = vld [vmem:[#allocation7 + $0x1b0] sm:$0xff]
    %v282 = vld [vmem:[#allocation7 + $0x1b8] sm:$0xff]
    %v283 = vld [vmem:[#allocation7 + $0x1c0] sm:$0xff]
    %v284 = vld [vmem:[#allocation7 + $0x1c8] sm:$0xff]
    %v285 = vld [vmem:[#allocation7 + $0x1d0] sm:$0xff]
    %v286 = vld [vmem:[#allocation7 + $0x1d8] sm:$0xff]
    %v287 = vld [vmem:[#allocation7 + $0x1e0] sm:$0xff]
    %v288 = vld [vmem:[#allocation7 + $0x1e8] sm:$0xff]
    %v289 = vld [vmem:[#allocation7 + $0x1f0] sm:$0xff]
    %v290 = vld [vmem:[#allocation7 + $0x1f8] sm:$0xff]
    %v291 = vld [vmem:[#allocation7 + $0x200] sm:$0xff]
    %v292 = vld [vmem:[#allocation7 + $0x208] sm:$0xff]
    %v293 = vld [vmem:[#allocation7 + $0x210] sm:$0xff]
    %v294 = vld [vmem:[#allocation7 + $0x218] sm:$0xff]
    %v295 = vld [vmem:[#allocation7 + $0x220] sm:$0xff]
    %v296 = vld [vmem:[#allocation7 + $0x228] sm:$0xff]
    %v297 = vld [vmem:[#allocation7 + $0x230] sm:$0xff]
    %v298 = vld [vmem:[#allocation7 + $0x238] sm:$0xff]
    %v299 = vld [vmem:[#allocation7 + $0x240] sm:$0xff]
    %v300 = vld [vmem:[#allocation7 + $0x248] sm:$0xff]
    %v301 = vld [vmem:[#allocation7 + $0x250] sm:$0xff]
    %v302 = vld [vmem:[#allocation7 + $0x258] sm:$0xff]
    %v303 = vld [vmem:[#allocation7 + $0x260] sm:$0xff]
    %v304 = vld [vmem:[#allocation7 + $0x268] sm:$0xff]
    %v305 = vld [vmem:[#allocation7 + $0x270] sm:$0xff]
    %v306 = vld [vmem:[#allocation7 + $0x278] sm:$0xff]
    %v307 = vld [vmem:[#allocation7 + $0x280] sm:$0xff]
    %v308 = vld [vmem:[#allocation7 + $0x288] sm:$0xff]
    %v309 = vld [vmem:[#allocation7 + $0x290] sm:$0xff]
    %v310 = vld [vmem:[#allocation7 + $0x298] sm:$0xff]
    %v311 = vld [vmem:[#allocation7 + $0x2a0] sm:$0xff]
    %v312 = vld [vmem:[#allocation7 + $0x2a8] sm:$0xff]
    %v313 = vld [vmem:[#allocation7 + $0x2b0] sm:$0xff]
    %v314 = vld [vmem:[#allocation7 + $0x2b8] sm:$0xff]
    %v315 = vld [vmem:[#allocation7 + $0x2c0] sm:$0xff]
    %v316 = vld [vmem:[#allocation7 + $0x2c8] sm:$0xff]
    %v317 = vld [vmem:[#allocation7 + $0x2d0] sm:$0xff]
    %v318 = vld [vmem:[#allocation7 + $0x2d8] sm:$0xff]
    %v319 = vld [vmem:[#allocation7 + $0x2e0] sm:$0xff]
    %v320 = vld [vmem:[#allocation7 + $0x2e8] sm:$0xff]
    %v321 = vld [vmem:[#allocation7 + $0x2f0] sm:$0xff]
    %v322 = vld [vmem:[#allocation7 + $0x2f8] sm:$0xff]
    %v323 = vld [vmem:[#allocation7 + $0x300] sm:$0xff]
    %v324 = vld [vmem:[#allocation7 + $0x308] sm:$0xff]
    %v325 = vld [vmem:[#allocation7 + $0x310] sm:$0xff]
    %v326 = vld [vmem:[#allocation7 + $0x318] sm:$0xff]
    %v327 = vld [vmem:[#allocation7 + $0x320] sm:$0xff]
    %v328 = vld [vmem:[#allocation7 + $0x328] sm:$0xff]
    %v329 = vld [vmem:[#allocation7 + $0x330] sm:$0xff]
    %v330 = vld [vmem:[#allocation7 + $0x338] sm:$0xff]
    %v331 = vld [vmem:[#allocation7 + $0x340] sm:$0xff]
    %v332 = vld [vmem:[#allocation7 + $0x348] sm:$0xff]
    %v333 = vld [vmem:[#allocation7 + $0x350] sm:$0xff]
    %v334 = vld [vmem:[#allocation7 + $0x358] sm:$0xff]
    %v335 = vld [vmem:[#allocation7 + $0x360] sm:$0xff]
    %v336 = vld [vmem:[#allocation7 + $0x368] sm:$0xff]
    %v337 = vld [vmem:[#allocation7 + $0x370] sm:$0xff]
    %v338 = vld [vmem:[#allocation7 + $0x378] sm:$0xff]
    %v339 = vld [vmem:[#allocation7 + $0x380] sm:$0xff]
    %v340 = vld [vmem:[#allocation7 + $0x388] sm:$0xff]
    %v341 = vld [vmem:[#allocation7 + $0x390] sm:$0xff]
    %v342 = vld [vmem:[#allocation7 + $0x398] sm:$0xff]
    %v343 = vld [vmem:[#allocation7 + $0x3a0] sm:$0xff]
    %v344 = vld [vmem:[#allocation7 + $0x3a8] sm:$0xff]
    %v345 = vld [vmem:[#allocation7 + $0x3b0] sm:$0xff]
    %v346 = vld [vmem:[#allocation7 + $0x3b8] sm:$0xff]
    %v347 = vld [vmem:[#allocation7 + $0x3c0] sm:$0xff]
    %v348 = vld [vmem:[#allocation7 + $0x3c8] sm:$0xff]
    %v349 = vld [vmem:[#allocation7 + $0x3d0] sm:$0xff]
    %v350 = vld [vmem:[#allocation7 + $0x3d8] sm:$0xff]
    %v351 = vld [vmem:[#allocation7 + $0x3e0] sm:$0xff]
    %v352 = vld [vmem:[#allocation7 + $0x3e8] sm:$0xff]
    %v353 = vld [vmem:[#allocation7 + $0x3f0] sm:$0xff]
    %v354 = vld [vmem:[#allocation7 + $0x3f8] sm:$0xff]
    %v355 = vld [vmem:[#allocation7 + $0x400] sm:$0xff]
    %v356 = vld [vmem:[#allocation7 + $0x408] sm:$0xff]
    %v357 = vld [vmem:[#allocation7 + $0x410] sm:$0xff]
    %v358 = vld [vmem:[#allocation7 + $0x418] sm:$0xff]
    %v359 = vld [vmem:[#allocation7 + $0x420] sm:$0xff]
    %v360 = vld [vmem:[#allocation7 + $0x428] sm:$0xff]
    %v361 = vld [vmem:[#allocation7 + $0x430] sm:$0xff]
    %v362 = vld [vmem:[#allocation7 + $0x438] sm:$0xff]
    %v363 = vld [vmem:[#allocation7 + $0x440] sm:$0xff]
    %v364 = vld [vmem:[#allocation7 + $0x448] sm:$0xff]
    %v365 = vld [vmem:[#allocation7 + $0x450] sm:$0xff]
    %v366 = vld [vmem:[#allocation7 + $0x458] sm:$0xff]
    %v367 = vld [vmem:[#allocation7 + $0x460] sm:$0xff]
    %v368 = vld [vmem:[#allocation7 + $0x468] sm:$0xff]
    %v369 = vld [vmem:[#allocation7 + $0x470] sm:$0xff]
    %v370 = vld [vmem:[#allocation7 + $0x478] sm:$0xff]
    %v371 = vld [vmem:[#allocation7 + $0x480] sm:$0xff]
    %v372 = vld [vmem:[#allocation7 + $0x488] sm:$0xff]
    %v373 = vld [vmem:[#allocation7 + $0x490] sm:$0xff]
    %v374 = vld [vmem:[#allocation7 + $0x498] sm:$0xff]
    %v375 = vld [vmem:[#allocation7 + $0x4a0] sm:$0xff]
    %v376 = vld [vmem:[#allocation7 + $0x4a8] sm:$0xff]
    %v377 = vld [vmem:[#allocation7 + $0x4b0] sm:$0xff]
    %v378 = vld [vmem:[#allocation7 + $0x4b8] sm:$0xff]
    %v379 = vld [vmem:[#allocation7 + $0x4c0] sm:$0xff]
    %v380 = vld [vmem:[#allocation7 + $0x4c8] sm:$0xff]
    %v381 = vld [vmem:[#allocation7 + $0x4d0] sm:$0xff]
    %v382 = vld [vmem:[#allocation7 + $0x4d8] sm:$0xff]
    %v383 = vld [vmem:[#allocation7 + $0x4e0] sm:$0xff]
    %v384 = vld [vmem:[#allocation7 + $0x4e8] sm:$0xff]
    %v385 = vld [vmem:[#allocation7 + $0x4f0] sm:$0xff]
    %v386 = vld [vmem:[#allocation7 + $0x4f8] sm:$0xff]
    %v387 = vld [vmem:[#allocation7 + $0x500] sm:$0xff]
    %v388 = vld [vmem:[#allocation7 + $0x508] sm:$0xff]
    %v389 = vld [vmem:[#allocation7 + $0x510] sm:$0xff]
    %v390 = vld [vmem:[#allocation7 + $0x518] sm:$0xff]
    %v391 = vld [vmem:[#allocation7 + $0x520] sm:$0xff]
    %v392 = vld [vmem:[#allocation7 + $0x528] sm:$0xff]
    %v393 = vld [vmem:[#allocation7 + $0x530] sm:$0xff]
    %v394 = vld [vmem:[#allocation7 + $0x538] sm:$0xff]
    %v395 = vld [vmem:[#allocation7 + $0x540] sm:$0xff]
    %v396 = vld [vmem:[#allocation7 + $0x548] sm:$0xff]
    %v397 = vld [vmem:[#allocation7 + $0x550] sm:$0xff]
    %v398 = vld [vmem:[#allocation7 + $0x558] sm:$0xff]
    %v399 = vld [vmem:[#allocation7 + $0x560] sm:$0xff]
    %v400 = vld [vmem:[#allocation7 + $0x568] sm:$0xff]
    %v401 = vld [vmem:[#allocation7 + $0x570] sm:$0xff]
    %v402 = vld [vmem:[#allocation7 + $0x578] sm:$0xff]
    %v403 = vld [vmem:[#allocation7 + $0x580] sm:$0xff]
    %v404 = vld [vmem:[#allocation7 + $0x588] sm:$0xff]
    %v405 = vld [vmem:[#allocation7 + $0x590] sm:$0xff]
    %v406 = vld [vmem:[#allocation7 + $0x598] sm:$0xff]
    %v407 = vld [vmem:[#allocation7 + $0x5a0] sm:$0xff]
    %v408 = vld [vmem:[#allocation7 + $0x5a8] sm:$0xff]
    %v409 = vld [vmem:[#allocation7 + $0x5b0] sm:$0xff]
    %v410 = vld [vmem:[#allocation7 + $0x5b8] sm:$0xff]
    %v411 = vld [vmem:[#allocation7 + $0x5c0] sm:$0xff]
    %v412 = vld [vmem:[#allocation7 + $0x5c8] sm:$0xff]
    %v413 = vld [vmem:[#allocation7 + $0x5d0] sm:$0xff]
    %v414 = vld [vmem:[#allocation7 + $0x5d8] sm:$0xff]
    %v415 = vld [vmem:[#allocation7 + $0x5e0] sm:$0xff]
    %v416 = vld [vmem:[#allocation7 + $0x5e8] sm:$0xff]
    %v417 = vld [vmem:[#allocation7 + $0x5f0] sm:$0xff]
    %v418 = vld [vmem:[#allocation7 + $0x5f8] sm:$0xff]
    %v419 = vld [vmem:[#allocation7 + $0x600] sm:$0xff]
    %v420 = vld [vmem:[#allocation7 + $0x608] sm:$0xff]
    %v421 = vld [vmem:[#allocation7 + $0x610] sm:$0xff]
    %v422 = vld [vmem:[#allocation7 + $0x618] sm:$0xff]
    %v423 = vld [vmem:[#allocation7 + $0x620] sm:$0xff]
    %v424 = vld [vmem:[#allocation7 + $0x628] sm:$0xff]
    %v425 = vld [vmem:[#allocation7 + $0x630] sm:$0xff]
    %v426 = vld [vmem:[#allocation7 + $0x638] sm:$0xff]
    %v427 = vld [vmem:[#allocation7 + $0x640] sm:$0xff]
    %v428 = vld [vmem:[#allocation7 + $0x648] sm:$0xff]
    %v429 = vld [vmem:[#allocation7 + $0x650] sm:$0xff]
    %v430 = vld [vmem:[#allocation7 + $0x658] sm:$0xff]
    %v431 = vld [vmem:[#allocation7 + $0x660] sm:$0xff]
    %v432 = vld [vmem:[#allocation7 + $0x668] sm:$0xff]
    %v433 = vld [vmem:[#allocation7 + $0x670] sm:$0xff]
    %v434 = vld [vmem:[#allocation7 + $0x678] sm:$0xff]
    %v435 = vld [vmem:[#allocation7 + $0x680] sm:$0xff]
    %v436 = vld [vmem:[#allocation7 + $0x688] sm:$0xff]
    %v437 = vld [vmem:[#allocation7 + $0x690] sm:$0xff]
    %v438 = vld [vmem:[#allocation7 + $0x698] sm:$0xff]
    %v439 = vld [vmem:[#allocation7 + $0x6a0] sm:$0xff]
    %v440 = vld [vmem:[#allocation7 + $0x6a8] sm:$0xff]
    %v441 = vld [vmem:[#allocation7 + $0x6b0] sm:$0xff]
    %v442 = vld [vmem:[#allocation7 + $0x6b8] sm:$0xff]
    %v443 = vld [vmem:[#allocation7 + $0x6c0] sm:$0xff]
    %v444 = vld [vmem:[#allocation7 + $0x6c8] sm:$0xff]
    %v445 = vld [vmem:[#allocation7 + $0x6d0] sm:$0xff]
    %v446 = vld [vmem:[#allocation7 + $0x6d8] sm:$0xff]
    %v447 = vld [vmem:[#allocation7 + $0x6e0] sm:$0xff]
    %v448 = vld [vmem:[#allocation7 + $0x6e8] sm:$0xff]
    %v449 = vld [vmem:[#allocation7 + $0x6f0] sm:$0xff]
    %v450 = vld [vmem:[#allocation7 + $0x6f8] sm:$0xff]
    %v451 = vld [vmem:[#allocation8] sm:$0xf]
    %v453 = vperm.slane %v451, 0
    %v454 = vperm.slane %v451, 1
    %v455 = vperm.slane %v451, 2
    %v456 = vperm.slane %v451, 3
    %v465 = vunpack.c.l.b16 %v223
    %v466 = vunpack.c.h.b16 %v223
    %v467 = vunpack.c.l.b16 %v224
    %v468 = vunpack.c.h.b16 %v224
    %v469 = vunpack.c.l.b16 %v225
    %v470 = vunpack.c.h.b16 %v225
    %v471 = vunpack.c.l.b16 %v226
    %v472 = vpack.c.b16 %v465, %v465
    %v473 = vpack.c.b16 %v466, %v466
    %v474 = vpack.c.b16 %v467, %v467
    %v475 = vpack.c.b16 %v468, %v468
    %v476 = vpack.c.b16 %v469, %v469
    %v477 = vpack.c.b16 %v470, %v470
    %v478 = vpack.c.b16 %v471, %v471
    %v710 = vunpack.c.l.b16 %v227
    %v711 = vunpack.c.h.b16 %v227
    %v712 = vunpack.c.l.b16 %v228
    %v713 = vunpack.c.h.b16 %v228
    %v714 = vunpack.c.l.b16 %v229
    %v715 = vunpack.c.h.b16 %v229
    %v716 = vunpack.c.l.b16 %v230
    %v717 = vunpack.c.h.b16 %v230
    %v718 = vunpack.c.l.b16 %v231
    %v719 = vunpack.c.h.b16 %v231
    %v720 = vunpack.c.l.b16 %v232
    %v721 = vunpack.c.h.b16 %v232
    %v722 = vunpack.c.l.b16 %v233
    %v723 = vunpack.c.h.b16 %v233
    %v724 = vunpack.c.l.b16 %v234
    %v725 = vunpack.c.h.b16 %v234
    %v726 = vunpack.c.l.b16 %v235
    %v727 = vunpack.c.h.b16 %v235
    %v728 = vunpack.c.l.b16 %v236
    %v729 = vunpack.c.h.b16 %v236
    %v730 = vunpack.c.l.b16 %v237
    %v731 = vunpack.c.h.b16 %v237
    %v732 = vunpack.c.l.b16 %v238
    %v733 = vunpack.c.h.b16 %v238
    %v734 = vunpack.c.l.b16 %v239
    %v735 = vunpack.c.h.b16 %v239
    %v736 = vunpack.c.l.b16 %v240
    %v737 = vunpack.c.h.b16 %v240
    %v738 = vunpack.c.l.b16 %v241
    %v739 = vunpack.c.h.b16 %v241
    %v740 = vunpack.c.l.b16 %v242
    %v741 = vunpack.c.h.b16 %v242
    %v742 = vunpack.c.l.b16 %v243
    %v743 = vunpack.c.h.b16 %v243
    %v744 = vunpack.c.l.b16 %v244
    %v745 = vunpack.c.h.b16 %v244
    %v746 = vunpack.c.l.b16 %v245
    %v747 = vunpack.c.h.b16 %v245
    %v748 = vunpack.c.l.b16 %v246
    %v749 = vunpack.c.h.b16 %v246
    %v750 = vunpack.c.l.b16 %v247
    %v751 = vunpack.c.h.b16 %v247
    %v752 = vunpack.c.l.b16 %v248
    %v753 = vunpack.c.h.b16 %v248
    %v754 = vunpack.c.l.b16 %v249
    %v755 = vunpack.c.h.b16 %v249
    %v756 = vunpack.c.l.b16 %v250
    %v757 = vunpack.c.h.b16 %v250
    %v758 = vunpack.c.l.b16 %v251
    %v759 = vunpack.c.h.b16 %v251
    %v760 = vunpack.c.l.b16 %v252
    %v761 = vunpack.c.h.b16 %v252
    %v762 = vunpack.c.l.b16 %v253
    %v763 = vunpack.c.h.b16 %v253
    %v764 = vunpack.c.l.b16 %v254
    %v765 = vunpack.c.h.b16 %v254
    %v766 = vunpack.c.l.b16 %v255
    %v767 = vunpack.c.h.b16 %v255
    %v768 = vunpack.c.l.b16 %v256
    %v769 = vunpack.c.h.b16 %v256
    %v770 = vunpack.c.l.b16 %v257
    %v771 = vunpack.c.h.b16 %v257
    %v772 = vunpack.c.l.b16 %v258
    %v773 = vunpack.c.h.b16 %v258
    %v774 = vunpack.c.l.b16 %v259
    %v775 = vunpack.c.h.b16 %v259
    %v776 = vunpack.c.l.b16 %v260
    %v777 = vunpack.c.h.b16 %v260
    %v778 = vunpack.c.l.b16 %v261
    %v779 = vunpack.c.h.b16 %v261
    %v780 = vunpack.c.l.b16 %v262
    %v781 = vunpack.c.h.b16 %v262
    %v782 = vunpack.c.l.b16 %v263
    %v783 = vunpack.c.h.b16 %v263
    %v784 = vunpack.c.l.b16 %v264
    %v785 = vunpack.c.h.b16 %v264
    %v786 = vunpack.c.l.b16 %v265
    %v787 = vunpack.c.h.b16 %v265
    %v788 = vunpack.c.l.b16 %v266
    %v789 = vunpack.c.h.b16 %v266
    %v790 = vunpack.c.l.b16 %v267
    %v791 = vunpack.c.h.b16 %v267
    %v792 = vunpack.c.l.b16 %v268
    %v793 = vunpack.c.h.b16 %v268
    %v794 = vunpack.c.l.b16 %v269
    %v795 = vunpack.c.h.b16 %v269
    %v796 = vunpack.c.l.b16 %v270
    %v797 = vunpack.c.h.b16 %v270
    %v798 = vunpack.c.l.b16 %v271
    %v799 = vunpack.c.h.b16 %v271
    %v800 = vunpack.c.l.b16 %v272
    %v801 = vunpack.c.h.b16 %v272
    %v802 = vunpack.c.l.b16 %v273
    %v803 = vunpack.c.h.b16 %v273
    %v804 = vunpack.c.l.b16 %v274
    %v805 = vunpack.c.h.b16 %v274
    %v806 = vunpack.c.l.b16 %v275
    %v807 = vunpack.c.h.b16 %v275
    %v808 = vunpack.c.l.b16 %v276
    %v809 = vunpack.c.h.b16 %v276
    %v810 = vunpack.c.l.b16 %v277
    %v811 = vunpack.c.h.b16 %v277
    %v812 = vunpack.c.l.b16 %v278
    %v813 = vunpack.c.h.b16 %v278
    %v814 = vunpack.c.l.b16 %v279
    %v815 = vunpack.c.h.b16 %v279
    %v816 = vunpack.c.l.b16 %v280
    %v817 = vunpack.c.h.b16 %v280
    %v818 = vunpack.c.l.b16 %v281
    %v819 = vunpack.c.h.b16 %v281
    %v820 = vunpack.c.l.b16 %v282
    %v821 = vunpack.c.h.b16 %v282
    %v822 = vunpack.c.l.b16 %v283
    %v823 = vunpack.c.h.b16 %v283
    %v824 = vunpack.c.l.b16 %v284
    %v825 = vunpack.c.h.b16 %v284
    %v826 = vunpack.c.l.b16 %v285
    %v827 = vunpack.c.h.b16 %v285
    %v828 = vunpack.c.l.b16 %v286
    %v829 = vunpack.c.h.b16 %v286
    %v830 = vunpack.c.l.b16 %v287
    %v831 = vunpack.c.h.b16 %v287
    %v832 = vunpack.c.l.b16 %v288
    %v833 = vunpack.c.h.b16 %v288
    %v834 = vunpack.c.l.b16 %v289
    %v835 = vunpack.c.h.b16 %v289
    %v836 = vunpack.c.l.b16 %v290
    %v837 = vunpack.c.h.b16 %v290
    %v838 = vunpack.c.l.b16 %v291
    %v839 = vunpack.c.h.b16 %v291
    %v840 = vunpack.c.l.b16 %v292
    %v841 = vunpack.c.h.b16 %v292
    %v842 = vunpack.c.l.b16 %v293
    %v843 = vunpack.c.h.b16 %v293
    %v844 = vunpack.c.l.b16 %v294
    %v845 = vunpack.c.h.b16 %v294
    %v846 = vunpack.c.l.b16 %v295
    %v847 = vunpack.c.h.b16 %v295
    %v848 = vunpack.c.l.b16 %v296
    %v849 = vunpack.c.h.b16 %v296
    %v850 = vunpack.c.l.b16 %v297
    %v851 = vunpack.c.h.b16 %v297
    %v852 = vunpack.c.l.b16 %v298
    %v853 = vunpack.c.h.b16 %v298
    %v854 = vunpack.c.l.b16 %v299
    %v855 = vunpack.c.h.b16 %v299
    %v856 = vunpack.c.l.b16 %v300
    %v857 = vunpack.c.h.b16 %v300
    %v858 = vunpack.c.l.b16 %v301
    %v859 = vunpack.c.h.b16 %v301
    %v860 = vunpack.c.l.b16 %v302
    %v861 = vunpack.c.h.b16 %v302
    %v862 = vunpack.c.l.b16 %v303
    %v863 = vunpack.c.h.b16 %v303
    %v864 = vunpack.c.l.b16 %v304
    %v865 = vunpack.c.h.b16 %v304
    %v866 = vunpack.c.l.b16 %v305
    %v867 = vunpack.c.h.b16 %v305
    %v868 = vunpack.c.l.b16 %v306
    %v869 = vunpack.c.h.b16 %v306
    %v870 = vunpack.c.l.b16 %v307
    %v871 = vunpack.c.h.b16 %v307
    %v872 = vunpack.c.l.b16 %v308
    %v873 = vunpack.c.h.b16 %v308
    %v874 = vunpack.c.l.b16 %v309
    %v875 = vunpack.c.h.b16 %v309
    %v876 = vunpack.c.l.b16 %v310
    %v877 = vunpack.c.h.b16 %v310
    %v878 = vunpack.c.l.b16 %v311
    %v879 = vunpack.c.h.b16 %v311
    %v880 = vunpack.c.l.b16 %v312
    %v881 = vunpack.c.h.b16 %v312
    %v882 = vunpack.c.l.b16 %v313
    %v883 = vunpack.c.h.b16 %v313
    %v884 = vunpack.c.l.b16 %v314
    %v885 = vunpack.c.h.b16 %v314
    %v886 = vunpack.c.l.b16 %v315
    %v887 = vunpack.c.h.b16 %v315
    %v888 = vunpack.c.l.b16 %v316
    %v889 = vunpack.c.h.b16 %v316
    %v890 = vunpack.c.l.b16 %v317
    %v891 = vunpack.c.h.b16 %v317
    %v892 = vunpack.c.l.b16 %v318
    %v893 = vunpack.c.h.b16 %v318
    %v894 = vunpack.c.l.b16 %v319
    %v895 = vunpack.c.h.b16 %v319
    %v896 = vunpack.c.l.b16 %v320
    %v897 = vunpack.c.h.b16 %v320
    %v898 = vunpack.c.l.b16 %v321
    %v899 = vunpack.c.h.b16 %v321
    %v900 = vunpack.c.l.b16 %v322
    %v901 = vunpack.c.h.b16 %v322
    %v902 = vunpack.c.l.b16 %v323
    %v903 = vunpack.c.h.b16 %v323
    %v904 = vunpack.c.l.b16 %v324
    %v905 = vunpack.c.h.b16 %v324
    %v906 = vunpack.c.l.b16 %v325
    %v907 = vunpack.c.h.b16 %v325
    %v908 = vunpack.c.l.b16 %v326
    %v909 = vunpack.c.h.b16 %v326
    %v910 = vunpack.c.l.b16 %v327
    %v911 = vunpack.c.h.b16 %v327
    %v912 = vunpack.c.l.b16 %v328
    %v913 = vunpack.c.h.b16 %v328
    %v914 = vunpack.c.l.b16 %v329
    %v915 = vunpack.c.h.b16 %v329
    %v916 = vunpack.c.l.b16 %v330
    %v917 = vunpack.c.h.b16 %v330
    %v918 = vunpack.c.l.b16 %v331
    %v919 = vunpack.c.h.b16 %v331
    %v920 = vunpack.c.l.b16 %v332
    %v921 = vunpack.c.h.b16 %v332
    %v922 = vunpack.c.l.b16 %v333
    %v923 = vunpack.c.h.b16 %v333
    %v924 = vunpack.c.l.b16 %v334
    %v925 = vunpack.c.h.b16 %v334
    %v926 = vunpack.c.l.b16 %v335
    %v927 = vunpack.c.h.b16 %v335
    %v928 = vunpack.c.l.b16 %v336
    %v929 = vunpack.c.h.b16 %v336
    %v930 = vunpack.c.l.b16 %v337
    %v931 = vunpack.c.h.b16 %v337
    %v932 = vunpack.c.l.b16 %v338
    %v933 = vunpack.c.h.b16 %v338
    %v934 = vunpack.c.l.b16 %v339
    %v935 = vunpack.c.h.b16 %v339
    %v936 = vunpack.c.l.b16 %v340
    %v937 = vunpack.c.h.b16 %v340
    %v938 = vunpack.c.l.b16 %v341
    %v939 = vunpack.c.h.b16 %v341
    %v940 = vunpack.c.l.b16 %v342
    %v941 = vunpack.c.h.b16 %v342
    %v942 = vunpack.c.l.b16 %v343
    %v943 = vunpack.c.h.b16 %v343
    %v944 = vunpack.c.l.b16 %v344
    %v945 = vunpack.c.h.b16 %v344
    %v946 = vunpack.c.l.b16 %v345
    %v947 = vunpack.c.h.b16 %v345
    %v948 = vunpack.c.l.b16 %v346
    %v949 = vunpack.c.h.b16 %v346
    %v950 = vunpack.c.l.b16 %v347
    %v951 = vunpack.c.h.b16 %v347
    %v952 = vunpack.c.l.b16 %v348
    %v953 = vunpack.c.h.b16 %v348
    %v954 = vunpack.c.l.b16 %v349
    %v955 = vunpack.c.h.b16 %v349
    %v956 = vunpack.c.l.b16 %v350
    %v957 = vunpack.c.h.b16 %v350
    %v958 = vunpack.c.l.b16 %v351
    %v959 = vunpack.c.h.b16 %v351
    %v960 = vunpack.c.l.b16 %v352
    %v961 = vunpack.c.h.b16 %v352
    %v962 = vunpack.c.l.b16 %v353
    %v963 = vunpack.c.h.b16 %v353
    %v964 = vunpack.c.l.b16 %v354
    %v965 = vunpack.c.h.b16 %v354
    %v966 = vunpack.c.l.b16 %v355
    %v967 = vunpack.c.h.b16 %v355
    %v968 = vunpack.c.l.b16 %v356
    %v969 = vunpack.c.h.b16 %v356
    %v970 = vunpack.c.l.b16 %v357
    %v971 = vunpack.c.h.b16 %v357
    %v972 = vunpack.c.l.b16 %v358
    %v973 = vunpack.c.h.b16 %v358
    %v974 = vunpack.c.l.b16 %v359
    %v975 = vunpack.c.h.b16 %v359
    %v976 = vunpack.c.l.b16 %v360
    %v977 = vunpack.c.h.b16 %v360
    %v978 = vunpack.c.l.b16 %v361
    %v979 = vunpack.c.h.b16 %v361
    %v980 = vunpack.c.l.b16 %v362
    %v981 = vunpack.c.h.b16 %v362
    %v982 = vunpack.c.l.b16 %v363
    %v983 = vunpack.c.h.b16 %v363
    %v984 = vunpack.c.l.b16 %v364
    %v985 = vunpack.c.h.b16 %v364
    %v986 = vunpack.c.l.b16 %v365
    %v987 = vunpack.c.h.b16 %v365
    %v988 = vunpack.c.l.b16 %v366
    %v989 = vunpack.c.h.b16 %v366
    %v990 = vunpack.c.l.b16 %v367
    %v991 = vunpack.c.h.b16 %v367
    %v992 = vunpack.c.l.b16 %v368
    %v993 = vunpack.c.h.b16 %v368
    %v994 = vunpack.c.l.b16 %v369
    %v995 = vunpack.c.h.b16 %v369
    %v996 = vunpack.c.l.b16 %v370
    %v997 = vunpack.c.h.b16 %v370
    %v998 = vunpack.c.l.b16 %v371
    %v999 = vunpack.c.h.b16 %v371
    %v1000 = vunpack.c.l.b16 %v372
    %v1001 = vunpack.c.h.b16 %v372
    %v1002 = vunpack.c.l.b16 %v373
    %v1003 = vunpack.c.h.b16 %v373
    %v1004 = vunpack.c.l.b16 %v374
    %v1005 = vunpack.c.h.b16 %v374
    %v1006 = vunpack.c.l.b16 %v375
    %v1007 = vunpack.c.h.b16 %v375
    %v1008 = vunpack.c.l.b16 %v376
    %v1009 = vunpack.c.h.b16 %v376
    %v1010 = vunpack.c.l.b16 %v377
    %v1011 = vunpack.c.h.b16 %v377
    %v1012 = vunpack.c.l.b16 %v378
    %v1013 = vunpack.c.h.b16 %v378
    %v1014 = vunpack.c.l.b16 %v379
    %v1015 = vunpack.c.h.b16 %v379
    %v1016 = vunpack.c.l.b16 %v380
    %v1017 = vunpack.c.h.b16 %v380
    %v1018 = vunpack.c.l.b16 %v381
    %v1019 = vunpack.c.h.b16 %v381
    %v1020 = vunpack.c.l.b16 %v382
    %v1021 = vunpack.c.h.b16 %v382
    %v1022 = vunpack.c.l.b16 %v383
    %v1023 = vunpack.c.h.b16 %v383
    %v1024 = vunpack.c.l.b16 %v384
    %v1025 = vunpack.c.h.b16 %v384
    %v1026 = vunpack.c.l.b16 %v385
    %v1027 = vunpack.c.h.b16 %v385
    %v1028 = vunpack.c.l.b16 %v386
    %v1029 = vunpack.c.h.b16 %v386
    %v1030 = vunpack.c.l.b16 %v387
    %v1031 = vunpack.c.h.b16 %v387
    %v1032 = vunpack.c.l.b16 %v388
    %v1033 = vunpack.c.h.b16 %v388
    %v1034 = vunpack.c.l.b16 %v389
    %v1035 = vunpack.c.h.b16 %v389
    %v1036 = vunpack.c.l.b16 %v390
    %v1037 = vunpack.c.h.b16 %v390
    %v1038 = vunpack.c.l.b16 %v391
    %v1039 = vunpack.c.h.b16 %v391
    %v1040 = vunpack.c.l.b16 %v392
    %v1041 = vunpack.c.h.b16 %v392
    %v1042 = vunpack.c.l.b16 %v393
    %v1043 = vunpack.c.h.b16 %v393
    %v1044 = vunpack.c.l.b16 %v394
    %v1045 = vunpack.c.h.b16 %v394
    %v1046 = vunpack.c.l.b16 %v395
    %v1047 = vunpack.c.h.b16 %v395
    %v1048 = vunpack.c.l.b16 %v396
    %v1049 = vunpack.c.h.b16 %v396
    %v1050 = vunpack.c.l.b16 %v397
    %v1051 = vunpack.c.h.b16 %v397
    %v1052 = vunpack.c.l.b16 %v398
    %v1053 = vunpack.c.h.b16 %v398
    %v1054 = vunpack.c.l.b16 %v399
    %v1055 = vunpack.c.h.b16 %v399
    %v1056 = vunpack.c.l.b16 %v400
    %v1057 = vunpack.c.h.b16 %v400
    %v1058 = vunpack.c.l.b16 %v401
    %v1059 = vunpack.c.h.b16 %v401
    %v1060 = vunpack.c.l.b16 %v402
    %v1061 = vunpack.c.h.b16 %v402
    %v1062 = vunpack.c.l.b16 %v403
    %v1063 = vunpack.c.h.b16 %v403
    %v1064 = vunpack.c.l.b16 %v404
    %v1065 = vunpack.c.h.b16 %v404
    %v1066 = vunpack.c.l.b16 %v405
    %v1067 = vunpack.c.h.b16 %v405
    %v1068 = vunpack.c.l.b16 %v406
    %v1069 = vunpack.c.h.b16 %v406
    %v1070 = vunpack.c.l.b16 %v407
    %v1071 = vunpack.c.h.b16 %v407
    %v1072 = vunpack.c.l.b16 %v408
    %v1073 = vunpack.c.h.b16 %v408
    %v1074 = vunpack.c.l.b16 %v409
    %v1075 = vunpack.c.h.b16 %v409
    %v1076 = vunpack.c.l.b16 %v410
    %v1077 = vunpack.c.h.b16 %v410
    %v1078 = vunpack.c.l.b16 %v411
    %v1079 = vunpack.c.h.b16 %v411
    %v1080 = vunpack.c.l.b16 %v412
    %v1081 = vunpack.c.h.b16 %v412
    %v1082 = vunpack.c.l.b16 %v413
    %v1083 = vunpack.c.h.b16 %v413
    %v1084 = vunpack.c.l.b16 %v414
    %v1085 = vunpack.c.h.b16 %v414
    %v1086 = vunpack.c.l.b16 %v415
    %v1087 = vunpack.c.h.b16 %v415
    %v1088 = vunpack.c.l.b16 %v416
    %v1089 = vunpack.c.h.b16 %v416
    %v1090 = vunpack.c.l.b16 %v417
    %v1091 = vunpack.c.h.b16 %v417
    %v1092 = vunpack.c.l.b16 %v418
    %v1093 = vunpack.c.h.b16 %v418
    %v1094 = vunpack.c.l.b16 %v419
    %v1095 = vunpack.c.h.b16 %v419
    %v1096 = vunpack.c.l.b16 %v420
    %v1097 = vunpack.c.h.b16 %v420
    %v1098 = vunpack.c.l.b16 %v421
    %v1099 = vunpack.c.h.b16 %v421
    %v1100 = vunpack.c.l.b16 %v422
    %v1101 = vunpack.c.h.b16 %v422
    %v1102 = vunpack.c.l.b16 %v423
    %v1103 = vunpack.c.h.b16 %v423
    %v1104 = vunpack.c.l.b16 %v424
    %v1105 = vunpack.c.h.b16 %v424
    %v1106 = vunpack.c.l.b16 %v425
    %v1107 = vunpack.c.h.b16 %v425
    %v1108 = vunpack.c.l.b16 %v426
    %v1109 = vunpack.c.h.b16 %v426
    %v1110 = vunpack.c.l.b16 %v427
    %v1111 = vunpack.c.h.b16 %v427
    %v1112 = vunpack.c.l.b16 %v428
    %v1113 = vunpack.c.h.b16 %v428
    %v1114 = vunpack.c.l.b16 %v429
    %v1115 = vunpack.c.h.b16 %v429
    %v1116 = vunpack.c.l.b16 %v430
    %v1117 = vunpack.c.h.b16 %v430
    %v1118 = vunpack.c.l.b16 %v431
    %v1119 = vunpack.c.h.b16 %v431
    %v1120 = vunpack.c.l.b16 %v432
    %v1121 = vunpack.c.h.b16 %v432
    %v1122 = vunpack.c.l.b16 %v433
    %v1123 = vunpack.c.h.b16 %v433
    %v1124 = vunpack.c.l.b16 %v434
    %v1125 = vunpack.c.h.b16 %v434
    %v1126 = vunpack.c.l.b16 %v435
    %v1127 = vunpack.c.h.b16 %v435
    %v1128 = vunpack.c.l.b16 %v436
    %v1129 = vunpack.c.h.b16 %v436
    %v1130 = vunpack.c.l.b16 %v437
    %v1131 = vunpack.c.h.b16 %v437
    %v1132 = vunpack.c.l.b16 %v438
    %v1133 = vunpack.c.h.b16 %v438
    %v1134 = vunpack.c.l.b16 %v439
    %v1135 = vunpack.c.h.b16 %v439
    %v1136 = vunpack.c.l.b16 %v440
    %v1137 = vunpack.c.h.b16 %v440
    %v1138 = vunpack.c.l.b16 %v441
    %v1139 = vunpack.c.h.b16 %v441
    %v1140 = vunpack.c.l.b16 %v442
    %v1141 = vunpack.c.h.b16 %v442
    %v1142 = vunpack.c.l.b16 %v443
    %v1143 = vunpack.c.h.b16 %v443
    %v1144 = vunpack.c.l.b16 %v444
    %v1145 = vunpack.c.h.b16 %v444
    %v1146 = vunpack.c.l.b16 %v445
    %v1147 = vunpack.c.h.b16 %v445
    %v1148 = vunpack.c.l.b16 %v446
    %v1149 = vunpack.c.h.b16 %v446
    %v1150 = vunpack.c.l.b16 %v447
    %v1151 = vunpack.c.h.b16 %v447
    %v1152 = vunpack.c.l.b16 %v448
    %v1153 = vunpack.c.h.b16 %v448
    %v1154 = vunpack.c.l.b16 %v449
    %v1155 = vunpack.c.h.b16 %v449
    %v1156 = vunpack.c.l.b16 %v450
    %v1157 = vunpack.c.h.b16 %v450
    %v1158 = vpack.c.b16 %v714, %v710
    %v1159 = vpack.c.b16 %v715, %v711
    %v1160 = vpack.c.b16 %v716, %v712
    %v1161 = vpack.c.b16 %v717, %v713
    %v1162 = vpack.c.b16 %v722, %v718
    %v1163 = vpack.c.b16 %v723, %v719
    %v1164 = vpack.c.b16 %v724, %v720
    %v1165 = vpack.c.b16 %v725, %v721
    %v1166 = vpack.c.b16 %v730, %v726
    %v1167 = vpack.c.b16 %v731, %v727
    %v1168 = vpack.c.b16 %v732, %v728
    %v1169 = vpack.c.b16 %v733, %v729
    %v1170 = vpack.c.b16 %v738, %v734
    %v1171 = vpack.c.b16 %v739, %v735
    %v1172 = vpack.c.b16 %v740, %v736
    %v1173 = vpack.c.b16 %v741, %v737
    %v1174 = vpack.c.b16 %v746, %v742
    %v1175 = vpack.c.b16 %v747, %v743
    %v1176 = vpack.c.b16 %v748, %v744
    %v1177 = vpack.c.b16 %v749, %v745
    %v1178 = vpack.c.b16 %v754, %v750
    %v1179 = vpack.c.b16 %v755, %v751
    %v1180 = vpack.c.b16 %v756, %v752
    %v1181 = vpack.c.b16 %v757, %v753
    %v1182 = vpack.c.b16 %v762, %v758
    %v1183 = vpack.c.b16 %v763, %v759
    %v1184 = vpack.c.b16 %v764, %v760
    %v1185 = vpack.c.b16 %v765, %v761
    %v1186 = vpack.c.b16 %v770, %v766
    %v1187 = vpack.c.b16 %v771, %v767
    %v1188 = vpack.c.b16 %v772, %v768
    %v1189 = vpack.c.b16 %v773, %v769
    %v1190 = vpack.c.b16 %v778, %v774
    %v1191 = vpack.c.b16 %v779, %v775
    %v1192 = vpack.c.b16 %v780, %v776
    %v1193 = vpack.c.b16 %v781, %v777
    %v1194 = vpack.c.b16 %v786, %v782
    %v1195 = vpack.c.b16 %v787, %v783
    %v1196 = vpack.c.b16 %v788, %v784
    %v1197 = vpack.c.b16 %v789, %v785
    %v1198 = vpack.c.b16 %v794, %v790
    %v1199 = vpack.c.b16 %v795, %v791
    %v1200 = vpack.c.b16 %v796, %v792
    %v1201 = vpack.c.b16 %v797, %v793
    %v1202 = vpack.c.b16 %v802, %v798
    %v1203 = vpack.c.b16 %v803, %v799
    %v1204 = vpack.c.b16 %v804, %v800
    %v1205 = vpack.c.b16 %v805, %v801
    %v1206 = vpack.c.b16 %v810, %v806
    %v1207 = vpack.c.b16 %v811, %v807
    %v1208 = vpack.c.b16 %v812, %v808
    %v1209 = vpack.c.b16 %v813, %v809
    %v1210 = vpack.c.b16 %v818, %v814
    %v1211 = vpack.c.b16 %v819, %v815
    %v1212 = vpack.c.b16 %v820, %v816
    %v1213 = vpack.c.b16 %v821, %v817
    %v1214 = vpack.c.b16 %v826, %v822
    %v1215 = vpack.c.b16 %v827, %v823
    %v1216 = vpack.c.b16 %v828, %v824
    %v1217 = vpack.c.b16 %v829, %v825
    %v1218 = vpack.c.b16 %v834, %v830
    %v1219 = vpack.c.b16 %v835, %v831
    %v1220 = vpack.c.b16 %v836, %v832
    %v1221 = vpack.c.b16 %v837, %v833
    %v1222 = vpack.c.b16 %v842, %v838
    %v1223 = vpack.c.b16 %v843, %v839
    %v1224 = vpack.c.b16 %v844, %v840
    %v1225 = vpack.c.b16 %v845, %v841
    %v1226 = vpack.c.b16 %v850, %v846
    %v1227 = vpack.c.b16 %v851, %v847
    %v1228 = vpack.c.b16 %v852, %v848
    %v1229 = vpack.c.b16 %v853, %v849
    %v1230 = vpack.c.b16 %v858, %v854
    %v1231 = vpack.c.b16 %v859, %v855
    %v1232 = vpack.c.b16 %v860, %v856
    %v1233 = vpack.c.b16 %v861, %v857
    %v1234 = vpack.c.b16 %v866, %v862
    %v1235 = vpack.c.b16 %v867, %v863
    %v1236 = vpack.c.b16 %v868, %v864
    %v1237 = vpack.c.b16 %v869, %v865
    %v1238 = vpack.c.b16 %v874, %v870
    %v1239 = vpack.c.b16 %v875, %v871
    %v1240 = vpack.c.b16 %v876, %v872
    %v1241 = vpack.c.b16 %v877, %v873
    %v1242 = vpack.c.b16 %v882, %v878
    %v1243 = vpack.c.b16 %v883, %v879
    %v1244 = vpack.c.b16 %v884, %v880
    %v1245 = vpack.c.b16 %v885, %v881
    %v1246 = vpack.c.b16 %v890, %v886
    %v1247 = vpack.c.b16 %v891, %v887
    %v1248 = vpack.c.b16 %v892, %v888
    %v1249 = vpack.c.b16 %v893, %v889
    %v1250 = vpack.c.b16 %v898, %v894
    %v1251 = vpack.c.b16 %v899, %v895
    %v1252 = vpack.c.b16 %v900, %v896
    %v1253 = vpack.c.b16 %v901, %v897
    %v1254 = vpack.c.b16 %v906, %v902
    %v1255 = vpack.c.b16 %v907, %v903
    %v1256 = vpack.c.b16 %v908, %v904
    %v1257 = vpack.c.b16 %v909, %v905
    %v1258 = vpack.c.b16 %v914, %v910
    %v1259 = vpack.c.b16 %v915, %v911
    %v1260 = vpack.c.b16 %v916, %v912
    %v1261 = vpack.c.b16 %v917, %v913
    %v1262 = vpack.c.b16 %v922, %v918
    %v1263 = vpack.c.b16 %v923, %v919
    %v1264 = vpack.c.b16 %v924, %v920
    %v1265 = vpack.c.b16 %v925, %v921
    %v1266 = vpack.c.b16 %v930, %v926
    %v1267 = vpack.c.b16 %v931, %v927
    %v1268 = vpack.c.b16 %v932, %v928
    %v1269 = vpack.c.b16 %v933, %v929
    %v1270 = vpack.c.b16 %v938, %v934
    %v1271 = vpack.c.b16 %v939, %v935
    %v1272 = vpack.c.b16 %v940, %v936
    %v1273 = vpack.c.b16 %v941, %v937
    %v1274 = vpack.c.b16 %v946, %v942
    %v1275 = vpack.c.b16 %v947, %v943
    %v1276 = vpack.c.b16 %v948, %v944
    %v1277 = vpack.c.b16 %v949, %v945
    %v1278 = vpack.c.b16 %v954, %v950
    %v1279 = vpack.c.b16 %v955, %v951
    %v1280 = vpack.c.b16 %v956, %v952
    %v1281 = vpack.c.b16 %v957, %v953
    %v1282 = vpack.c.b16 %v962, %v958
    %v1283 = vpack.c.b16 %v963, %v959
    %v1284 = vpack.c.b16 %v964, %v960
    %v1285 = vpack.c.b16 %v965, %v961
    %v1286 = vpack.c.b16 %v970, %v966
    %v1287 = vpack.c.b16 %v971, %v967
    %v1288 = vpack.c.b16 %v972, %v968
    %v1289 = vpack.c.b16 %v973, %v969
    %v1290 = vpack.c.b16 %v978, %v974
    %v1291 = vpack.c.b16 %v979, %v975
    %v1292 = vpack.c.b16 %v980, %v976
    %v1293 = vpack.c.b16 %v981, %v977
    %v1294 = vpack.c.b16 %v986, %v982
    %v1295 = vpack.c.b16 %v987, %v983
    %v1296 = vpack.c.b16 %v988, %v984
    %v1297 = vpack.c.b16 %v989, %v985
    %v1298 = vpack.c.b16 %v994, %v990
    %v1299 = vpack.c.b16 %v995, %v991
    %v1300 = vpack.c.b16 %v996, %v992
    %v1301 = vpack.c.b16 %v997, %v993
    %v1302 = vpack.c.b16 %v1002, %v998
    %v1303 = vpack.c.b16 %v1003, %v999
    %v1304 = vpack.c.b16 %v1004, %v1000
    %v1305 = vpack.c.b16 %v1005, %v1001
    %v1306 = vpack.c.b16 %v1010, %v1006
    %v1307 = vpack.c.b16 %v1011, %v1007
    %v1308 = vpack.c.b16 %v1012, %v1008
    %v1309 = vpack.c.b16 %v1013, %v1009
    %v1310 = vpack.c.b16 %v1018, %v1014
    %v1311 = vpack.c.b16 %v1019, %v1015
    %v1312 = vpack.c.b16 %v1020, %v1016
    %v1313 = vpack.c.b16 %v1021, %v1017
    %v1314 = vpack.c.b16 %v1026, %v1022
    %v1315 = vpack.c.b16 %v1027, %v1023
    %v1316 = vpack.c.b16 %v1028, %v1024
    %v1317 = vpack.c.b16 %v1029, %v1025
    %v1318 = vpack.c.b16 %v1034, %v1030
    %v1319 = vpack.c.b16 %v1035, %v1031
    %v1320 = vpack.c.b16 %v1036, %v1032
    %v1321 = vpack.c.b16 %v1037, %v1033
    %v1322 = vpack.c.b16 %v1042, %v1038
    %v1323 = vpack.c.b16 %v1043, %v1039
    %v1324 = vpack.c.b16 %v1044, %v1040
    %v1325 = vpack.c.b16 %v1045, %v1041
    %v1326 = vpack.c.b16 %v1050, %v1046
    %v1327 = vpack.c.b16 %v1051, %v1047
    %v1328 = vpack.c.b16 %v1052, %v1048
    %v1329 = vpack.c.b16 %v1053, %v1049
    %v1330 = vpack.c.b16 %v1058, %v1054
    %v1331 = vpack.c.b16 %v1059, %v1055
    %v1332 = vpack.c.b16 %v1060, %v1056
    %v1333 = vpack.c.b16 %v1061, %v1057
    %v1334 = vpack.c.b16 %v1066, %v1062
    %v1335 = vpack.c.b16 %v1067, %v1063
    %v1336 = vpack.c.b16 %v1068, %v1064
    %v1337 = vpack.c.b16 %v1069, %v1065
    %v1338 = vpack.c.b16 %v1074, %v1070
    %v1339 = vpack.c.b16 %v1075, %v1071
    %v1340 = vpack.c.b16 %v1076, %v1072
    %v1341 = vpack.c.b16 %v1077, %v1073
    %v1342 = vpack.c.b16 %v1082, %v1078
    %v1343 = vpack.c.b16 %v1083, %v1079
    %v1344 = vpack.c.b16 %v1084, %v1080
    %v1345 = vpack.c.b16 %v1085, %v1081
    %v1346 = vpack.c.b16 %v1090, %v1086
    %v1347 = vpack.c.b16 %v1091, %v1087
    %v1348 = vpack.c.b16 %v1092, %v1088
    %v1349 = vpack.c.b16 %v1093, %v1089
    %v1350 = vpack.c.b16 %v1098, %v1094
    %v1351 = vpack.c.b16 %v1099, %v1095
    %v1352 = vpack.c.b16 %v1100, %v1096
    %v1353 = vpack.c.b16 %v1101, %v1097
    %v1354 = vpack.c.b16 %v1106, %v1102
    %v1355 = vpack.c.b16 %v1107, %v1103
    %v1356 = vpack.c.b16 %v1108, %v1104
    %v1357 = vpack.c.b16 %v1109, %v1105
    %v1358 = vpack.c.b16 %v1114, %v1110
    %v1359 = vpack.c.b16 %v1115, %v1111
    %v1360 = vpack.c.b16 %v1116, %v1112
    %v1361 = vpack.c.b16 %v1117, %v1113
    %v1362 = vpack.c.b16 %v1122, %v1118
    %v1363 = vpack.c.b16 %v1123, %v1119
    %v1364 = vpack.c.b16 %v1124, %v1120
    %v1365 = vpack.c.b16 %v1125, %v1121
    %v1366 = vpack.c.b16 %v1130, %v1126
    %v1367 = vpack.c.b16 %v1131, %v1127
    %v1368 = vpack.c.b16 %v1132, %v1128
    %v1369 = vpack.c.b16 %v1133, %v1129
    %v1370 = vpack.c.b16 %v1138, %v1134
    %v1371 = vpack.c.b16 %v1139, %v1135
    %v1372 = vpack.c.b16 %v1140, %v1136
    %v1373 = vpack.c.b16 %v1141, %v1137
    %v1374 = vpack.c.b16 %v1146, %v1142
    %v1375 = vpack.c.b16 %v1147, %v1143
    %v1376 = vpack.c.b16 %v1148, %v1144
    %v1377 = vpack.c.b16 %v1149, %v1145
    %v1378 = vpack.c.b16 %v1154, %v1150
    %v1379 = vpack.c.b16 %v1155, %v1151
    %v1380 = vpack.c.b16 %v1156, %v1152
    %v1381 = vpack.c.b16 %v1157, %v1153
    %1606 = vmatpush.bf16.msra.mxu0 %v1186
    %1607 = vmatpush.bf16.msra.mxu0 %v1182
    %1608 = vmatpush.bf16.msra.mxu0 %v1178
    %1609 = vmatpush.bf16.msra.mxu0 %v1174
    %1610 = vmatpush.bf16.msra.mxu0 %v1170
    %1611 = vmatpush.bf16.msra.mxu0 %v1166
    %1612 = vmatpush.bf16.msra.mxu0 %v1162
    %1613 = vmatpush.bf16.msra.mxu0 %v1158
    %1614 = vmatmul.bf16.gmra.mxu0 %v472
    %v1615 = vpop.f32.mrf.mxu0
    %v1616 = vadd.f32 %v453, %v1615
    %v1617 = vpop.f32.mrf.mxu0
    %1618 = vdwg.mxu0
    %1619 = vmatpush.bf16.msra.mxu0 %v1218
    %1620 = vmatpush.bf16.msra.mxu0 %v1214
    %1621 = vmatpush.bf16.msra.mxu0 %v1210
    %1622 = vmatpush.bf16.msra.mxu0 %v1206
    %1623 = vmatpush.bf16.msra.mxu0 %v1202
    %1624 = vmatpush.bf16.msra.mxu0 %v1198
    %1625 = vmatpush.bf16.msra.mxu0 %v1194
    %1626 = vmatpush.bf16.msra.mxu0 %v1190
    %1627 = vmatmul.bf16.gmra.mxu0 %v473
    %v1628 = vpop.f32.mrf.mxu0
    %v1629 = vadd.f32 %v1616, %v1628
    %v1630 = vpop.f32.mrf.mxu0
    %1631 = vdwg.mxu0
    %1632 = vmatpush.bf16.msra.mxu0 %v1250
    %1633 = vmatpush.bf16.msra.mxu0 %v1246
    %1634 = vmatpush.bf16.msra.mxu0 %v1242
    %1635 = vmatpush.bf16.msra.mxu0 %v1238
    %1636 = vmatpush.bf16.msra.mxu0 %v1234
    %1637 = vmatpush.bf16.msra.mxu0 %v1230
    %1638 = vmatpush.bf16.msra.mxu0 %v1226
    %1639 = vmatpush.bf16.msra.mxu0 %v1222
    %1640 = vmatmul.bf16.gmra.mxu0 %v474
    %v1641 = vpop.f32.mrf.mxu0
    %v1642 = vadd.f32 %v1629, %v1641
    %v1643 = vpop.f32.mrf.mxu0
    %1644 = vdwg.mxu0
    %1645 = vmatpush.bf16.msra.mxu0 %v1282
    %1646 = vmatpush.bf16.msra.mxu0 %v1278
    %1647 = vmatpush.bf16.msra.mxu0 %v1274
    %1648 = vmatpush.bf16.msra.mxu0 %v1270
    %1649 = vmatpush.bf16.msra.mxu0 %v1266
    %1650 = vmatpush.bf16.msra.mxu0 %v1262
    %1651 = vmatpush.bf16.msra.mxu0 %v1258
    %1652 = vmatpush.bf16.msra.mxu0 %v1254
    %1653 = vmatmul.bf16.gmra.mxu0 %v475
    %v1654 = vpop.f32.mrf.mxu0
    %v1655 = vadd.f32 %v1642, %v1654
    %v1656 = vpop.f32.mrf.mxu0
    %1657 = vdwg.mxu0
    %1658 = vmatpush.bf16.msra.mxu0 %v1314
    %1659 = vmatpush.bf16.msra.mxu0 %v1310
    %1660 = vmatpush.bf16.msra.mxu0 %v1306
    %1661 = vmatpush.bf16.msra.mxu0 %v1302
    %1662 = vmatpush.bf16.msra.mxu0 %v1298
    %1663 = vmatpush.bf16.msra.mxu0 %v1294
    %1664 = vmatpush.bf16.msra.mxu0 %v1290
    %1665 = vmatpush.bf16.msra.mxu0 %v1286
    %1666 = vmatmul.bf16.gmra.mxu0 %v476
    %v1667 = vpop.f32.mrf.mxu0
    %v1668 = vadd.f32 %v1655, %v1667
    %v1669 = vpop.f32.mrf.mxu0
    %1670 = vdwg.mxu0
    %1671 = vmatpush.bf16.msra.mxu0 %v1346
    %1672 = vmatpush.bf16.msra.mxu0 %v1342
    %1673 = vmatpush.bf16.msra.mxu0 %v1338
    %1674 = vmatpush.bf16.msra.mxu0 %v1334
    %1675 = vmatpush.bf16.msra.mxu0 %v1330
    %1676 = vmatpush.bf16.msra.mxu0 %v1326
    %1677 = vmatpush.bf16.msra.mxu0 %v1322
    %1678 = vmatpush.bf16.msra.mxu0 %v1318
    %1679 = vmatmul.bf16.gmra.mxu0 %v477
    %v1680 = vpop.f32.mrf.mxu0
    %v1681 = vadd.f32 %v1668, %v1680
    %v1682 = vpop.f32.mrf.mxu0
    %1683 = vdwg.mxu0
    %1684 = vmatpush.bf16.msra.mxu0 %v1378
    %1685 = vmatpush.bf16.msra.mxu0 %v1374
    %1686 = vmatpush.bf16.msra.mxu0 %v1370
    %1687 = vmatpush.bf16.msra.mxu0 %v1366
    %1688 = vmatpush.bf16.msra.mxu0 %v1362
    %1689 = vmatpush.bf16.msra.mxu0 %v1358
    %1690 = vmatpush.bf16.msra.mxu0 %v1354
    %1691 = vmatpush.bf16.msra.mxu0 %v1350
    %1692 = vmatmul.bf16.gmra.mxu0 %v478
    %v1693 = vpop.f32.mrf.mxu0
    %v1694 = vadd.f32 %v1681, %v1693
    %v1695 = vpop.f32.mrf.mxu0
    %1696 = vdwg.mxu0
    %1697 = vmatpush.bf16.msra.mxu0 %v1187
    %1698 = vmatpush.bf16.msra.mxu0 %v1183
    %1699 = vmatpush.bf16.msra.mxu0 %v1179
    %1700 = vmatpush.bf16.msra.mxu0 %v1175
    %1701 = vmatpush.bf16.msra.mxu0 %v1171
    %1702 = vmatpush.bf16.msra.mxu0 %v1167
    %1703 = vmatpush.bf16.msra.mxu0 %v1163
    %1704 = vmatpush.bf16.msra.mxu0 %v1159
    %1705 = vmatmul.bf16.gmra.mxu0 %v472
    %v1706 = vpop.f32.mrf.mxu0
    %v1707 = vadd.f32 %v454, %v1706
    %v1708 = vpop.f32.mrf.mxu0
    %1709 = vdwg.mxu0
    %1710 = vmatpush.bf16.msra.mxu0 %v1219
    %1711 = vmatpush.bf16.msra.mxu0 %v1215
    %1712 = vmatpush.bf16.msra.mxu0 %v1211
    %1713 = vmatpush.bf16.msra.mxu0 %v1207
    %1714 = vmatpush.bf16.msra.mxu0 %v1203
    %1715 = vmatpush.bf16.msra.mxu0 %v1199
    %1716 = vmatpush.bf16.msra.mxu0 %v1195
    %1717 = vmatpush.bf16.msra.mxu0 %v1191
    %1718 = vmatmul.bf16.gmra.mxu0 %v473
    %v1719 = vpop.f32.mrf.mxu0
    %v1720 = vadd.f32 %v1707, %v1719
    %v1721 = vpop.f32.mrf.mxu0
    %1722 = vdwg.mxu0
    %1723 = vmatpush.bf16.msra.mxu0 %v1251
    %1724 = vmatpush.bf16.msra.mxu0 %v1247
    %1725 = vmatpush.bf16.msra.mxu0 %v1243
    %1726 = vmatpush.bf16.msra.mxu0 %v1239
    %1727 = vmatpush.bf16.msra.mxu0 %v1235
    %1728 = vmatpush.bf16.msra.mxu0 %v1231
    %1729 = vmatpush.bf16.msra.mxu0 %v1227
    %1730 = vmatpush.bf16.msra.mxu0 %v1223
    %1731 = vmatmul.bf16.gmra.mxu0 %v474
    %v1732 = vpop.f32.mrf.mxu0
    %v1733 = vadd.f32 %v1720, %v1732
    %v1734 = vpop.f32.mrf.mxu0
    %1735 = vdwg.mxu0
    %1736 = vmatpush.bf16.msra.mxu0 %v1283
    %1737 = vmatpush.bf16.msra.mxu0 %v1279
    %1738 = vmatpush.bf16.msra.mxu0 %v1275
    %1739 = vmatpush.bf16.msra.mxu0 %v1271
    %1740 = vmatpush.bf16.msra.mxu0 %v1267
    %1741 = vmatpush.bf16.msra.mxu0 %v1263
    %1742 = vmatpush.bf16.msra.mxu0 %v1259
    %1743 = vmatpush.bf16.msra.mxu0 %v1255
    %1744 = vmatmul.bf16.gmra.mxu0 %v475
    %v1745 = vpop.f32.mrf.mxu0
    %v1746 = vadd.f32 %v1733, %v1745
    %v1747 = vpop.f32.mrf.mxu0
    %1748 = vdwg.mxu0
    %1749 = vmatpush.bf16.msra.mxu0 %v1315
    %1750 = vmatpush.bf16.msra.mxu0 %v1311
    %1751 = vmatpush.bf16.msra.mxu0 %v1307
    %1752 = vmatpush.bf16.msra.mxu0 %v1303
    %1753 = vmatpush.bf16.msra.mxu0 %v1299
    %1754 = vmatpush.bf16.msra.mxu0 %v1295
    %1755 = vmatpush.bf16.msra.mxu0 %v1291
    %1756 = vmatpush.bf16.msra.mxu0 %v1287
    %1757 = vmatmul.bf16.gmra.mxu0 %v476
    %v1758 = vpop.f32.mrf.mxu0
    %v1759 = vadd.f32 %v1746, %v1758
    %v1760 = vpop.f32.mrf.mxu0
    %1761 = vdwg.mxu0
    %1762 = vmatpush.bf16.msra.mxu0 %v1347
    %1763 = vmatpush.bf16.msra.mxu0 %v1343
    %1764 = vmatpush.bf16.msra.mxu0 %v1339
    %1765 = vmatpush.bf16.msra.mxu0 %v1335
    %1766 = vmatpush.bf16.msra.mxu0 %v1331
    %1767 = vmatpush.bf16.msra.mxu0 %v1327
    %1768 = vmatpush.bf16.msra.mxu0 %v1323
    %1769 = vmatpush.bf16.msra.mxu0 %v1319
    %1770 = vmatmul.bf16.gmra.mxu0 %v477
    %v1771 = vpop.f32.mrf.mxu0
    %v1772 = vadd.f32 %v1759, %v1771
    %v1773 = vpop.f32.mrf.mxu0
    %1774 = vdwg.mxu0
    %1775 = vmatpush.bf16.msra.mxu0 %v1379
    %1776 = vmatpush.bf16.msra.mxu0 %v1375
    %1777 = vmatpush.bf16.msra.mxu0 %v1371
    %1778 = vmatpush.bf16.msra.mxu0 %v1367
    %1779 = vmatpush.bf16.msra.mxu0 %v1363
    %1780 = vmatpush.bf16.msra.mxu0 %v1359
    %1781 = vmatpush.bf16.msra.mxu0 %v1355
    %1782 = vmatpush.bf16.msra.mxu0 %v1351
    %1783 = vmatmul.bf16.gmra.mxu0 %v478
    %v1784 = vpop.f32.mrf.mxu0
    %v1785 = vadd.f32 %v1772, %v1784
    %v1786 = vpop.f32.mrf.mxu0
    %1787 = vdwg.mxu0
    %1788 = vmatpush.bf16.msra.mxu0 %v1188
    %1789 = vmatpush.bf16.msra.mxu0 %v1184
    %1790 = vmatpush.bf16.msra.mxu0 %v1180
    %1791 = vmatpush.bf16.msra.mxu0 %v1176
    %1792 = vmatpush.bf16.msra.mxu0 %v1172
    %1793 = vmatpush.bf16.msra.mxu0 %v1168
    %1794 = vmatpush.bf16.msra.mxu0 %v1164
    %1795 = vmatpush.bf16.msra.mxu0 %v1160
    %1796 = vmatmul.bf16.gmra.mxu0 %v472
    %v1797 = vpop.f32.mrf.mxu0
    %v1798 = vadd.f32 %v455, %v1797
    %v1799 = vpop.f32.mrf.mxu0
    %1800 = vdwg.mxu0
    %1801 = vmatpush.bf16.msra.mxu0 %v1220
    %1802 = vmatpush.bf16.msra.mxu0 %v1216
    %1803 = vmatpush.bf16.msra.mxu0 %v1212
    %1804 = vmatpush.bf16.msra.mxu0 %v1208
    %1805 = vmatpush.bf16.msra.mxu0 %v1204
    %1806 = vmatpush.bf16.msra.mxu0 %v1200
    %1807 = vmatpush.bf16.msra.mxu0 %v1196
    %1808 = vmatpush.bf16.msra.mxu0 %v1192
    %1809 = vmatmul.bf16.gmra.mxu0 %v473
    %v1810 = vpop.f32.mrf.mxu0
    %v1811 = vadd.f32 %v1798, %v1810
    %v1812 = vpop.f32.mrf.mxu0
    %1813 = vdwg.mxu0
    %1814 = vmatpush.bf16.msra.mxu0 %v1252
    %1815 = vmatpush.bf16.msra.mxu0 %v1248
    %1816 = vmatpush.bf16.msra.mxu0 %v1244
    %1817 = vmatpush.bf16.msra.mxu0 %v1240
    %1818 = vmatpush.bf16.msra.mxu0 %v1236
    %1819 = vmatpush.bf16.msra.mxu0 %v1232
    %1820 = vmatpush.bf16.msra.mxu0 %v1228
    %1821 = vmatpush.bf16.msra.mxu0 %v1224
    %1822 = vmatmul.bf16.gmra.mxu0 %v474
    %v1823 = vpop.f32.mrf.mxu0
    %v1824 = vadd.f32 %v1811, %v1823
    %v1825 = vpop.f32.mrf.mxu0
    %1826 = vdwg.mxu0
    %1827 = vmatpush.bf16.msra.mxu0 %v1284
    %1828 = vmatpush.bf16.msra.mxu0 %v1280
    %1829 = vmatpush.bf16.msra.mxu0 %v1276
    %1830 = vmatpush.bf16.msra.mxu0 %v1272
    %1831 = vmatpush.bf16.msra.mxu0 %v1268
    %1832 = vmatpush.bf16.msra.mxu0 %v1264
    %1833 = vmatpush.bf16.msra.mxu0 %v1260
    %1834 = vmatpush.bf16.msra.mxu0 %v1256
    %1835 = vmatmul.bf16.gmra.mxu0 %v475
    %v1836 = vpop.f32.mrf.mxu0
    %v1837 = vadd.f32 %v1824, %v1836
    %v1838 = vpop.f32.mrf.mxu0
    %1839 = vdwg.mxu0
    %1840 = vmatpush.bf16.msra.mxu0 %v1316
    %1841 = vmatpush.bf16.msra.mxu0 %v1312
    %1842 = vmatpush.bf16.msra.mxu0 %v1308
    %1843 = vmatpush.bf16.msra.mxu0 %v1304
    %1844 = vmatpush.bf16.msra.mxu0 %v1300
    %1845 = vmatpush.bf16.msra.mxu0 %v1296
    %1846 = vmatpush.bf16.msra.mxu0 %v1292
    %1847 = vmatpush.bf16.msra.mxu0 %v1288
    %1848 = vmatmul.bf16.gmra.mxu0 %v476
    %v1849 = vpop.f32.mrf.mxu0
    %v1850 = vadd.f32 %v1837, %v1849
    %v1851 = vpop.f32.mrf.mxu0
    %1852 = vdwg.mxu0
    %1853 = vmatpush.bf16.msra.mxu0 %v1348
    %1854 = vmatpush.bf16.msra.mxu0 %v1344
    %1855 = vmatpush.bf16.msra.mxu0 %v1340
    %1856 = vmatpush.bf16.msra.mxu0 %v1336
    %1857 = vmatpush.bf16.msra.mxu0 %v1332
    %1858 = vmatpush.bf16.msra.mxu0 %v1328
    %1859 = vmatpush.bf16.msra.mxu0 %v1324
    %1860 = vmatpush.bf16.msra.mxu0 %v1320
    %1861 = vmatmul.bf16.gmra.mxu0 %v477
    %v1862 = vpop.f32.mrf.mxu0
    %v1863 = vadd.f32 %v1850, %v1862
    %v1864 = vpop.f32.mrf.mxu0
    %1865 = vdwg.mxu0
    %1866 = vmatpush.bf16.msra.mxu0 %v1380
    %1867 = vmatpush.bf16.msra.mxu0 %v1376
    %1868 = vmatpush.bf16.msra.mxu0 %v1372
    %1869 = vmatpush.bf16.msra.mxu0 %v1368
    %1870 = vmatpush.bf16.msra.mxu0 %v1364
    %1871 = vmatpush.bf16.msra.mxu0 %v1360
    %1872 = vmatpush.bf16.msra.mxu0 %v1356
    %1873 = vmatpush.bf16.msra.mxu0 %v1352
    %1874 = vmatmul.bf16.gmra.mxu0 %v478
    %v1875 = vpop.f32.mrf.mxu0
    %v1876 = vadd.f32 %v1863, %v1875
    %v1877 = vpop.f32.mrf.mxu0
    %1878 = vdwg.mxu0
    %1879 = vmatpush.bf16.msra.mxu0 %v1189
    %1880 = vmatpush.bf16.msra.mxu0 %v1185
    %1881 = vmatpush.bf16.msra.mxu0 %v1181
    %1882 = vmatpush.bf16.msra.mxu0 %v1177
    %1883 = vmatpush.bf16.msra.mxu0 %v1173
    %1884 = vmatpush.bf16.msra.mxu0 %v1169
    %1885 = vmatpush.bf16.msra.mxu0 %v1165
    %1886 = vmatpush.bf16.msra.mxu0 %v1161
    %1887 = vmatmul.bf16.gmra.mxu0 %v472
    %v1888 = vpop.f32.mrf.mxu0
    %v1889 = vadd.f32 %v456, %v1888
    %v1890 = vpop.f32.mrf.mxu0
    %1891 = vdwg.mxu0
    %1892 = vmatpush.bf16.msra.mxu0 %v1221
    %1893 = vmatpush.bf16.msra.mxu0 %v1217
    %1894 = vmatpush.bf16.msra.mxu0 %v1213
    %1895 = vmatpush.bf16.msra.mxu0 %v1209
    %1896 = vmatpush.bf16.msra.mxu0 %v1205
    %1897 = vmatpush.bf16.msra.mxu0 %v1201
    %1898 = vmatpush.bf16.msra.mxu0 %v1197
    %1899 = vmatpush.bf16.msra.mxu0 %v1193
    %1900 = vmatmul.bf16.gmra.mxu0 %v473
    %v1901 = vpop.f32.mrf.mxu0
    %v1902 = vadd.f32 %v1889, %v1901
    %v1903 = vpop.f32.mrf.mxu0
    %1904 = vdwg.mxu0
    %1905 = vmatpush.bf16.msra.mxu0 %v1253
    %1906 = vmatpush.bf16.msra.mxu0 %v1249
    %1907 = vmatpush.bf16.msra.mxu0 %v1245
    %1908 = vmatpush.bf16.msra.mxu0 %v1241
    %1909 = vmatpush.bf16.msra.mxu0 %v1237
    %1910 = vmatpush.bf16.msra.mxu0 %v1233
    %1911 = vmatpush.bf16.msra.mxu0 %v1229
    %1912 = vmatpush.bf16.msra.mxu0 %v1225
    %1913 = vmatmul.bf16.gmra.mxu0 %v474
    %v1914 = vpop.f32.mrf.mxu0
    %v1915 = vadd.f32 %v1902, %v1914
    %v1916 = vpop.f32.mrf.mxu0
    %1917 = vdwg.mxu0
    %1918 = vmatpush.bf16.msra.mxu0 %v1285
    %1919 = vmatpush.bf16.msra.mxu0 %v1281
    %1920 = vmatpush.bf16.msra.mxu0 %v1277
    %1921 = vmatpush.bf16.msra.mxu0 %v1273
    %1922 = vmatpush.bf16.msra.mxu0 %v1269
    %1923 = vmatpush.bf16.msra.mxu0 %v1265
    %1924 = vmatpush.bf16.msra.mxu0 %v1261
    %1925 = vmatpush.bf16.msra.mxu0 %v1257
    %1926 = vmatmul.bf16.gmra.mxu0 %v475
    %v1927 = vpop.f32.mrf.mxu0
    %v1928 = vadd.f32 %v1915, %v1927
    %v1929 = vpop.f32.mrf.mxu0
    %1930 = vdwg.mxu0
    %1931 = vmatpush.bf16.msra.mxu0 %v1317
    %1932 = vmatpush.bf16.msra.mxu0 %v1313
    %1933 = vmatpush.bf16.msra.mxu0 %v1309
    %1934 = vmatpush.bf16.msra.mxu0 %v1305
    %1935 = vmatpush.bf16.msra.mxu0 %v1301
    %1936 = vmatpush.bf16.msra.mxu0 %v1297
    %1937 = vmatpush.bf16.msra.mxu0 %v1293
    %1938 = vmatpush.bf16.msra.mxu0 %v1289
    %1939 = vmatmul.bf16.gmra.mxu0 %v476
    %v1940 = vpop.f32.mrf.mxu0
    %v1941 = vadd.f32 %v1928, %v1940
    %v1942 = vpop.f32.mrf.mxu0
    %1943 = vdwg.mxu0
    %1944 = vmatpush.bf16.msra.mxu0 %v1349
    %1945 = vmatpush.bf16.msra.mxu0 %v1345
    %1946 = vmatpush.bf16.msra.mxu0 %v1341
    %1947 = vmatpush.bf16.msra.mxu0 %v1337
    %1948 = vmatpush.bf16.msra.mxu0 %v1333
    %1949 = vmatpush.bf16.msra.mxu0 %v1329
    %1950 = vmatpush.bf16.msra.mxu0 %v1325
    %1951 = vmatpush.bf16.msra.mxu0 %v1321
    %1952 = vmatmul.bf16.gmra.mxu0 %v477
    %v1953 = vpop.f32.mrf.mxu0
    %v1954 = vadd.f32 %v1941, %v1953
    %v1955 = vpop.f32.mrf.mxu0
    %1956 = vdwg.mxu0
    %1957 = vmatpush.bf16.msra.mxu0 %v1381
    %1958 = vmatpush.bf16.msra.mxu0 %v1377
    %1959 = vmatpush.bf16.msra.mxu0 %v1373
    %1960 = vmatpush.bf16.msra.mxu0 %v1369
    %1961 = vmatpush.bf16.msra.mxu0 %v1365
    %1962 = vmatpush.bf16.msra.mxu0 %v1361
    %1963 = vmatpush.bf16.msra.mxu0 %v1357
    %1964 = vmatpush.bf16.msra.mxu0 %v1353
    %1965 = vmatmul.bf16.gmra.mxu0 %v478
    %v1966 = vpop.f32.mrf.mxu0
    %v1967 = vadd.f32 %v1954, %v1966
    %v1968 = vpop.f32.mrf.mxu0
    %1969 = vdwg.mxu0
    %v1970 = vmax.f32 %v1694, 0.0
    %v1971 = vmax.f32 %v1785, 0.0
    %v1972 = vmax.f32 %v1876, 0.0
    %v1973 = vmax.f32 %v1967, 0.0
    %v1974 = vpack.c.bf16 %v1970, %v1970
    %v1975 = vpack.c.bf16 %v1971, %v1971
    %v1976 = vpack.c.bf16 %v1972, %v1972
    %v1977 = vpack.c.bf16 %v1973, %v1973
    %v1978 = vld [vmem:[#allocation10] sm:$0xff]
    %v1979 = vld [vmem:[#allocation10 + $0x8] sm:$0xff]
    %v1980 = vld [vmem:[#allocation10 + $0x10] sm:$0xff]
    %v1981 = vld [vmem:[#allocation10 + $0x18] sm:$0xff]
    %v1982 = vld [vmem:[#allocation10 + $0x20] sm:$0xff]
    %v1983 = vld [vmem:[#allocation10 + $0x28] sm:$0xff]
    %v1984 = vld [vmem:[#allocation10 + $0x30] sm:$0xff]
    %v1985 = vld [vmem:[#allocation10 + $0x38] sm:$0xff]
    %v1986 = vld [vmem:[#allocation10 + $0x40] sm:$0xff]
    %v1987 = vld [vmem:[#allocation10 + $0x48] sm:$0xff]
    %v1988 = vld [vmem:[#allocation10 + $0x50] sm:$0xff]
    %v1989 = vld [vmem:[#allocation10 + $0x58] sm:$0xff]
    %v1990 = vld [vmem:[#allocation10 + $0x60] sm:$0xff]
    %v1991 = vld [vmem:[#allocation10 + $0x68] sm:$0xff]
    %v1992 = vld [vmem:[#allocation10 + $0x70] sm:$0xff]
    %v1993 = vld [vmem:[#allocation10 + $0x78] sm:$0xff]
    %v1994 = vld [vmem:[#allocation10 + $0x80] sm:$0xff]
    %v1995 = vld [vmem:[#allocation10 + $0x88] sm:$0xff]
    %v1996 = vld [vmem:[#allocation10 + $0x90] sm:$0xff]
    %v1997 = vld [vmem:[#allocation10 + $0x98] sm:$0xff]
    %v1998 = vld [vmem:[#allocation10 + $0xa0] sm:$0xff]
    %v1999 = vld [vmem:[#allocation10 + $0xa8] sm:$0xff]
    %v2000 = vld [vmem:[#allocation10 + $0xb0] sm:$0xff]
    %v2001 = vld [vmem:[#allocation10 + $0xb8] sm:$0xff]
    %v2002 = vld [vmem:[#allocation10 + $0xc0] sm:$0xff]
    %v2003 = vld [vmem:[#allocation10 + $0xc8] sm:$0xff]
    %v2004 = vld [vmem:[#allocation10 + $0xd0] sm:$0xff]
    %v2005 = vld [vmem:[#allocation10 + $0xd8] sm:$0xff]
    %v2006 = vld [vmem:[#allocation10 + $0xe0] sm:$0xff]
    %v2007 = vld [vmem:[#allocation10 + $0xe8] sm:$0xff]
    %v2008 = vld [vmem:[#allocation10 + $0xf0] sm:$0xff]
    %v2009 = vld [vmem:[#allocation10 + $0xf8] sm:$0xff]
    %v2010 = vld [vmem:[#allocation10 + $0x100] sm:$0xff]
    %v2011 = vld [vmem:[#allocation10 + $0x108] sm:$0xff]
    %v2012 = vld [vmem:[#allocation10 + $0x110] sm:$0xff]
    %v2013 = vld [vmem:[#allocation10 + $0x118] sm:$0xff]
    %v2014 = vld [vmem:[#allocation10 + $0x120] sm:$0xff]
    %v2015 = vld [vmem:[#allocation10 + $0x128] sm:$0xff]
    %v2016 = vld [vmem:[#allocation10 + $0x130] sm:$0xff]
    %v2017 = vld [vmem:[#allocation10 + $0x138] sm:$0xff]
    %v2018 = vld [vmem:[#allocation10 + $0x140] sm:$0xff]
    %v2019 = vld [vmem:[#allocation10 + $0x148] sm:$0xff]
    %v2020 = vld [vmem:[#allocation10 + $0x150] sm:$0xff]
    %v2021 = vld [vmem:[#allocation10 + $0x158] sm:$0xff]
    %v2022 = vld [vmem:[#allocation10 + $0x160] sm:$0xff]
    %v2023 = vld [vmem:[#allocation10 + $0x168] sm:$0xff]
    %v2024 = vld [vmem:[#allocation10 + $0x170] sm:$0xff]
    %v2025 = vld [vmem:[#allocation10 + $0x178] sm:$0xff]
    %v2026 = vld [vmem:[#allocation10 + $0x180] sm:$0xff]
    %v2027 = vld [vmem:[#allocation10 + $0x188] sm:$0xff]
    %v2028 = vld [vmem:[#allocation10 + $0x190] sm:$0xff]
    %v2029 = vld [vmem:[#allocation10 + $0x198] sm:$0xff]
    %v2030 = vld [vmem:[#allocation10 + $0x1a0] sm:$0xff]
    %v2031 = vld [vmem:[#allocation10 + $0x1a8] sm:$0xff]
    %v2032 = vld [vmem:[#allocation10 + $0x1b0] sm:$0xff]
    %v2033 = vld [vmem:[#allocation10 + $0x1b8] sm:$0xff]
    %v2034 = vld [vmem:[#allocation10 + $0x1c0] sm:$0xff]
    %v2035 = vld [vmem:[#allocation10 + $0x1c8] sm:$0xff]
    %v2036 = vld [vmem:[#allocation10 + $0x1d0] sm:$0xff]
    %v2037 = vld [vmem:[#allocation10 + $0x1d8] sm:$0xff]
    %v2038 = vld [vmem:[#allocation10 + $0x1e0] sm:$0xff]
    %v2039 = vld [vmem:[#allocation10 + $0x1e8] sm:$0xff]
    %v2040 = vld [vmem:[#allocation10 + $0x1f0] sm:$0xff]
    %v2041 = vld [vmem:[#allocation10 + $0x1f8] sm:$0xff]
    %v2042 = vld [vmem:[#allocation11] sm:$0x3]
    %v2044 = vperm.slane %v2042, 0
    %v2045 = vperm.slane %v2042, 1
    %v2112 = vunpack.c.l.b16 %v1978
    %v2113 = vunpack.c.h.b16 %v1978
    %v2114 = vunpack.c.l.b16 %v1979
    %v2115 = vunpack.c.h.b16 %v1979
    %v2116 = vunpack.c.l.b16 %v1980
    %v2117 = vunpack.c.h.b16 %v1980
    %v2118 = vunpack.c.l.b16 %v1981
    %v2119 = vunpack.c.h.b16 %v1981
    %v2120 = vunpack.c.l.b16 %v1982
    %v2121 = vunpack.c.h.b16 %v1982
    %v2122 = vunpack.c.l.b16 %v1983
    %v2123 = vunpack.c.h.b16 %v1983
    %v2124 = vunpack.c.l.b16 %v1984
    %v2125 = vunpack.c.h.b16 %v1984
    %v2126 = vunpack.c.l.b16 %v1985
    %v2127 = vunpack.c.h.b16 %v1985
    %v2128 = vunpack.c.l.b16 %v1986
    %v2129 = vunpack.c.h.b16 %v1986
    %v2130 = vunpack.c.l.b16 %v1987
    %v2131 = vunpack.c.h.b16 %v1987
    %v2132 = vunpack.c.l.b16 %v1988
    %v2133 = vunpack.c.h.b16 %v1988
    %v2134 = vunpack.c.l.b16 %v1989
    %v2135 = vunpack.c.h.b16 %v1989
    %v2136 = vunpack.c.l.b16 %v1990
    %v2137 = vunpack.c.h.b16 %v1990
    %v2138 = vunpack.c.l.b16 %v1991
    %v2139 = vunpack.c.h.b16 %v1991
    %v2140 = vunpack.c.l.b16 %v1992
    %v2141 = vunpack.c.h.b16 %v1992
    %v2142 = vunpack.c.l.b16 %v1993
    %v2143 = vunpack.c.h.b16 %v1993
    %v2144 = vunpack.c.l.b16 %v1994
    %v2145 = vunpack.c.h.b16 %v1994
    %v2146 = vunpack.c.l.b16 %v1995
    %v2147 = vunpack.c.h.b16 %v1995
    %v2148 = vunpack.c.l.b16 %v1996
    %v2149 = vunpack.c.h.b16 %v1996
    %v2150 = vunpack.c.l.b16 %v1997
    %v2151 = vunpack.c.h.b16 %v1997
    %v2152 = vunpack.c.l.b16 %v1998
    %v2153 = vunpack.c.h.b16 %v1998
    %v2154 = vunpack.c.l.b16 %v1999
    %v2155 = vunpack.c.h.b16 %v1999
    %v2156 = vunpack.c.l.b16 %v2000
    %v2157 = vunpack.c.h.b16 %v2000
    %v2158 = vunpack.c.l.b16 %v2001
    %v2159 = vunpack.c.h.b16 %v2001
    %v2160 = vunpack.c.l.b16 %v2002
    %v2161 = vunpack.c.h.b16 %v2002
    %v2162 = vunpack.c.l.b16 %v2003
    %v2163 = vunpack.c.h.b16 %v2003
    %v2164 = vunpack.c.l.b16 %v2004
    %v2165 = vunpack.c.h.b16 %v2004
    %v2166 = vunpack.c.l.b16 %v2005
    %v2167 = vunpack.c.h.b16 %v2005
    %v2168 = vunpack.c.l.b16 %v2006
    %v2169 = vunpack.c.h.b16 %v2006
    %v2170 = vunpack.c.l.b16 %v2007
    %v2171 = vunpack.c.h.b16 %v2007
    %v2172 = vunpack.c.l.b16 %v2008
    %v2173 = vunpack.c.h.b16 %v2008
    %v2174 = vunpack.c.l.b16 %v2009
    %v2175 = vunpack.c.h.b16 %v2009
    %v2176 = vunpack.c.l.b16 %v2010
    %v2177 = vunpack.c.h.b16 %v2010
    %v2178 = vunpack.c.l.b16 %v2011
    %v2179 = vunpack.c.h.b16 %v2011
    %v2180 = vunpack.c.l.b16 %v2012
    %v2181 = vunpack.c.h.b16 %v2012
    %v2182 = vunpack.c.l.b16 %v2013
    %v2183 = vunpack.c.h.b16 %v2013
    %v2184 = vunpack.c.l.b16 %v2014
    %v2185 = vunpack.c.h.b16 %v2014
    %v2186 = vunpack.c.l.b16 %v2015
    %v2187 = vunpack.c.h.b16 %v2015
    %v2188 = vunpack.c.l.b16 %v2016
    %v2189 = vunpack.c.h.b16 %v2016
    %v2190 = vunpack.c.l.b16 %v2017
    %v2191 = vunpack.c.h.b16 %v2017
    %v2192 = vunpack.c.l.b16 %v2018
    %v2193 = vunpack.c.h.b16 %v2018
    %v2194 = vunpack.c.l.b16 %v2019
    %v2195 = vunpack.c.h.b16 %v2019
    %v2196 = vunpack.c.l.b16 %v2020
    %v2197 = vunpack.c.h.b16 %v2020
    %v2198 = vunpack.c.l.b16 %v2021
    %v2199 = vunpack.c.h.b16 %v2021
    %v2200 = vunpack.c.l.b16 %v2022
    %v2201 = vunpack.c.h.b16 %v2022
    %v2202 = vunpack.c.l.b16 %v2023
    %v2203 = vunpack.c.h.b16 %v2023
    %v2204 = vunpack.c.l.b16 %v2024
    %v2205 = vunpack.c.h.b16 %v2024
    %v2206 = vunpack.c.l.b16 %v2025
    %v2207 = vunpack.c.h.b16 %v2025
    %v2208 = vunpack.c.l.b16 %v2026
    %v2209 = vunpack.c.h.b16 %v2026
    %v2210 = vunpack.c.l.b16 %v2027
    %v2211 = vunpack.c.h.b16 %v2027
    %v2212 = vunpack.c.l.b16 %v2028
    %v2213 = vunpack.c.h.b16 %v2028
    %v2214 = vunpack.c.l.b16 %v2029
    %v2215 = vunpack.c.h.b16 %v2029
    %v2216 = vunpack.c.l.b16 %v2030
    %v2217 = vunpack.c.h.b16 %v2030
    %v2218 = vunpack.c.l.b16 %v2031
    %v2219 = vunpack.c.h.b16 %v2031
    %v2220 = vunpack.c.l.b16 %v2032
    %v2221 = vunpack.c.h.b16 %v2032
    %v2222 = vunpack.c.l.b16 %v2033
    %v2223 = vunpack.c.h.b16 %v2033
    %v2224 = vunpack.c.l.b16 %v2034
    %v2225 = vunpack.c.h.b16 %v2034
    %v2226 = vunpack.c.l.b16 %v2035
    %v2227 = vunpack.c.h.b16 %v2035
    %v2228 = vunpack.c.l.b16 %v2036
    %v2229 = vunpack.c.h.b16 %v2036
    %v2230 = vunpack.c.l.b16 %v2037
    %v2231 = vunpack.c.h.b16 %v2037
    %v2232 = vunpack.c.l.b16 %v2038
    %v2233 = vunpack.c.h.b16 %v2038
    %v2234 = vunpack.c.l.b16 %v2039
    %v2235 = vunpack.c.h.b16 %v2039
    %v2236 = vunpack.c.l.b16 %v2040
    %v2237 = vunpack.c.h.b16 %v2040
    %v2238 = vunpack.c.l.b16 %v2041
    %v2239 = vunpack.c.h.b16 %v2041
    %v2240 = vpack.c.b16 %v2114, %v2112
    %v2241 = vpack.c.b16 %v2115, %v2113
    %v2242 = vpack.c.b16 %v2118, %v2116
    %v2243 = vpack.c.b16 %v2119, %v2117
    %v2244 = vpack.c.b16 %v2122, %v2120
    %v2245 = vpack.c.b16 %v2123, %v2121
    %v2246 = vpack.c.b16 %v2126, %v2124
    %v2247 = vpack.c.b16 %v2127, %v2125
    %v2248 = vpack.c.b16 %v2130, %v2128
    %v2249 = vpack.c.b16 %v2131, %v2129
    %v2250 = vpack.c.b16 %v2134, %v2132
    %v2251 = vpack.c.b16 %v2135, %v2133
    %v2252 = vpack.c.b16 %v2138, %v2136
    %v2253 = vpack.c.b16 %v2139, %v2137
    %v2254 = vpack.c.b16 %v2142, %v2140
    %v2255 = vpack.c.b16 %v2143, %v2141
    %v2256 = vpack.c.b16 %v2146, %v2144
    %v2257 = vpack.c.b16 %v2147, %v2145
    %v2258 = vpack.c.b16 %v2150, %v2148
    %v2259 = vpack.c.b16 %v2151, %v2149
    %v2260 = vpack.c.b16 %v2154, %v2152
    %v2261 = vpack.c.b16 %v2155, %v2153
    %v2262 = vpack.c.b16 %v2158, %v2156
    %v2263 = vpack.c.b16 %v2159, %v2157
    %v2264 = vpack.c.b16 %v2162, %v2160
    %v2265 = vpack.c.b16 %v2163, %v2161
    %v2266 = vpack.c.b16 %v2166, %v2164
    %v2267 = vpack.c.b16 %v2167, %v2165
    %v2268 = vpack.c.b16 %v2170, %v2168
    %v2269 = vpack.c.b16 %v2171, %v2169
    %v2270 = vpack.c.b16 %v2174, %v2172
    %v2271 = vpack.c.b16 %v2175, %v2173
    %v2272 = vpack.c.b16 %v2178, %v2176
    %v2273 = vpack.c.b16 %v2179, %v2177
    %v2274 = vpack.c.b16 %v2182, %v2180
    %v2275 = vpack.c.b16 %v2183, %v2181
    %v2276 = vpack.c.b16 %v2186, %v2184
    %v2277 = vpack.c.b16 %v2187, %v2185
    %v2278 = vpack.c.b16 %v2190, %v2188
    %v2279 = vpack.c.b16 %v2191, %v2189
    %v2280 = vpack.c.b16 %v2194, %v2192
    %v2281 = vpack.c.b16 %v2195, %v2193
    %v2282 = vpack.c.b16 %v2198, %v2196
    %v2283 = vpack.c.b16 %v2199, %v2197
    %v2284 = vpack.c.b16 %v2202, %v2200
    %v2285 = vpack.c.b16 %v2203, %v2201
    %v2286 = vpack.c.b16 %v2206, %v2204
    %v2287 = vpack.c.b16 %v2207, %v2205
    %v2288 = vpack.c.b16 %v2210, %v2208
    %v2289 = vpack.c.b16 %v2211, %v2209
    %v2290 = vpack.c.b16 %v2214, %v2212
    %v2291 = vpack.c.b16 %v2215, %v2213
    %v2292 = vpack.c.b16 %v2218, %v2216
    %v2293 = vpack.c.b16 %v2219, %v2217
    %v2294 = vpack.c.b16 %v2222, %v2220
    %v2295 = vpack.c.b16 %v2223, %v2221
    %v2296 = vpack.c.b16 %v2226, %v2224
    %v2297 = vpack.c.b16 %v2227, %v2225
    %v2298 = vpack.c.b16 %v2230, %v2228
    %v2299 = vpack.c.b16 %v2231, %v2229
    %v2300 = vpack.c.b16 %v2234, %v2232
    %v2301 = vpack.c.b16 %v2235, %v2233
    %v2302 = vpack.c.b16 %v2238, %v2236
    %v2303 = vpack.c.b16 %v2239, %v2237
    %2368 = vmatpush.bf16.msra.mxu0 %v2254
    %2369 = vmatpush.bf16.msra.mxu0 %v2252
    %2370 = vmatpush.bf16.msra.mxu0 %v2250
    %2371 = vmatpush.bf16.msra.mxu0 %v2248
    %2372 = vmatpush.bf16.msra.mxu0 %v2246
    %2373 = vmatpush.bf16.msra.mxu0 %v2244
    %2374 = vmatpush.bf16.msra.mxu0 %v2242
    %2375 = vmatpush.bf16.msra.mxu0 %v2240
    %2376 = vmatmul.bf16.gmra.mxu0 %v1974
    %v2377 = vpop.f32.mrf.mxu0
    %v2378 = vadd.f32 %v2044, %v2377
    %v2379 = vpop.f32.mrf.mxu0
    %2380 = vdwg.mxu0
    %2381 = vmatpush.bf16.msra.mxu0 %v2270
    %2382 = vmatpush.bf16.msra.mxu0 %v2268
    %2383 = vmatpush.bf16.msra.mxu0 %v2266
    %2384 = vmatpush.bf16.msra.mxu0 %v2264
    %2385 = vmatpush.bf16.msra.mxu0 %v2262
    %2386 = vmatpush.bf16.msra.mxu0 %v2260
    %2387 = vmatpush.bf16.msra.mxu0 %v2258
    %2388 = vmatpush.bf16.msra.mxu0 %v2256
    %2389 = vmatmul.bf16.gmra.mxu0 %v1975
    %v2390 = vpop.f32.mrf.mxu0
    %v2391 = vadd.f32 %v2378, %v2390
    %v2392 = vpop.f32.mrf.mxu0
    %2393 = vdwg.mxu0
    %2394 = vmatpush.bf16.msra.mxu0 %v2286
    %2395 = vmatpush.bf16.msra.mxu0 %v2284
    %2396 = vmatpush.bf16.msra.mxu0 %v2282
    %2397 = vmatpush.bf16.msra.mxu0 %v2280
    %2398 = vmatpush.bf16.msra.mxu0 %v2278
    %2399 = vmatpush.bf16.msra.mxu0 %v2276
    %2400 = vmatpush.bf16.msra.mxu0 %v2274
    %2401 = vmatpush.bf16.msra.mxu0 %v2272
    %2402 = vmatmul.bf16.gmra.mxu0 %v1976
    %v2403 = vpop.f32.mrf.mxu0
    %v2404 = vadd.f32 %v2391, %v2403
    %v2405 = vpop.f32.mrf.mxu0
    %2406 = vdwg.mxu0
    %2407 = vmatpush.bf16.msra.mxu0 %v2302
    %2408 = vmatpush.bf16.msra.mxu0 %v2300
    %2409 = vmatpush.bf16.msra.mxu0 %v2298
    %2410 = vmatpush.bf16.msra.mxu0 %v2296
    %2411 = vmatpush.bf16.msra.mxu0 %v2294
    %2412 = vmatpush.bf16.msra.mxu0 %v2292
    %2413 = vmatpush.bf16.msra.mxu0 %v2290
    %2414 = vmatpush.bf16.msra.mxu0 %v2288
    %2415 = vmatmul.bf16.gmra.mxu0 %v1977
    %v2416 = vpop.f32.mrf.mxu0
    %v2417 = vadd.f32 %v2404, %v2416
    %v2418 = vpop.f32.mrf.mxu0
    %2419 = vdwg.mxu0
    %2420 = vmatpush.bf16.msra.mxu0 %v2255
    %2421 = vmatpush.bf16.msra.mxu0 %v2253
    %2422 = vmatpush.bf16.msra.mxu0 %v2251
    %2423 = vmatpush.bf16.msra.mxu0 %v2249
    %2424 = vmatpush.bf16.msra.mxu0 %v2247
    %2425 = vmatpush.bf16.msra.mxu0 %v2245
    %2426 = vmatpush.bf16.msra.mxu0 %v2243
    %2427 = vmatpush.bf16.msra.mxu0 %v2241
    %2428 = vmatmul.bf16.gmra.mxu0 %v1974
    %v2429 = vpop.f32.mrf.mxu0
    %v2430 = vadd.f32 %v2045, %v2429
    %v2431 = vpop.f32.mrf.mxu0
    %2432 = vdwg.mxu0
    %2433 = vmatpush.bf16.msra.mxu0 %v2271
    %2434 = vmatpush.bf16.msra.mxu0 %v2269
    %2435 = vmatpush.bf16.msra.mxu0 %v2267
    %2436 = vmatpush.bf16.msra.mxu0 %v2265
    %2437 = vmatpush.bf16.msra.mxu0 %v2263
    %2438 = vmatpush.bf16.msra.mxu0 %v2261
    %2439 = vmatpush.bf16.msra.mxu0 %v2259
    %2440 = vmatpush.bf16.msra.mxu0 %v2257
    %2441 = vmatmul.bf16.gmra.mxu0 %v1975
    %v2442 = vpop.f32.mrf.mxu0
    %v2443 = vadd.f32 %v2430, %v2442
    %v2444 = vpop.f32.mrf.mxu0
    %2445 = vdwg.mxu0
    %2446 = vmatpush.bf16.msra.mxu0 %v2287
    %2447 = vmatpush.bf16.msra.mxu0 %v2285
    %2448 = vmatpush.bf16.msra.mxu0 %v2283
    %2449 = vmatpush.bf16.msra.mxu0 %v2281
    %2450 = vmatpush.bf16.msra.mxu0 %v2279
    %2451 = vmatpush.bf16.msra.mxu0 %v2277
    %2452 = vmatpush.bf16.msra.mxu0 %v2275
    %2453 = vmatpush.bf16.msra.mxu0 %v2273
    %2454 = vmatmul.bf16.gmra.mxu0 %v1976
    %v2455 = vpop.f32.mrf.mxu0
    %v2456 = vadd.f32 %v2443, %v2455
    %v2457 = vpop.f32.mrf.mxu0
    %2458 = vdwg.mxu0
    %2459 = vmatpush.bf16.msra.mxu0 %v2303
    %2460 = vmatpush.bf16.msra.mxu0 %v2301
    %2461 = vmatpush.bf16.msra.mxu0 %v2299
    %2462 = vmatpush.bf16.msra.mxu0 %v2297
    %2463 = vmatpush.bf16.msra.mxu0 %v2295
    %2464 = vmatpush.bf16.msra.mxu0 %v2293
    %2465 = vmatpush.bf16.msra.mxu0 %v2291
    %2466 = vmatpush.bf16.msra.mxu0 %v2289
    %2467 = vmatmul.bf16.gmra.mxu0 %v1977
    %v2468 = vpop.f32.mrf.mxu0
    %v2469 = vadd.f32 %v2456, %v2468
    %v2470 = vpop.f32.mrf.mxu0
    %2471 = vdwg.mxu0
    %v2472 = vmax.f32 %v2417, 0.0
    %v2473 = vmax.f32 %v2469, 0.0
    %v2474 = vpack.c.bf16 %v2472, %v2472
    %v2475 = vpack.c.bf16 %v2473, %v2473
    %v2476 = vld [vmem:[#allocation13] sm:$0xff]
    %v2477 = vld [vmem:[#allocation13 + $0x8] sm:$0xff]
    %v2478 = vld [vmem:[#allocation13 + $0x10] sm:$0xff]
    %v2479 = vld [vmem:[#allocation13 + $0x18] sm:$0xff]
    %v2480 = vld [vmem:[#allocation13 + $0x20] sm:$0xff]
    %v2481 = vld [vmem:[#allocation13 + $0x28] sm:$0xff]
    %v2482 = vld [vmem:[#allocation13 + $0x30] sm:$0xff]
    %v2483 = vld [vmem:[#allocation13 + $0x38] sm:$0xff]
    %v2484 = vld [vmem:[#allocation13 + $0x40] sm:$0xff]
    %v2485 = vld [vmem:[#allocation13 + $0x48] sm:$0xff]
    %v2486 = vld [vmem:[#allocation13 + $0x50] sm:$0xff]
    %v2487 = vld [vmem:[#allocation13 + $0x58] sm:$0xff]
    %v2488 = vld [vmem:[#allocation13 + $0x60] sm:$0xff]
    %v2489 = vld [vmem:[#allocation13 + $0x68] sm:$0xff]
    %v2490 = vld [vmem:[#allocation13 + $0x70] sm:$0xff]
    %v2491 = vld [vmem:[#allocation13 + $0x78] sm:$0xff]
    %v2492 = vld [vmem:[#allocation13 + $0x80] sm:$0xff]
    %v2493 = vld [vmem:[#allocation13 + $0x88] sm:$0xff]
    %v2494 = vld [vmem:[#allocation13 + $0x90] sm:$0xff]
    %v2495 = vld [vmem:[#allocation13 + $0x98] sm:$0xff]
    %v2496 = vld [vmem:[#allocation13 + $0xa0] sm:$0xff]
    %v2497 = vld [vmem:[#allocation13 + $0xa8] sm:$0xff]
    %v2498 = vld [vmem:[#allocation13 + $0xb0] sm:$0xff]
    %v2499 = vld [vmem:[#allocation13 + $0xb8] sm:$0xff]
    %v2500 = vld [vmem:[#allocation13 + $0xc0] sm:$0xff]
    %v2501 = vld [vmem:[#allocation13 + $0xc8] sm:$0xff]
    %v2502 = vld [vmem:[#allocation13 + $0xd0] sm:$0xff]
    %v2503 = vld [vmem:[#allocation13 + $0xd8] sm:$0xff]
    %v2504 = vld [vmem:[#allocation13 + $0xe0] sm:$0xff]
    %v2505 = vld [vmem:[#allocation13 + $0xe8] sm:$0xff]
    %v2506 = vld [vmem:[#allocation13 + $0xf0] sm:$0xff]
    %v2507 = vld [vmem:[#allocation13 + $0xf8] sm:$0xff]
    %v2508 = vld [vmem:[#allocation14] sm:$0x3]
    %v2510 = vperm.slane %v2508, 0
    %v2511 = vperm.slane %v2508, 1
    %v2546 = vunpack.c.l.b16 %v2476
    %v2547 = vunpack.c.h.b16 %v2476
    %v2548 = vunpack.c.l.b16 %v2477
    %v2549 = vunpack.c.h.b16 %v2477
    %v2550 = vunpack.c.l.b16 %v2478
    %v2551 = vunpack.c.h.b16 %v2478
    %v2552 = vunpack.c.l.b16 %v2479
    %v2553 = vunpack.c.h.b16 %v2479
    %v2554 = vunpack.c.l.b16 %v2480
    %v2555 = vunpack.c.h.b16 %v2480
    %v2556 = vunpack.c.l.b16 %v2481
    %v2557 = vunpack.c.h.b16 %v2481
    %v2558 = vunpack.c.l.b16 %v2482
    %v2559 = vunpack.c.h.b16 %v2482
    %v2560 = vunpack.c.l.b16 %v2483
    %v2561 = vunpack.c.h.b16 %v2483
    %v2562 = vunpack.c.l.b16 %v2484
    %v2563 = vunpack.c.h.b16 %v2484
    %v2564 = vunpack.c.l.b16 %v2485
    %v2565 = vunpack.c.h.b16 %v2485
    %v2566 = vunpack.c.l.b16 %v2486
    %v2567 = vunpack.c.h.b16 %v2486
    %v2568 = vunpack.c.l.b16 %v2487
    %v2569 = vunpack.c.h.b16 %v2487
    %v2570 = vunpack.c.l.b16 %v2488
    %v2571 = vunpack.c.h.b16 %v2488
    %v2572 = vunpack.c.l.b16 %v2489
    %v2573 = vunpack.c.h.b16 %v2489
    %v2574 = vunpack.c.l.b16 %v2490
    %v2575 = vunpack.c.h.b16 %v2490
    %v2576 = vunpack.c.l.b16 %v2491
    %v2577 = vunpack.c.h.b16 %v2491
    %v2578 = vunpack.c.l.b16 %v2492
    %v2579 = vunpack.c.h.b16 %v2492
    %v2580 = vunpack.c.l.b16 %v2493
    %v2581 = vunpack.c.h.b16 %v2493
    %v2582 = vunpack.c.l.b16 %v2494
    %v2583 = vunpack.c.h.b16 %v2494
    %v2584 = vunpack.c.l.b16 %v2495
    %v2585 = vunpack.c.h.b16 %v2495
    %v2586 = vunpack.c.l.b16 %v2496
    %v2587 = vunpack.c.h.b16 %v2496
    %v2588 = vunpack.c.l.b16 %v2497
    %v2589 = vunpack.c.h.b16 %v2497
    %v2590 = vunpack.c.l.b16 %v2498
    %v2591 = vunpack.c.h.b16 %v2498
    %v2592 = vunpack.c.l.b16 %v2499
    %v2593 = vunpack.c.h.b16 %v2499
    %v2594 = vunpack.c.l.b16 %v2500
    %v2595 = vunpack.c.h.b16 %v2500
    %v2596 = vunpack.c.l.b16 %v2501
    %v2597 = vunpack.c.h.b16 %v2501
    %v2598 = vunpack.c.l.b16 %v2502
    %v2599 = vunpack.c.h.b16 %v2502
    %v2600 = vunpack.c.l.b16 %v2503
    %v2601 = vunpack.c.h.b16 %v2503
    %v2602 = vunpack.c.l.b16 %v2504
    %v2603 = vunpack.c.h.b16 %v2504
    %v2604 = vunpack.c.l.b16 %v2505
    %v2605 = vunpack.c.h.b16 %v2505
    %v2606 = vunpack.c.l.b16 %v2506
    %v2607 = vunpack.c.h.b16 %v2506
    %v2608 = vunpack.c.l.b16 %v2507
    %v2609 = vunpack.c.h.b16 %v2507
    %v2610 = vpack.c.b16 %v2548, %v2546
    %v2611 = vpack.c.b16 %v2549, %v2547
    %v2612 = vpack.c.b16 %v2552, %v2550
    %v2613 = vpack.c.b16 %v2553, %v2551
    %v2614 = vpack.c.b16 %v2556, %v2554
    %v2615 = vpack.c.b16 %v2557, %v2555
    %v2616 = vpack.c.b16 %v2560, %v2558
    %v2617 = vpack.c.b16 %v2561, %v2559
    %v2618 = vpack.c.b16 %v2564, %v2562
    %v2619 = vpack.c.b16 %v2565, %v2563
    %v2620 = vpack.c.b16 %v2568, %v2566
    %v2621 = vpack.c.b16 %v2569, %v2567
    %v2622 = vpack.c.b16 %v2572, %v2570
    %v2623 = vpack.c.b16 %v2573, %v2571
    %v2624 = vpack.c.b16 %v2576, %v2574
    %v2625 = vpack.c.b16 %v2577, %v2575
    %v2626 = vpack.c.b16 %v2580, %v2578
    %v2627 = vpack.c.b16 %v2581, %v2579
    %v2628 = vpack.c.b16 %v2584, %v2582
    %v2629 = vpack.c.b16 %v2585, %v2583
    %v2630 = vpack.c.b16 %v2588, %v2586
    %v2631 = vpack.c.b16 %v2589, %v2587
    %v2632 = vpack.c.b16 %v2592, %v2590
    %v2633 = vpack.c.b16 %v2593, %v2591
    %v2634 = vpack.c.b16 %v2596, %v2594
    %v2635 = vpack.c.b16 %v2597, %v2595
    %v2636 = vpack.c.b16 %v2600, %v2598
    %v2637 = vpack.c.b16 %v2601, %v2599
    %v2638 = vpack.c.b16 %v2604, %v2602
    %v2639 = vpack.c.b16 %v2605, %v2603
    %v2640 = vpack.c.b16 %v2608, %v2606
    %v2641 = vpack.c.b16 %v2609, %v2607
    %2674 = vmatpush.bf16.msra.mxu0 %v2624
    %2675 = vmatpush.bf16.msra.mxu0 %v2622
    %2676 = vmatpush.bf16.msra.mxu0 %v2620
    %2677 = vmatpush.bf16.msra.mxu0 %v2618
    %2678 = vmatpush.bf16.msra.mxu0 %v2616
    %2679 = vmatpush.bf16.msra.mxu0 %v2614
    %2680 = vmatpush.bf16.msra.mxu0 %v2612
    %2681 = vmatpush.bf16.msra.mxu0 %v2610
    %2682 = vmatmul.bf16.gmra.mxu0 %v2474
    %v2683 = vpop.f32.mrf.mxu0
    %v2684 = vadd.f32 %v2510, %v2683
    %v2685 = vpop.f32.mrf.mxu0
    %2686 = vdwg.mxu0
    %2687 = vmatpush.bf16.msra.mxu0 %v2640
    %2688 = vmatpush.bf16.msra.mxu0 %v2638
    %2689 = vmatpush.bf16.msra.mxu0 %v2636
    %2690 = vmatpush.bf16.msra.mxu0 %v2634
    %2691 = vmatpush.bf16.msra.mxu0 %v2632
    %2692 = vmatpush.bf16.msra.mxu0 %v2630
    %2693 = vmatpush.bf16.msra.mxu0 %v2628
    %2694 = vmatpush.bf16.msra.mxu0 %v2626
    %2695 = vmatmul.bf16.gmra.mxu0 %v2475
    %v2696 = vpop.f32.mrf.mxu0
    %v2697 = vadd.f32 %v2684, %v2696
    %v2698 = vpop.f32.mrf.mxu0
    %2699 = vdwg.mxu0
    %2700 = vmatpush.bf16.msra.mxu0 %v2625
    %2701 = vmatpush.bf16.msra.mxu0 %v2623
    %2702 = vmatpush.bf16.msra.mxu0 %v2621
    %2703 = vmatpush.bf16.msra.mxu0 %v2619
    %2704 = vmatpush.bf16.msra.mxu0 %v2617
    %2705 = vmatpush.bf16.msra.mxu0 %v2615
    %2706 = vmatpush.bf16.msra.mxu0 %v2613
    %2707 = vmatpush.bf16.msra.mxu0 %v2611
    %2708 = vmatmul.bf16.gmra.mxu0 %v2474
    %v2709 = vpop.f32.mrf.mxu0
    %v2710 = vadd.f32 %v2511, %v2709
    %v2711 = vpop.f32.mrf.mxu0
    %2712 = vdwg.mxu0
    %2713 = vmatpush.bf16.msra.mxu0 %v2641
    %2714 = vmatpush.bf16.msra.mxu0 %v2639
    %2715 = vmatpush.bf16.msra.mxu0 %v2637
    %2716 = vmatpush.bf16.msra.mxu0 %v2635
    %2717 = vmatpush.bf16.msra.mxu0 %v2633
    %2718 = vmatpush.bf16.msra.mxu0 %v2631
    %2719 = vmatpush.bf16.msra.mxu0 %v2629
    %2720 = vmatpush.bf16.msra.mxu0 %v2627
    %2721 = vmatmul.bf16.gmra.mxu0 %v2475
    %v2722 = vpop.f32.mrf.mxu0
    %v2723 = vadd.f32 %v2710, %v2722
    %v2724 = vpop.f32.mrf.mxu0
    %2725 = vdwg.mxu0
    %v2726 = vmul.f32 %v2723, 1.442695
    %v2727 = vpow.pop %v2726
    %v2728 = vld [vmem:[#allocation5] sm:$0xff]
    %v2729 = vmul.f32 %v2727, %v2728
    %v2730 = vadd.f32 %v2697, %v2729
    %v2731 = vpack.c.bf16 %v2730, %v2730
    %v2732 = vld [vmem:[#allocation16] sm:$0xff]
    %v2733 = vld [vmem:[#allocation16 + $0x8] sm:$0xff]
    %v2734 = vld [vmem:[#allocation16 + $0x10] sm:$0xff]
    %v2735 = vld [vmem:[#allocation16 + $0x18] sm:$0xff]
    %v2736 = vld [vmem:[#allocation16 + $0x20] sm:$0xff]
    %v2737 = vld [vmem:[#allocation16 + $0x28] sm:$0xff]
    %v2738 = vld [vmem:[#allocation16 + $0x30] sm:$0xff]
    %v2739 = vld [vmem:[#allocation16 + $0x38] sm:$0xff]
    %v2740 = vld [vmem:[#allocation16 + $0x40] sm:$0xff]
    %v2741 = vld [vmem:[#allocation16 + $0x48] sm:$0xff]
    %v2742 = vld [vmem:[#allocation16 + $0x50] sm:$0xff]
    %v2743 = vld [vmem:[#allocation16 + $0x58] sm:$0xff]
    %v2744 = vld [vmem:[#allocation16 + $0x60] sm:$0xff]
    %v2745 = vld [vmem:[#allocation16 + $0x68] sm:$0xff]
    %v2746 = vld [vmem:[#allocation16 + $0x70] sm:$0xff]
    %v2747 = vld [vmem:[#allocation16 + $0x78] sm:$0xff]
    %v2748 = vld [vmem:[#allocation17] sm:$0x3]
    %v2750 = vperm.slane %v2748, 0
    %v2751 = vperm.slane %v2748, 1
    %v2770 = vunpack.c.l.b16 %v2732
    %v2771 = vunpack.c.h.b16 %v2732
    %v2772 = vunpack.c.l.b16 %v2733
    %v2773 = vunpack.c.h.b16 %v2733
    %v2774 = vunpack.c.l.b16 %v2734
    %v2775 = vunpack.c.h.b16 %v2734
    %v2776 = vunpack.c.l.b16 %v2735
    %v2777 = vunpack.c.h.b16 %v2735
    %v2778 = vunpack.c.l.b16 %v2736
    %v2779 = vunpack.c.h.b16 %v2736
    %v2780 = vunpack.c.l.b16 %v2737
    %v2781 = vunpack.c.h.b16 %v2737
    %v2782 = vunpack.c.l.b16 %v2738
    %v2783 = vunpack.c.h.b16 %v2738
    %v2784 = vunpack.c.l.b16 %v2739
    %v2785 = vunpack.c.h.b16 %v2739
    %v2786 = vunpack.c.l.b16 %v2740
    %v2787 = vunpack.c.h.b16 %v2740
    %v2788 = vunpack.c.l.b16 %v2741
    %v2789 = vunpack.c.h.b16 %v2741
    %v2790 = vunpack.c.l.b16 %v2742
    %v2791 = vunpack.c.h.b16 %v2742
    %v2792 = vunpack.c.l.b16 %v2743
    %v2793 = vunpack.c.h.b16 %v2743
    %v2794 = vunpack.c.l.b16 %v2744
    %v2795 = vunpack.c.h.b16 %v2744
    %v2796 = vunpack.c.l.b16 %v2745
    %v2797 = vunpack.c.h.b16 %v2745
    %v2798 = vunpack.c.l.b16 %v2746
    %v2799 = vunpack.c.h.b16 %v2746
    %v2800 = vunpack.c.l.b16 %v2747
    %v2801 = vunpack.c.h.b16 %v2747
    %v2802 = vpack.c.b16 %v2772, %v2770
    %v2803 = vpack.c.b16 %v2773, %v2771
    %v2804 = vpack.c.b16 %v2776, %v2774
    %v2805 = vpack.c.b16 %v2777, %v2775
    %v2806 = vpack.c.b16 %v2780, %v2778
    %v2807 = vpack.c.b16 %v2781, %v2779
    %v2808 = vpack.c.b16 %v2784, %v2782
    %v2809 = vpack.c.b16 %v2785, %v2783
    %v2810 = vpack.c.b16 %v2788, %v2786
    %v2811 = vpack.c.b16 %v2789, %v2787
    %v2812 = vpack.c.b16 %v2792, %v2790
    %v2813 = vpack.c.b16 %v2793, %v2791
    %v2814 = vpack.c.b16 %v2796, %v2794
    %v2815 = vpack.c.b16 %v2797, %v2795
    %v2816 = vpack.c.b16 %v2800, %v2798
    %v2817 = vpack.c.b16 %v2801, %v2799
    %2834 = vmatpush.bf16.msra.mxu0 %v2816
    %2835 = vmatpush.bf16.msra.mxu0 %v2814
    %2836 = vmatpush.bf16.msra.mxu0 %v2812
    %2837 = vmatpush.bf16.msra.mxu0 %v2810
    %2838 = vmatpush.bf16.msra.mxu0 %v2808
    %2839 = vmatpush.bf16.msra.mxu0 %v2806
    %2840 = vmatpush.bf16.msra.mxu0 %v2804
    %2841 = vmatpush.bf16.msra.mxu0 %v2802
    %2842 = vmatmul.bf16.gmra.mxu0 %v2731
    %v2843 = vpop.f32.mrf.mxu0
    %v2844 = vadd.f32 %v2750, %v2843
    %v2845 = vpop.f32.mrf.mxu0
    %2846 = vdwg.mxu0
    %2847 = vmatpush.bf16.msra.mxu0 %v2817
    %2848 = vmatpush.bf16.msra.mxu0 %v2815
    %2849 = vmatpush.bf16.msra.mxu0 %v2813
    %2850 = vmatpush.bf16.msra.mxu0 %v2811
    %2851 = vmatpush.bf16.msra.mxu0 %v2809
    %2852 = vmatpush.bf16.msra.mxu0 %v2807
    %2853 = vmatpush.bf16.msra.mxu0 %v2805
    %2854 = vmatpush.bf16.msra.mxu0 %v2803
    %2855 = vmatmul.bf16.gmra.mxu0 %v2731
    %v2856 = vpop.f32.mrf.mxu0
    %v2857 = vadd.f32 %v2751, %v2856
    %v2858 = vpop.f32.mrf.mxu0
    %2859 = vdwg.mxu0
    %v2860 = vmax.f32 %v2844, 0.0
    %v2861 = vmax.f32 %v2857, 0.0
    %v2862 = vpack.c.bf16 %v2860, %v2860
    %v2863 = vpack.c.bf16 %v2861, %v2861
    %v2864 = vld [vmem:[#allocation19] sm:$0xff]
    %v2865 = vld [vmem:[#allocation19 + $0x8] sm:$0xff]
    %v2866 = vld [vmem:[#allocation19 + $0x10] sm:$0xff]
    %v2867 = vld [vmem:[#allocation19 + $0x18] sm:$0xff]
    %v2868 = vld [vmem:[#allocation19 + $0x20] sm:$0xff]
    %v2869 = vld [vmem:[#allocation19 + $0x28] sm:$0xff]
    %v2870 = vld [vmem:[#allocation19 + $0x30] sm:$0xff]
    %v2871 = vld [vmem:[#allocation19 + $0x38] sm:$0xff]
    %v2872 = vld [vmem:[#allocation19 + $0x40] sm:$0xff]
    %v2873 = vld [vmem:[#allocation19 + $0x48] sm:$0xff]
    %v2874 = vld [vmem:[#allocation19 + $0x50] sm:$0xff]
    %v2875 = vld [vmem:[#allocation19 + $0x58] sm:$0xff]
    %v2876 = vld [vmem:[#allocation19 + $0x60] sm:$0xff]
    %v2877 = vld [vmem:[#allocation19 + $0x68] sm:$0xff]
    %v2878 = vld [vmem:[#allocation19 + $0x70] sm:$0xff]
    %v2879 = vld [vmem:[#allocation19 + $0x78] sm:$0xff]
    %v2880 = vld [vmem:[#allocation19 + $0x80] sm:$0xff]
    %v2881 = vld [vmem:[#allocation19 + $0x88] sm:$0xff]
    %v2882 = vld [vmem:[#allocation19 + $0x90] sm:$0xff]
    %v2883 = vld [vmem:[#allocation19 + $0x98] sm:$0xff]
    %v2884 = vld [vmem:[#allocation19 + $0xa0] sm:$0xff]
    %v2885 = vld [vmem:[#allocation19 + $0xa8] sm:$0xff]
    %v2886 = vld [vmem:[#allocation19 + $0xb0] sm:$0xff]
    %v2887 = vld [vmem:[#allocation19 + $0xb8] sm:$0xff]
    %v2888 = vld [vmem:[#allocation19 + $0xc0] sm:$0xff]
    %v2889 = vld [vmem:[#allocation19 + $0xc8] sm:$0xff]
    %v2890 = vld [vmem:[#allocation19 + $0xd0] sm:$0xff]
    %v2891 = vld [vmem:[#allocation19 + $0xd8] sm:$0xff]
    %v2892 = vld [vmem:[#allocation19 + $0xe0] sm:$0xff]
    %v2893 = vld [vmem:[#allocation19 + $0xe8] sm:$0xff]
    %v2894 = vld [vmem:[#allocation19 + $0xf0] sm:$0xff]
    %v2895 = vld [vmem:[#allocation19 + $0xf8] sm:$0xff]
    %v2896 = vld [vmem:[#allocation19 + $0x100] sm:$0xff]
    %v2897 = vld [vmem:[#allocation19 + $0x108] sm:$0xff]
    %v2898 = vld [vmem:[#allocation19 + $0x110] sm:$0xff]
    %v2899 = vld [vmem:[#allocation19 + $0x118] sm:$0xff]
    %v2900 = vld [vmem:[#allocation19 + $0x120] sm:$0xff]
    %v2901 = vld [vmem:[#allocation19 + $0x128] sm:$0xff]
    %v2902 = vld [vmem:[#allocation19 + $0x130] sm:$0xff]
    %v2903 = vld [vmem:[#allocation19 + $0x138] sm:$0xff]
    %v2904 = vld [vmem:[#allocation19 + $0x140] sm:$0xff]
    %v2905 = vld [vmem:[#allocation19 + $0x148] sm:$0xff]
    %v2906 = vld [vmem:[#allocation19 + $0x150] sm:$0xff]
    %v2907 = vld [vmem:[#allocation19 + $0x158] sm:$0xff]
    %v2908 = vld [vmem:[#allocation19 + $0x160] sm:$0xff]
    %v2909 = vld [vmem:[#allocation19 + $0x168] sm:$0xff]
    %v2910 = vld [vmem:[#allocation19 + $0x170] sm:$0xff]
    %v2911 = vld [vmem:[#allocation19 + $0x178] sm:$0xff]
    %v2912 = vld [vmem:[#allocation19 + $0x180] sm:$0xff]
    %v2913 = vld [vmem:[#allocation19 + $0x188] sm:$0xff]
    %v2914 = vld [vmem:[#allocation19 + $0x190] sm:$0xff]
    %v2915 = vld [vmem:[#allocation19 + $0x198] sm:$0xff]
    %v2916 = vld [vmem:[#allocation19 + $0x1a0] sm:$0xff]
    %v2917 = vld [vmem:[#allocation19 + $0x1a8] sm:$0xff]
    %v2918 = vld [vmem:[#allocation19 + $0x1b0] sm:$0xff]
    %v2919 = vld [vmem:[#allocation19 + $0x1b8] sm:$0xff]
    %v2920 = vld [vmem:[#allocation19 + $0x1c0] sm:$0xff]
    %v2921 = vld [vmem:[#allocation19 + $0x1c8] sm:$0xff]
    %v2922 = vld [vmem:[#allocation19 + $0x1d0] sm:$0xff]
    %v2923 = vld [vmem:[#allocation19 + $0x1d8] sm:$0xff]
    %v2924 = vld [vmem:[#allocation19 + $0x1e0] sm:$0xff]
    %v2925 = vld [vmem:[#allocation19 + $0x1e8] sm:$0xff]
    %v2926 = vld [vmem:[#allocation19 + $0x1f0] sm:$0xff]
    %v2927 = vld [vmem:[#allocation19 + $0x1f8] sm:$0xff]
    %v2928 = vld [vmem:[%s11] sm:$0xf]
    %v2930 = vperm.slane %v2928, 0
    %v2931 = vperm.slane %v2928, 1
    %v2932 = vperm.slane %v2928, 2
    %v2933 = vperm.slane %v2928, 3
    %v3002 = vunpack.c.l.b16 %v2864
    %v3003 = vunpack.c.h.b16 %v2864
    %v3004 = vunpack.c.l.b16 %v2865
    %v3005 = vunpack.c.h.b16 %v2865
    %v3006 = vunpack.c.l.b16 %v2866
    %v3007 = vunpack.c.h.b16 %v2866
    %v3008 = vunpack.c.l.b16 %v2867
    %v3009 = vunpack.c.h.b16 %v2867
    %v3010 = vunpack.c.l.b16 %v2868
    %v3011 = vunpack.c.h.b16 %v2868
    %v3012 = vunpack.c.l.b16 %v2869
    %v3013 = vunpack.c.h.b16 %v2869
    %v3014 = vunpack.c.l.b16 %v2870
    %v3015 = vunpack.c.h.b16 %v2870
    %v3016 = vunpack.c.l.b16 %v2871
    %v3017 = vunpack.c.h.b16 %v2871
    %v3018 = vunpack.c.l.b16 %v2872
    %v3019 = vunpack.c.h.b16 %v2872
    %v3020 = vunpack.c.l.b16 %v2873
    %v3021 = vunpack.c.h.b16 %v2873
    %v3022 = vunpack.c.l.b16 %v2874
    %v3023 = vunpack.c.h.b16 %v2874
    %v3024 = vunpack.c.l.b16 %v2875
    %v3025 = vunpack.c.h.b16 %v2875
    %v3026 = vunpack.c.l.b16 %v2876
    %v3027 = vunpack.c.h.b16 %v2876
    %v3028 = vunpack.c.l.b16 %v2877
    %v3029 = vunpack.c.h.b16 %v2877
    %v3030 = vunpack.c.l.b16 %v2878
    %v3031 = vunpack.c.h.b16 %v2878
    %v3032 = vunpack.c.l.b16 %v2879
    %v3033 = vunpack.c.h.b16 %v2879
    %v3034 = vunpack.c.l.b16 %v2880
    %v3035 = vunpack.c.h.b16 %v2880
    %v3036 = vunpack.c.l.b16 %v2881
    %v3037 = vunpack.c.h.b16 %v2881
    %v3038 = vunpack.c.l.b16 %v2882
    %v3039 = vunpack.c.h.b16 %v2882
    %v3040 = vunpack.c.l.b16 %v2883
    %v3041 = vunpack.c.h.b16 %v2883
    %v3042 = vunpack.c.l.b16 %v2884
    %v3043 = vunpack.c.h.b16 %v2884
    %v3044 = vunpack.c.l.b16 %v2885
    %v3045 = vunpack.c.h.b16 %v2885
    %v3046 = vunpack.c.l.b16 %v2886
    %v3047 = vunpack.c.h.b16 %v2886
    %v3048 = vunpack.c.l.b16 %v2887
    %v3049 = vunpack.c.h.b16 %v2887
    %v3050 = vunpack.c.l.b16 %v2888
    %v3051 = vunpack.c.h.b16 %v2888
    %v3052 = vunpack.c.l.b16 %v2889
    %v3053 = vunpack.c.h.b16 %v2889
    %v3054 = vunpack.c.l.b16 %v2890
    %v3055 = vunpack.c.h.b16 %v2890
    %v3056 = vunpack.c.l.b16 %v2891
    %v3057 = vunpack.c.h.b16 %v2891
    %v3058 = vunpack.c.l.b16 %v2892
    %v3059 = vunpack.c.h.b16 %v2892
    %v3060 = vunpack.c.l.b16 %v2893
    %v3061 = vunpack.c.h.b16 %v2893
    %v3062 = vunpack.c.l.b16 %v2894
    %v3063 = vunpack.c.h.b16 %v2894
    %v3064 = vunpack.c.l.b16 %v2895
    %v3065 = vunpack.c.h.b16 %v2895
    %v3066 = vunpack.c.l.b16 %v2896
    %v3067 = vunpack.c.h.b16 %v2896
    %v3068 = vunpack.c.l.b16 %v2897
    %v3069 = vunpack.c.h.b16 %v2897
    %v3070 = vunpack.c.l.b16 %v2898
    %v3071 = vunpack.c.h.b16 %v2898
    %v3072 = vunpack.c.l.b16 %v2899
    %v3073 = vunpack.c.h.b16 %v2899
    %v3074 = vunpack.c.l.b16 %v2900
    %v3075 = vunpack.c.h.b16 %v2900
    %v3076 = vunpack.c.l.b16 %v2901
    %v3077 = vunpack.c.h.b16 %v2901
    %v3078 = vunpack.c.l.b16 %v2902
    %v3079 = vunpack.c.h.b16 %v2902
    %v3080 = vunpack.c.l.b16 %v2903
    %v3081 = vunpack.c.h.b16 %v2903
    %v3082 = vunpack.c.l.b16 %v2904
    %v3083 = vunpack.c.h.b16 %v2904
    %v3084 = vunpack.c.l.b16 %v2905
    %v3085 = vunpack.c.h.b16 %v2905
    %v3086 = vunpack.c.l.b16 %v2906
    %v3087 = vunpack.c.h.b16 %v2906
    %v3088 = vunpack.c.l.b16 %v2907
    %v3089 = vunpack.c.h.b16 %v2907
    %v3090 = vunpack.c.l.b16 %v2908
    %v3091 = vunpack.c.h.b16 %v2908
    %v3092 = vunpack.c.l.b16 %v2909
    %v3093 = vunpack.c.h.b16 %v2909
    %v3094 = vunpack.c.l.b16 %v2910
    %v3095 = vunpack.c.h.b16 %v2910
    %v3096 = vunpack.c.l.b16 %v2911
    %v3097 = vunpack.c.h.b16 %v2911
    %v3098 = vunpack.c.l.b16 %v2912
    %v3099 = vunpack.c.h.b16 %v2912
    %v3100 = vunpack.c.l.b16 %v2913
    %v3101 = vunpack.c.h.b16 %v2913
    %v3102 = vunpack.c.l.b16 %v2914
    %v3103 = vunpack.c.h.b16 %v2914
    %v3104 = vunpack.c.l.b16 %v2915
    %v3105 = vunpack.c.h.b16 %v2915
    %v3106 = vunpack.c.l.b16 %v2916
    %v3107 = vunpack.c.h.b16 %v2916
    %v3108 = vunpack.c.l.b16 %v2917
    %v3109 = vunpack.c.h.b16 %v2917
    %v3110 = vunpack.c.l.b16 %v2918
    %v3111 = vunpack.c.h.b16 %v2918
    %v3112 = vunpack.c.l.b16 %v2919
    %v3113 = vunpack.c.h.b16 %v2919
    %v3114 = vunpack.c.l.b16 %v2920
    %v3115 = vunpack.c.h.b16 %v2920
    %v3116 = vunpack.c.l.b16 %v2921
    %v3117 = vunpack.c.h.b16 %v2921
    %v3118 = vunpack.c.l.b16 %v2922
    %v3119 = vunpack.c.h.b16 %v2922
    %v3120 = vunpack.c.l.b16 %v2923
    %v3121 = vunpack.c.h.b16 %v2923
    %v3122 = vunpack.c.l.b16 %v2924
    %v3123 = vunpack.c.h.b16 %v2924
    %v3124 = vunpack.c.l.b16 %v2925
    %v3125 = vunpack.c.h.b16 %v2925
    %v3126 = vunpack.c.l.b16 %v2926
    %v3127 = vunpack.c.h.b16 %v2926
    %v3128 = vunpack.c.l.b16 %v2927
    %v3129 = vunpack.c.h.b16 %v2927
    %v3130 = vpack.c.b16 %v3006, %v3002
    %v3131 = vpack.c.b16 %v3007, %v3003
    %v3132 = vpack.c.b16 %v3008, %v3004
    %v3133 = vpack.c.b16 %v3009, %v3005
    %v3134 = vpack.c.b16 %v3014, %v3010
    %v3135 = vpack.c.b16 %v3015, %v3011
    %v3136 = vpack.c.b16 %v3016, %v3012
    %v3137 = vpack.c.b16 %v3017, %v3013
    %v3138 = vpack.c.b16 %v3022, %v3018
    %v3139 = vpack.c.b16 %v3023, %v3019
    %v3140 = vpack.c.b16 %v3024, %v3020
    %v3141 = vpack.c.b16 %v3025, %v3021
    %v3142 = vpack.c.b16 %v3030, %v3026
    %v3143 = vpack.c.b16 %v3031, %v3027
    %v3144 = vpack.c.b16 %v3032, %v3028
    %v3145 = vpack.c.b16 %v3033, %v3029
    %v3146 = vpack.c.b16 %v3038, %v3034
    %v3147 = vpack.c.b16 %v3039, %v3035
    %v3148 = vpack.c.b16 %v3040, %v3036
    %v3149 = vpack.c.b16 %v3041, %v3037
    %v3150 = vpack.c.b16 %v3046, %v3042
    %v3151 = vpack.c.b16 %v3047, %v3043
    %v3152 = vpack.c.b16 %v3048, %v3044
    %v3153 = vpack.c.b16 %v3049, %v3045
    %v3154 = vpack.c.b16 %v3054, %v3050
    %v3155 = vpack.c.b16 %v3055, %v3051
    %v3156 = vpack.c.b16 %v3056, %v3052
    %v3157 = vpack.c.b16 %v3057, %v3053
    %v3158 = vpack.c.b16 %v3062, %v3058
    %v3159 = vpack.c.b16 %v3063, %v3059
    %v3160 = vpack.c.b16 %v3064, %v3060
    %v3161 = vpack.c.b16 %v3065, %v3061
    %v3162 = vpack.c.b16 %v3070, %v3066
    %v3163 = vpack.c.b16 %v3071, %v3067
    %v3164 = vpack.c.b16 %v3072, %v3068
    %v3165 = vpack.c.b16 %v3073, %v3069
    %v3166 = vpack.c.b16 %v3078, %v3074
    %v3167 = vpack.c.b16 %v3079, %v3075
    %v3168 = vpack.c.b16 %v3080, %v3076
    %v3169 = vpack.c.b16 %v3081, %v3077
    %v3170 = vpack.c.b16 %v3086, %v3082
    %v3171 = vpack.c.b16 %v3087, %v3083
    %v3172 = vpack.c.b16 %v3088, %v3084
    %v3173 = vpack.c.b16 %v3089, %v3085
    %v3174 = vpack.c.b16 %v3094, %v3090
    %v3175 = vpack.c.b16 %v3095, %v3091
    %v3176 = vpack.c.b16 %v3096, %v3092
    %v3177 = vpack.c.b16 %v3097, %v3093
    %v3178 = vpack.c.b16 %v3102, %v3098
    %v3179 = vpack.c.b16 %v3103, %v3099
    %v3180 = vpack.c.b16 %v3104, %v3100
    %v3181 = vpack.c.b16 %v3105, %v3101
    %v3182 = vpack.c.b16 %v3110, %v3106
    %v3183 = vpack.c.b16 %v3111, %v3107
    %v3184 = vpack.c.b16 %v3112, %v3108
    %v3185 = vpack.c.b16 %v3113, %v3109
    %v3186 = vpack.c.b16 %v3118, %v3114
    %v3187 = vpack.c.b16 %v3119, %v3115
    %v3188 = vpack.c.b16 %v3120, %v3116
    %v3189 = vpack.c.b16 %v3121, %v3117
    %v3190 = vpack.c.b16 %v3126, %v3122
    %v3191 = vpack.c.b16 %v3127, %v3123
    %v3192 = vpack.c.b16 %v3128, %v3124
    %v3193 = vpack.c.b16 %v3129, %v3125
    %3258 = vmatpush.bf16.msra.mxu0 %v3158
    %3259 = vmatpush.bf16.msra.mxu0 %v3154
    %3260 = vmatpush.bf16.msra.mxu0 %v3150
    %3261 = vmatpush.bf16.msra.mxu0 %v3146
    %3262 = vmatpush.bf16.msra.mxu0 %v3142
    %3263 = vmatpush.bf16.msra.mxu0 %v3138
    %3264 = vmatpush.bf16.msra.mxu0 %v3134
    %3265 = vmatpush.bf16.msra.mxu0 %v3130
    %3266 = vmatmul.bf16.gmra.mxu0 %v2862
    %v3267 = vpop.f32.mrf.mxu0
    %v3268 = vadd.f32 %v2930, %v3267
    %v3269 = vpop.f32.mrf.mxu0
    %3270 = vdwg.mxu0
    %3271 = vmatpush.bf16.msra.mxu0 %v3190
    %3272 = vmatpush.bf16.msra.mxu0 %v3186
    %3273 = vmatpush.bf16.msra.mxu0 %v3182
    %3274 = vmatpush.bf16.msra.mxu0 %v3178
    %3275 = vmatpush.bf16.msra.mxu0 %v3174
    %3276 = vmatpush.bf16.msra.mxu0 %v3170
    %3277 = vmatpush.bf16.msra.mxu0 %v3166
    %3278 = vmatpush.bf16.msra.mxu0 %v3162
    %3279 = vmatmul.bf16.gmra.mxu0 %v2863
    %v3280 = vpop.f32.mrf.mxu0
    %v3281 = vadd.f32 %v3268, %v3280
    %v3282 = vpop.f32.mrf.mxu0
    %3283 = vdwg.mxu0
    %3284 = vmatpush.bf16.msra.mxu0 %v3159
    %3285 = vmatpush.bf16.msra.mxu0 %v3155
    %3286 = vmatpush.bf16.msra.mxu0 %v3151
    %3287 = vmatpush.bf16.msra.mxu0 %v3147
    %3288 = vmatpush.bf16.msra.mxu0 %v3143
    %3289 = vmatpush.bf16.msra.mxu0 %v3139
    %3290 = vmatpush.bf16.msra.mxu0 %v3135
    %3291 = vmatpush.bf16.msra.mxu0 %v3131
    %3292 = vmatmul.bf16.gmra.mxu0 %v2862
    %v3293 = vpop.f32.mrf.mxu0
    %v3294 = vadd.f32 %v2931, %v3293
    %v3295 = vpop.f32.mrf.mxu0
    %3296 = vdwg.mxu0
    %3297 = vmatpush.bf16.msra.mxu0 %v3191
    %3298 = vmatpush.bf16.msra.mxu0 %v3187
    %3299 = vmatpush.bf16.msra.mxu0 %v3183
    %3300 = vmatpush.bf16.msra.mxu0 %v3179
    %3301 = vmatpush.bf16.msra.mxu0 %v3175
    %3302 = vmatpush.bf16.msra.mxu0 %v3171
    %3303 = vmatpush.bf16.msra.mxu0 %v3167
    %3304 = vmatpush.bf16.msra.mxu0 %v3163
    %3305 = vmatmul.bf16.gmra.mxu0 %v2863
    %v3306 = vpop.f32.mrf.mxu0
    %v3307 = vadd.f32 %v3294, %v3306
    %v3308 = vpop.f32.mrf.mxu0
    %3309 = vdwg.mxu0
    %3310 = vmatpush.bf16.msra.mxu0 %v3160
    %3311 = vmatpush.bf16.msra.mxu0 %v3156
    %3312 = vmatpush.bf16.msra.mxu0 %v3152
    %3313 = vmatpush.bf16.msra.mxu0 %v3148
    %3314 = vmatpush.bf16.msra.mxu0 %v3144
    %3315 = vmatpush.bf16.msra.mxu0 %v3140
    %3316 = vmatpush.bf16.msra.mxu0 %v3136
    %3317 = vmatpush.bf16.msra.mxu0 %v3132
    %3318 = vmatmul.bf16.gmra.mxu0 %v2862
    %v3319 = vpop.f32.mrf.mxu0
    %v3320 = vadd.f32 %v2932, %v3319
    %v3321 = vpop.f32.mrf.mxu0
    %3322 = vdwg.mxu0
    %3323 = vmatpush.bf16.msra.mxu0 %v3192
    %3324 = vmatpush.bf16.msra.mxu0 %v3188
    %3325 = vmatpush.bf16.msra.mxu0 %v3184
    %3326 = vmatpush.bf16.msra.mxu0 %v3180
    %3327 = vmatpush.bf16.msra.mxu0 %v3176
    %3328 = vmatpush.bf16.msra.mxu0 %v3172
    %3329 = vmatpush.bf16.msra.mxu0 %v3168
    %3330 = vmatpush.bf16.msra.mxu0 %v3164
    %3331 = vmatmul.bf16.gmra.mxu0 %v2863
    %v3332 = vpop.f32.mrf.mxu0
    %v3333 = vadd.f32 %v3320, %v3332
    %v3334 = vpop.f32.mrf.mxu0
    %3335 = vdwg.mxu0
    %3336 = vmatpush.bf16.msra.mxu0 %v3161
    %3337 = vmatpush.bf16.msra.mxu0 %v3157
    %3338 = vmatpush.bf16.msra.mxu0 %v3153
    %3339 = vmatpush.bf16.msra.mxu0 %v3149
    %3340 = vmatpush.bf16.msra.mxu0 %v3145
    %3341 = vmatpush.bf16.msra.mxu0 %v3141
    %3342 = vmatpush.bf16.msra.mxu0 %v3137
    %3343 = vmatpush.bf16.msra.mxu0 %v3133
    %3344 = vmatmul.bf16.gmra.mxu0 %v2862
    %v3345 = vpop.f32.mrf.mxu0
    %v3346 = vadd.f32 %v2933, %v3345
    %v3347 = vpop.f32.mrf.mxu0
    %3348 = vdwg.mxu0
    %3349 = vmatpush.bf16.msra.mxu0 %v3193
    %3350 = vmatpush.bf16.msra.mxu0 %v3189
    %3351 = vmatpush.bf16.msra.mxu0 %v3185
    %3352 = vmatpush.bf16.msra.mxu0 %v3181
    %3353 = vmatpush.bf16.msra.mxu0 %v3177
    %3354 = vmatpush.bf16.msra.mxu0 %v3173
    %3355 = vmatpush.bf16.msra.mxu0 %v3169
    %3356 = vmatpush.bf16.msra.mxu0 %v3165
    %3357 = vmatmul.bf16.gmra.mxu0 %v2863
    %v3358 = vpop.f32.mrf.mxu0
    %v3359 = vadd.f32 %v3346, %v3358
    %v3360 = vpop.f32.mrf.mxu0
    %3361 = vdwg.mxu0
    %v3362 = vmax.f32 %v3281, 0.0
    %v3363 = vmax.f32 %v3307, 0.0
    %v3364 = vmax.f32 %v3333, 0.0
    %v3365 = vmax.f32 %v3359, 0.0
    %v3366 = vpack.c.bf16 %v3362, %v3362
    %v3367 = vpack.c.bf16 %v3363, %v3363
    %v3368 = vpack.c.bf16 %v3364, %v3364
    %v3369 = vpack.c.bf16 %v3365, %v3365
    %v3370 = vld [vmem:[#allocation20] sm:$0xff]
    %v3371 = vld [vmem:[#allocation20 + $0x8] sm:$0xff]
    %v3372 = vld [vmem:[#allocation20 + $0x10] sm:$0xff]
    %v3373 = vld [vmem:[#allocation20 + $0x18] sm:$0xf]
    %v3374 = vld [vmem:[#allocation20 + $0x1c] sm:$0xff]
    %v3375 = vld [vmem:[#allocation20 + $0x24] sm:$0xff]
    %v3376 = vld [vmem:[#allocation20 + $0x2c] sm:$0xff]
    %v3377 = vld [vmem:[#allocation20 + $0x34] sm:$0xf]
    %v3378 = vld [vmem:[#allocation20 + $0x38] sm:$0xff]
    %v3379 = vld [vmem:[#allocation20 + $0x40] sm:$0xff]
    %v3380 = vld [vmem:[#allocation20 + $0x48] sm:$0xff]
    %v3381 = vld [vmem:[#allocation20 + $0x50] sm:$0xf]
    %v3382 = vld [vmem:[#allocation20 + $0x54] sm:$0xff]
    %v3383 = vld [vmem:[#allocation20 + $0x5c] sm:$0xff]
    %v3384 = vld [vmem:[#allocation20 + $0x64] sm:$0xff]
    %v3385 = vld [vmem:[#allocation20 + $0x6c] sm:$0xf]
    %v3386 = vld [vmem:[#allocation20 + $0x70] sm:$0xff]
    %v3387 = vld [vmem:[#allocation20 + $0x78] sm:$0xff]
    %v3388 = vld [vmem:[#allocation20 + $0x80] sm:$0xff]
    %v3389 = vld [vmem:[#allocation20 + $0x88] sm:$0xf]
    %v3390 = vld [vmem:[#allocation20 + $0x8c] sm:$0xff]
    %v3391 = vld [vmem:[#allocation20 + $0x94] sm:$0xff]
    %v3392 = vld [vmem:[#allocation20 + $0x9c] sm:$0xff]
    %v3393 = vld [vmem:[#allocation20 + $0xa4] sm:$0xf]
    %v3394 = vld [vmem:[#allocation20 + $0xa8] sm:$0xff]
    %v3395 = vld [vmem:[#allocation20 + $0xb0] sm:$0xff]
    %v3396 = vld [vmem:[#allocation20 + $0xb8] sm:$0xff]
    %v3397 = vld [vmem:[#allocation20 + $0xc0] sm:$0xf]
    %v3398 = vld [vmem:[#allocation20 + $0xc4] sm:$0xff]
    %v3399 = vld [vmem:[#allocation20 + $0xcc] sm:$0xff]
    %v3400 = vld [vmem:[#allocation20 + $0xd4] sm:$0xff]
    %v3401 = vld [vmem:[#allocation20 + $0xdc] sm:$0xf]
    %v3402 = vld [vmem:[#allocation20 + $0xe0] sm:$0xff]
    %v3403 = vld [vmem:[#allocation20 + $0xe8] sm:$0xff]
    %v3404 = vld [vmem:[#allocation20 + $0xf0] sm:$0xff]
    %v3405 = vld [vmem:[#allocation20 + $0xf8] sm:$0xf]
    %v3406 = vld [vmem:[#allocation20 + $0xfc] sm:$0xff]
    %v3407 = vld [vmem:[#allocation20 + $0x104] sm:$0xff]
    %v3408 = vld [vmem:[#allocation20 + $0x10c] sm:$0xff]
    %v3409 = vld [vmem:[#allocation20 + $0x114] sm:$0xf]
    %v3410 = vld [vmem:[#allocation20 + $0x118] sm:$0xff]
    %v3411 = vld [vmem:[#allocation20 + $0x120] sm:$0xff]
    %v3412 = vld [vmem:[#allocation20 + $0x128] sm:$0xff]
    %v3413 = vld [vmem:[#allocation20 + $0x130] sm:$0xf]
    %v3414 = vld [vmem:[#allocation20 + $0x134] sm:$0xff]
    %v3415 = vld [vmem:[#allocation20 + $0x13c] sm:$0xff]
    %v3416 = vld [vmem:[#allocation20 + $0x144] sm:$0xff]
    %v3417 = vld [vmem:[#allocation20 + $0x14c] sm:$0xf]
    %v3418 = vld [vmem:[#allocation20 + $0x150] sm:$0xff]
    %v3419 = vld [vmem:[#allocation20 + $0x158] sm:$0xff]
    %v3420 = vld [vmem:[#allocation20 + $0x160] sm:$0xff]
    %v3421 = vld [vmem:[#allocation20 + $0x168] sm:$0xf]
    %v3422 = vld [vmem:[#allocation20 + $0x16c] sm:$0xff]
    %v3423 = vld [vmem:[#allocation20 + $0x174] sm:$0xff]
    %v3424 = vld [vmem:[#allocation20 + $0x17c] sm:$0xff]
    %v3425 = vld [vmem:[#allocation20 + $0x184] sm:$0xf]
    %v3426 = vld [vmem:[#allocation20 + $0x188] sm:$0xff]
    %v3427 = vld [vmem:[#allocation20 + $0x190] sm:$0xff]
    %v3428 = vld [vmem:[#allocation20 + $0x198] sm:$0xff]
    %v3429 = vld [vmem:[#allocation20 + $0x1a0] sm:$0xf]
    %v3430 = vld [vmem:[#allocation20 + $0x1a4] sm:$0xff]
    %v3431 = vld [vmem:[#allocation20 + $0x1ac] sm:$0xff]
    %v3432 = vld [vmem:[#allocation20 + $0x1b4] sm:$0xff]
    %v3433 = vld [vmem:[#allocation20 + $0x1bc] sm:$0xf]
    %v3434 = vld [vmem:[#allocation20 + $0x1c0] sm:$0xff]
    %v3435 = vld [vmem:[#allocation20 + $0x1c8] sm:$0xff]
    %v3436 = vld [vmem:[#allocation20 + $0x1d0] sm:$0xff]
    %v3437 = vld [vmem:[#allocation20 + $0x1d8] sm:$0xf]
    %v3438 = vld [vmem:[#allocation20 + $0x1dc] sm:$0xff]
    %v3439 = vld [vmem:[#allocation20 + $0x1e4] sm:$0xff]
    %v3440 = vld [vmem:[#allocation20 + $0x1ec] sm:$0xff]
    %v3441 = vld [vmem:[#allocation20 + $0x1f4] sm:$0xf]
    %v3442 = vld [vmem:[#allocation20 + $0x1f8] sm:$0xff]
    %v3443 = vld [vmem:[#allocation20 + $0x200] sm:$0xff]
    %v3444 = vld [vmem:[#allocation20 + $0x208] sm:$0xff]
    %v3445 = vld [vmem:[#allocation20 + $0x210] sm:$0xf]
    %v3446 = vld [vmem:[#allocation20 + $0x214] sm:$0xff]
    %v3447 = vld [vmem:[#allocation20 + $0x21c] sm:$0xff]
    %v3448 = vld [vmem:[#allocation20 + $0x224] sm:$0xff]
    %v3449 = vld [vmem:[#allocation20 + $0x22c] sm:$0xf]
    %v3450 = vld [vmem:[#allocation20 + $0x230] sm:$0xff]
    %v3451 = vld [vmem:[#allocation20 + $0x238] sm:$0xff]
    %v3452 = vld [vmem:[#allocation20 + $0x240] sm:$0xff]
    %v3453 = vld [vmem:[#allocation20 + $0x248] sm:$0xf]
    %v3454 = vld [vmem:[#allocation20 + $0x24c] sm:$0xff]
    %v3455 = vld [vmem:[#allocation20 + $0x254] sm:$0xff]
    %v3456 = vld [vmem:[#allocation20 + $0x25c] sm:$0xff]
    %v3457 = vld [vmem:[#allocation20 + $0x264] sm:$0xf]
    %v3458 = vld [vmem:[#allocation20 + $0x268] sm:$0xff]
    %v3459 = vld [vmem:[#allocation20 + $0x270] sm:$0xff]
    %v3460 = vld [vmem:[#allocation20 + $0x278] sm:$0xff]
    %v3461 = vld [vmem:[#allocation20 + $0x280] sm:$0xf]
    %v3462 = vld [vmem:[#allocation20 + $0x284] sm:$0xff]
    %v3463 = vld [vmem:[#allocation20 + $0x28c] sm:$0xff]
    %v3464 = vld [vmem:[#allocation20 + $0x294] sm:$0xff]
    %v3465 = vld [vmem:[#allocation20 + $0x29c] sm:$0xf]
    %v3466 = vld [vmem:[#allocation20 + $0x2a0] sm:$0xff]
    %v3467 = vld [vmem:[#allocation20 + $0x2a8] sm:$0xff]
    %v3468 = vld [vmem:[#allocation20 + $0x2b0] sm:$0xff]
    %v3469 = vld [vmem:[#allocation20 + $0x2b8] sm:$0xf]
    %v3470 = vld [vmem:[#allocation20 + $0x2bc] sm:$0xff]
    %v3471 = vld [vmem:[#allocation20 + $0x2c4] sm:$0xff]
    %v3472 = vld [vmem:[#allocation20 + $0x2cc] sm:$0xff]
    %v3473 = vld [vmem:[#allocation20 + $0x2d4] sm:$0xf]
    %v3474 = vld [vmem:[#allocation20 + $0x2d8] sm:$0xff]
    %v3475 = vld [vmem:[#allocation20 + $0x2e0] sm:$0xff]
    %v3476 = vld [vmem:[#allocation20 + $0x2e8] sm:$0xff]
    %v3477 = vld [vmem:[#allocation20 + $0x2f0] sm:$0xf]
    %v3478 = vld [vmem:[#allocation20 + $0x2f4] sm:$0xff]
    %v3479 = vld [vmem:[#allocation20 + $0x2fc] sm:$0xff]
    %v3480 = vld [vmem:[#allocation20 + $0x304] sm:$0xff]
    %v3481 = vld [vmem:[#allocation20 + $0x30c] sm:$0xf]
    %v3482 = vld [vmem:[#allocation20 + $0x310] sm:$0xff]
    %v3483 = vld [vmem:[#allocation20 + $0x318] sm:$0xff]
    %v3484 = vld [vmem:[#allocation20 + $0x320] sm:$0xff]
    %v3485 = vld [vmem:[#allocation20 + $0x328] sm:$0xf]
    %v3486 = vld [vmem:[#allocation20 + $0x32c] sm:$0xff]
    %v3487 = vld [vmem:[#allocation20 + $0x334] sm:$0xff]
    %v3488 = vld [vmem:[#allocation20 + $0x33c] sm:$0xff]
    %v3489 = vld [vmem:[#allocation20 + $0x344] sm:$0xf]
    %v3490 = vld [vmem:[#allocation20 + $0x348] sm:$0xff]
    %v3491 = vld [vmem:[#allocation20 + $0x350] sm:$0xff]
    %v3492 = vld [vmem:[#allocation20 + $0x358] sm:$0xff]
    %v3493 = vld [vmem:[#allocation20 + $0x360] sm:$0xf]
    %v3494 = vld [vmem:[#allocation20 + $0x364] sm:$0xff]
    %v3495 = vld [vmem:[#allocation20 + $0x36c] sm:$0xff]
    %v3496 = vld [vmem:[#allocation20 + $0x374] sm:$0xff]
    %v3497 = vld [vmem:[#allocation20 + $0x37c] sm:$0xf]
    %v3498 = vld [vmem:[#allocation20 + $0x380] sm:$0xff]
    %v3499 = vld [vmem:[#allocation20 + $0x388] sm:$0xff]
    %v3500 = vld [vmem:[#allocation20 + $0x390] sm:$0xff]
    %v3501 = vld [vmem:[#allocation20 + $0x398] sm:$0xf]
    %v3502 = vld [vmem:[#allocation20 + $0x39c] sm:$0xff]
    %v3503 = vld [vmem:[#allocation20 + $0x3a4] sm:$0xff]
    %v3504 = vld [vmem:[#allocation20 + $0x3ac] sm:$0xff]
    %v3505 = vld [vmem:[#allocation20 + $0x3b4] sm:$0xf]
    %v3506 = vld [vmem:[#allocation20 + $0x3b8] sm:$0xff]
    %v3507 = vld [vmem:[#allocation20 + $0x3c0] sm:$0xff]
    %v3508 = vld [vmem:[#allocation20 + $0x3c8] sm:$0xff]
    %v3509 = vld [vmem:[#allocation20 + $0x3d0] sm:$0xf]
    %v3510 = vld [vmem:[#allocation20 + $0x3d4] sm:$0xff]
    %v3511 = vld [vmem:[#allocation20 + $0x3dc] sm:$0xff]
    %v3512 = vld [vmem:[#allocation20 + $0x3e4] sm:$0xff]
    %v3513 = vld [vmem:[#allocation20 + $0x3ec] sm:$0xf]
    %v3514 = vld [vmem:[#allocation20 + $0x3f0] sm:$0xff]
    %v3515 = vld [vmem:[#allocation20 + $0x3f8] sm:$0xff]
    %v3516 = vld [vmem:[#allocation20 + $0x400] sm:$0xff]
    %v3517 = vld [vmem:[#allocation20 + $0x408] sm:$0xf]
    %v3518 = vld [vmem:[#allocation20 + $0x40c] sm:$0xff]
    %v3519 = vld [vmem:[#allocation20 + $0x414] sm:$0xff]
    %v3520 = vld [vmem:[#allocation20 + $0x41c] sm:$0xff]
    %v3521 = vld [vmem:[#allocation20 + $0x424] sm:$0xf]
    %v3522 = vld [vmem:[#allocation20 + $0x428] sm:$0xff]
    %v3523 = vld [vmem:[#allocation20 + $0x430] sm:$0xff]
    %v3524 = vld [vmem:[#allocation20 + $0x438] sm:$0xff]
    %v3525 = vld [vmem:[#allocation20 + $0x440] sm:$0xf]
    %v3526 = vld [vmem:[#allocation20 + $0x444] sm:$0xff]
    %v3527 = vld [vmem:[#allocation20 + $0x44c] sm:$0xff]
    %v3528 = vld [vmem:[#allocation20 + $0x454] sm:$0xff]
    %v3529 = vld [vmem:[#allocation20 + $0x45c] sm:$0xf]
    %v3530 = vld [vmem:[#allocation20 + $0x460] sm:$0xff]
    %v3531 = vld [vmem:[#allocation20 + $0x468] sm:$0xff]
    %v3532 = vld [vmem:[#allocation20 + $0x470] sm:$0xff]
    %v3533 = vld [vmem:[#allocation20 + $0x478] sm:$0xf]
    %v3534 = vld [vmem:[#allocation20 + $0x47c] sm:$0xff]
    %v3535 = vld [vmem:[#allocation20 + $0x484] sm:$0xff]
    %v3536 = vld [vmem:[#allocation20 + $0x48c] sm:$0xff]
    %v3537 = vld [vmem:[#allocation20 + $0x494] sm:$0xf]
    %v3538 = vld [vmem:[#allocation20 + $0x498] sm:$0xff]
    %v3539 = vld [vmem:[#allocation20 + $0x4a0] sm:$0xff]
    %v3540 = vld [vmem:[#allocation20 + $0x4a8] sm:$0xff]
    %v3541 = vld [vmem:[#allocation20 + $0x4b0] sm:$0xf]
    %v3542 = vld [vmem:[#allocation20 + $0x4b4] sm:$0xff]
    %v3543 = vld [vmem:[#allocation20 + $0x4bc] sm:$0xff]
    %v3544 = vld [vmem:[#allocation20 + $0x4c4] sm:$0xff]
    %v3545 = vld [vmem:[#allocation20 + $0x4cc] sm:$0xf]
    %v3546 = vld [vmem:[#allocation20 + $0x4d0] sm:$0xff]
    %v3547 = vld [vmem:[#allocation20 + $0x4d8] sm:$0xff]
    %v3548 = vld [vmem:[#allocation20 + $0x4e0] sm:$0xff]
    %v3549 = vld [vmem:[#allocation20 + $0x4e8] sm:$0xf]
    %v3550 = vld [vmem:[#allocation20 + $0x4ec] sm:$0xff]
    %v3551 = vld [vmem:[#allocation20 + $0x4f4] sm:$0xff]
    %v3552 = vld [vmem:[#allocation20 + $0x4fc] sm:$0xff]
    %v3553 = vld [vmem:[#allocation20 + $0x504] sm:$0xf]
    %v3554 = vld [vmem:[#allocation20 + $0x508] sm:$0xff]
    %v3555 = vld [vmem:[#allocation20 + $0x510] sm:$0xff]
    %v3556 = vld [vmem:[#allocation20 + $0x518] sm:$0xff]
    %v3557 = vld [vmem:[#allocation20 + $0x520] sm:$0xf]
    %v3558 = vld [vmem:[#allocation20 + $0x524] sm:$0xff]
    %v3559 = vld [vmem:[#allocation20 + $0x52c] sm:$0xff]
    %v3560 = vld [vmem:[#allocation20 + $0x534] sm:$0xff]
    %v3561 = vld [vmem:[#allocation20 + $0x53c] sm:$0xf]
    %v3562 = vld [vmem:[#allocation20 + $0x540] sm:$0xff]
    %v3563 = vld [vmem:[#allocation20 + $0x548] sm:$0xff]
    %v3564 = vld [vmem:[#allocation20 + $0x550] sm:$0xff]
    %v3565 = vld [vmem:[#allocation20 + $0x558] sm:$0xf]
    %v3566 = vld [vmem:[#allocation20 + $0x55c] sm:$0xff]
    %v3567 = vld [vmem:[#allocation20 + $0x564] sm:$0xff]
    %v3568 = vld [vmem:[#allocation20 + $0x56c] sm:$0xff]
    %v3569 = vld [vmem:[#allocation20 + $0x574] sm:$0xf]
    %v3570 = vld [vmem:[#allocation20 + $0x578] sm:$0xff]
    %v3571 = vld [vmem:[#allocation20 + $0x580] sm:$0xff]
    %v3572 = vld [vmem:[#allocation20 + $0x588] sm:$0xff]
    %v3573 = vld [vmem:[#allocation20 + $0x590] sm:$0xf]
    %v3574 = vld [vmem:[#allocation20 + $0x594] sm:$0xff]
    %v3575 = vld [vmem:[#allocation20 + $0x59c] sm:$0xff]
    %v3576 = vld [vmem:[#allocation20 + $0x5a4] sm:$0xff]
    %v3577 = vld [vmem:[#allocation20 + $0x5ac] sm:$0xf]
    %v3578 = vld [vmem:[#allocation20 + $0x5b0] sm:$0xff]
    %v3579 = vld [vmem:[#allocation20 + $0x5b8] sm:$0xff]
    %v3580 = vld [vmem:[#allocation20 + $0x5c0] sm:$0xff]
    %v3581 = vld [vmem:[#allocation20 + $0x5c8] sm:$0xf]
    %v3582 = vld [vmem:[#allocation20 + $0x5cc] sm:$0xff]
    %v3583 = vld [vmem:[#allocation20 + $0x5d4] sm:$0xff]
    %v3584 = vld [vmem:[#allocation20 + $0x5dc] sm:$0xff]
    %v3585 = vld [vmem:[#allocation20 + $0x5e4] sm:$0xf]
    %v3586 = vld [vmem:[#allocation20 + $0x5e8] sm:$0xff]
    %v3587 = vld [vmem:[#allocation20 + $0x5f0] sm:$0xff]
    %v3588 = vld [vmem:[#allocation20 + $0x5f8] sm:$0xff]
    %v3589 = vld [vmem:[#allocation20 + $0x600] sm:$0xf]
    %v3590 = vld [vmem:[#allocation20 + $0x604] sm:$0xff]
    %v3591 = vld [vmem:[#allocation20 + $0x60c] sm:$0xff]
    %v3592 = vld [vmem:[#allocation20 + $0x614] sm:$0xff]
    %v3593 = vld [vmem:[#allocation20 + $0x61c] sm:$0xf]
    %v3594 = vld [vmem:[#allocation20 + $0x620] sm:$0xff]
    %v3595 = vld [vmem:[#allocation20 + $0x628] sm:$0xff]
    %v3596 = vld [vmem:[#allocation20 + $0x630] sm:$0xff]
    %v3597 = vld [vmem:[#allocation20 + $0x638] sm:$0xf]
    %v3598 = vld [vmem:[#allocation20 + $0x63c] sm:$0xff]
    %v3599 = vld [vmem:[#allocation20 + $0x644] sm:$0xff]
    %v3600 = vld [vmem:[#allocation20 + $0x64c] sm:$0xff]
    %v3601 = vld [vmem:[#allocation20 + $0x654] sm:$0xf]
    %v3602 = vld [vmem:[#allocation20 + $0x658] sm:$0xff]
    %v3603 = vld [vmem:[#allocation20 + $0x660] sm:$0xff]
    %v3604 = vld [vmem:[#allocation20 + $0x668] sm:$0xff]
    %v3605 = vld [vmem:[#allocation20 + $0x670] sm:$0xf]
    %v3606 = vld [vmem:[#allocation20 + $0x674] sm:$0xff]
    %v3607 = vld [vmem:[#allocation20 + $0x67c] sm:$0xff]
    %v3608 = vld [vmem:[#allocation20 + $0x684] sm:$0xff]
    %v3609 = vld [vmem:[#allocation20 + $0x68c] sm:$0xf]
    %v3610 = vld [vmem:[#allocation20 + $0x690] sm:$0xff]
    %v3611 = vld [vmem:[#allocation20 + $0x698] sm:$0xff]
    %v3612 = vld [vmem:[#allocation20 + $0x6a0] sm:$0xff]
    %v3613 = vld [vmem:[#allocation20 + $0x6a8] sm:$0xf]
    %v3614 = vld [vmem:[#allocation20 + $0x6ac] sm:$0xff]
    %v3615 = vld [vmem:[#allocation20 + $0x6b4] sm:$0xff]
    %v3616 = vld [vmem:[#allocation20 + $0x6bc] sm:$0xff]
    %v3617 = vld [vmem:[#allocation20 + $0x6c4] sm:$0xf]
    %v3618 = vld [vmem:[#allocation20 + $0x6c8] sm:$0xff]
    %v3619 = vld [vmem:[#allocation20 + $0x6d0] sm:$0xff]
    %v3620 = vld [vmem:[#allocation20 + $0x6d8] sm:$0xff]
    %v3621 = vld [vmem:[#allocation20 + $0x6e0] sm:$0xf]
    %v3622 = vld [vmem:[#allocation20 + $0x6e4] sm:$0xff]
    %v3623 = vld [vmem:[#allocation20 + $0x6ec] sm:$0xff]
    %v3624 = vld [vmem:[#allocation20 + $0x6f4] sm:$0xff]
    %v3625 = vld [vmem:[#allocation20 + $0x6fc] sm:$0xf]
    %v3626 = vld [vmem:[%s13] sm:$0xff]
    %v3628 = vperm.slane %v3626, 0
    %v3629 = vperm.slane %v3626, 1
    %v3630 = vperm.slane %v3626, 2
    %v3631 = vperm.slane %v3626, 3
    %v3632 = vperm.slane %v3626, 4
    %v3633 = vperm.slane %v3626, 5
    %v3634 = vperm.slane %v3626, 6
    %v3898 = vunpack.c.l.b16 %v3370
    %v3899 = vunpack.c.h.b16 %v3370
    %v3900 = vunpack.c.l.b16 %v3371
    %v3901 = vunpack.c.h.b16 %v3371
    %v3902 = vunpack.c.l.b16 %v3372
    %v3903 = vunpack.c.h.b16 %v3372
    %v3904 = vunpack.c.l.b16 %v3373
    %v3905 = vunpack.c.l.b16 %v3374
    %v3906 = vunpack.c.h.b16 %v3374
    %v3907 = vunpack.c.l.b16 %v3375
    %v3908 = vunpack.c.h.b16 %v3375
    %v3909 = vunpack.c.l.b16 %v3376
    %v3910 = vunpack.c.h.b16 %v3376
    %v3911 = vunpack.c.l.b16 %v3377
    %v3912 = vunpack.c.l.b16 %v3378
    %v3913 = vunpack.c.h.b16 %v3378
    %v3914 = vunpack.c.l.b16 %v3379
    %v3915 = vunpack.c.h.b16 %v3379
    %v3916 = vunpack.c.l.b16 %v3380
    %v3917 = vunpack.c.h.b16 %v3380
    %v3918 = vunpack.c.l.b16 %v3381
    %v3919 = vunpack.c.l.b16 %v3382
    %v3920 = vunpack.c.h.b16 %v3382
    %v3921 = vunpack.c.l.b16 %v3383
    %v3922 = vunpack.c.h.b16 %v3383
    %v3923 = vunpack.c.l.b16 %v3384
    %v3924 = vunpack.c.h.b16 %v3384
    %v3925 = vunpack.c.l.b16 %v3385
    %v3926 = vunpack.c.l.b16 %v3386
    %v3927 = vunpack.c.h.b16 %v3386
    %v3928 = vunpack.c.l.b16 %v3387
    %v3929 = vunpack.c.h.b16 %v3387
    %v3930 = vunpack.c.l.b16 %v3388
    %v3931 = vunpack.c.h.b16 %v3388
    %v3932 = vunpack.c.l.b16 %v3389
    %v3933 = vunpack.c.l.b16 %v3390
    %v3934 = vunpack.c.h.b16 %v3390
    %v3935 = vunpack.c.l.b16 %v3391
    %v3936 = vunpack.c.h.b16 %v3391
    %v3937 = vunpack.c.l.b16 %v3392
    %v3938 = vunpack.c.h.b16 %v3392
    %v3939 = vunpack.c.l.b16 %v3393
    %v3940 = vunpack.c.l.b16 %v3394
    %v3941 = vunpack.c.h.b16 %v3394
    %v3942 = vunpack.c.l.b16 %v3395
    %v3943 = vunpack.c.h.b16 %v3395
    %v3944 = vunpack.c.l.b16 %v3396
    %v3945 = vunpack.c.h.b16 %v3396
    %v3946 = vunpack.c.l.b16 %v3397
    %v3947 = vunpack.c.l.b16 %v3398
    %v3948 = vunpack.c.h.b16 %v3398
    %v3949 = vunpack.c.l.b16 %v3399
    %v3950 = vunpack.c.h.b16 %v3399
    %v3951 = vunpack.c.l.b16 %v3400
    %v3952 = vunpack.c.h.b16 %v3400
    %v3953 = vunpack.c.l.b16 %v3401
    %v3954 = vunpack.c.l.b16 %v3402
    %v3955 = vunpack.c.h.b16 %v3402
    %v3956 = vunpack.c.l.b16 %v3403
    %v3957 = vunpack.c.h.b16 %v3403
    %v3958 = vunpack.c.l.b16 %v3404
    %v3959 = vunpack.c.h.b16 %v3404
    %v3960 = vunpack.c.l.b16 %v3405
    %v3961 = vunpack.c.l.b16 %v3406
    %v3962 = vunpack.c.h.b16 %v3406
    %v3963 = vunpack.c.l.b16 %v3407
    %v3964 = vunpack.c.h.b16 %v3407
    %v3965 = vunpack.c.l.b16 %v3408
    %v3966 = vunpack.c.h.b16 %v3408
    %v3967 = vunpack.c.l.b16 %v3409
    %v3968 = vunpack.c.l.b16 %v3410
    %v3969 = vunpack.c.h.b16 %v3410
    %v3970 = vunpack.c.l.b16 %v3411
    %v3971 = vunpack.c.h.b16 %v3411
    %v3972 = vunpack.c.l.b16 %v3412
    %v3973 = vunpack.c.h.b16 %v3412
    %v3974 = vunpack.c.l.b16 %v3413
    %v3975 = vunpack.c.l.b16 %v3414
    %v3976 = vunpack.c.h.b16 %v3414
    %v3977 = vunpack.c.l.b16 %v3415
    %v3978 = vunpack.c.h.b16 %v3415
    %v3979 = vunpack.c.l.b16 %v3416
    %v3980 = vunpack.c.h.b16 %v3416
    %v3981 = vunpack.c.l.b16 %v3417
    %v3982 = vunpack.c.l.b16 %v3418
    %v3983 = vunpack.c.h.b16 %v3418
    %v3984 = vunpack.c.l.b16 %v3419
    %v3985 = vunpack.c.h.b16 %v3419
    %v3986 = vunpack.c.l.b16 %v3420
    %v3987 = vunpack.c.h.b16 %v3420
    %v3988 = vunpack.c.l.b16 %v3421
    %v3989 = vunpack.c.l.b16 %v3422
    %v3990 = vunpack.c.h.b16 %v3422
    %v3991 = vunpack.c.l.b16 %v3423
    %v3992 = vunpack.c.h.b16 %v3423
    %v3993 = vunpack.c.l.b16 %v3424
    %v3994 = vunpack.c.h.b16 %v3424
    %v3995 = vunpack.c.l.b16 %v3425
    %v3996 = vunpack.c.l.b16 %v3426
    %v3997 = vunpack.c.h.b16 %v3426
    %v3998 = vunpack.c.l.b16 %v3427
    %v3999 = vunpack.c.h.b16 %v3427
    %v4000 = vunpack.c.l.b16 %v3428
    %v4001 = vunpack.c.h.b16 %v3428
    %v4002 = vunpack.c.l.b16 %v3429
    %v4003 = vunpack.c.l.b16 %v3430
    %v4004 = vunpack.c.h.b16 %v3430
    %v4005 = vunpack.c.l.b16 %v3431
    %v4006 = vunpack.c.h.b16 %v3431
    %v4007 = vunpack.c.l.b16 %v3432
    %v4008 = vunpack.c.h.b16 %v3432
    %v4009 = vunpack.c.l.b16 %v3433
    %v4010 = vunpack.c.l.b16 %v3434
    %v4011 = vunpack.c.h.b16 %v3434
    %v4012 = vunpack.c.l.b16 %v3435
    %v4013 = vunpack.c.h.b16 %v3435
    %v4014 = vunpack.c.l.b16 %v3436
    %v4015 = vunpack.c.h.b16 %v3436
    %v4016 = vunpack.c.l.b16 %v3437
    %v4017 = vunpack.c.l.b16 %v3438
    %v4018 = vunpack.c.h.b16 %v3438
    %v4019 = vunpack.c.l.b16 %v3439
    %v4020 = vunpack.c.h.b16 %v3439
    %v4021 = vunpack.c.l.b16 %v3440
    %v4022 = vunpack.c.h.b16 %v3440
    %v4023 = vunpack.c.l.b16 %v3441
    %v4024 = vunpack.c.l.b16 %v3442
    %v4025 = vunpack.c.h.b16 %v3442
    %v4026 = vunpack.c.l.b16 %v3443
    %v4027 = vunpack.c.h.b16 %v3443
    %v4028 = vunpack.c.l.b16 %v3444
    %v4029 = vunpack.c.h.b16 %v3444
    %v4030 = vunpack.c.l.b16 %v3445
    %v4031 = vunpack.c.l.b16 %v3446
    %v4032 = vunpack.c.h.b16 %v3446
    %v4033 = vunpack.c.l.b16 %v3447
    %v4034 = vunpack.c.h.b16 %v3447
    %v4035 = vunpack.c.l.b16 %v3448
    %v4036 = vunpack.c.h.b16 %v3448
    %v4037 = vunpack.c.l.b16 %v3449
    %v4038 = vunpack.c.l.b16 %v3450
    %v4039 = vunpack.c.h.b16 %v3450
    %v4040 = vunpack.c.l.b16 %v3451
    %v4041 = vunpack.c.h.b16 %v3451
    %v4042 = vunpack.c.l.b16 %v3452
    %v4043 = vunpack.c.h.b16 %v3452
    %v4044 = vunpack.c.l.b16 %v3453
    %v4045 = vunpack.c.l.b16 %v3454
    %v4046 = vunpack.c.h.b16 %v3454
    %v4047 = vunpack.c.l.b16 %v3455
    %v4048 = vunpack.c.h.b16 %v3455
    %v4049 = vunpack.c.l.b16 %v3456
    %v4050 = vunpack.c.h.b16 %v3456
    %v4051 = vunpack.c.l.b16 %v3457
    %v4052 = vunpack.c.l.b16 %v3458
    %v4053 = vunpack.c.h.b16 %v3458
    %v4054 = vunpack.c.l.b16 %v3459
    %v4055 = vunpack.c.h.b16 %v3459
    %v4056 = vunpack.c.l.b16 %v3460
    %v4057 = vunpack.c.h.b16 %v3460
    %v4058 = vunpack.c.l.b16 %v3461
    %v4059 = vunpack.c.l.b16 %v3462
    %v4060 = vunpack.c.h.b16 %v3462
    %v4061 = vunpack.c.l.b16 %v3463
    %v4062 = vunpack.c.h.b16 %v3463
    %v4063 = vunpack.c.l.b16 %v3464
    %v4064 = vunpack.c.h.b16 %v3464
    %v4065 = vunpack.c.l.b16 %v3465
    %v4066 = vunpack.c.l.b16 %v3466
    %v4067 = vunpack.c.h.b16 %v3466
    %v4068 = vunpack.c.l.b16 %v3467
    %v4069 = vunpack.c.h.b16 %v3467
    %v4070 = vunpack.c.l.b16 %v3468
    %v4071 = vunpack.c.h.b16 %v3468
    %v4072 = vunpack.c.l.b16 %v3469
    %v4073 = vunpack.c.l.b16 %v3470
    %v4074 = vunpack.c.h.b16 %v3470
    %v4075 = vunpack.c.l.b16 %v3471
    %v4076 = vunpack.c.h.b16 %v3471
    %v4077 = vunpack.c.l.b16 %v3472
    %v4078 = vunpack.c.h.b16 %v3472
    %v4079 = vunpack.c.l.b16 %v3473
    %v4080 = vunpack.c.l.b16 %v3474
    %v4081 = vunpack.c.h.b16 %v3474
    %v4082 = vunpack.c.l.b16 %v3475
    %v4083 = vunpack.c.h.b16 %v3475
    %v4084 = vunpack.c.l.b16 %v3476
    %v4085 = vunpack.c.h.b16 %v3476
    %v4086 = vunpack.c.l.b16 %v3477
    %v4087 = vunpack.c.l.b16 %v3478
    %v4088 = vunpack.c.h.b16 %v3478
    %v4089 = vunpack.c.l.b16 %v3479
    %v4090 = vunpack.c.h.b16 %v3479
    %v4091 = vunpack.c.l.b16 %v3480
    %v4092 = vunpack.c.h.b16 %v3480
    %v4093 = vunpack.c.l.b16 %v3481
    %v4094 = vunpack.c.l.b16 %v3482
    %v4095 = vunpack.c.h.b16 %v3482
    %v4096 = vunpack.c.l.b16 %v3483
    %v4097 = vunpack.c.h.b16 %v3483
    %v4098 = vunpack.c.l.b16 %v3484
    %v4099 = vunpack.c.h.b16 %v3484
    %v4100 = vunpack.c.l.b16 %v3485
    %v4101 = vunpack.c.l.b16 %v3486
    %v4102 = vunpack.c.h.b16 %v3486
    %v4103 = vunpack.c.l.b16 %v3487
    %v4104 = vunpack.c.h.b16 %v3487
    %v4105 = vunpack.c.l.b16 %v3488
    %v4106 = vunpack.c.h.b16 %v3488
    %v4107 = vunpack.c.l.b16 %v3489
    %v4108 = vunpack.c.l.b16 %v3490
    %v4109 = vunpack.c.h.b16 %v3490
    %v4110 = vunpack.c.l.b16 %v3491
    %v4111 = vunpack.c.h.b16 %v3491
    %v4112 = vunpack.c.l.b16 %v3492
    %v4113 = vunpack.c.h.b16 %v3492
    %v4114 = vunpack.c.l.b16 %v3493
    %v4115 = vunpack.c.l.b16 %v3494
    %v4116 = vunpack.c.h.b16 %v3494
    %v4117 = vunpack.c.l.b16 %v3495
    %v4118 = vunpack.c.h.b16 %v3495
    %v4119 = vunpack.c.l.b16 %v3496
    %v4120 = vunpack.c.h.b16 %v3496
    %v4121 = vunpack.c.l.b16 %v3497
    %v4122 = vunpack.c.l.b16 %v3498
    %v4123 = vunpack.c.h.b16 %v3498
    %v4124 = vunpack.c.l.b16 %v3499
    %v4125 = vunpack.c.h.b16 %v3499
    %v4126 = vunpack.c.l.b16 %v3500
    %v4127 = vunpack.c.h.b16 %v3500
    %v4128 = vunpack.c.l.b16 %v3501
    %v4129 = vunpack.c.l.b16 %v3502
    %v4130 = vunpack.c.h.b16 %v3502
    %v4131 = vunpack.c.l.b16 %v3503
    %v4132 = vunpack.c.h.b16 %v3503
    %v4133 = vunpack.c.l.b16 %v3504
    %v4134 = vunpack.c.h.b16 %v3504
    %v4135 = vunpack.c.l.b16 %v3505
    %v4136 = vunpack.c.l.b16 %v3506
    %v4137 = vunpack.c.h.b16 %v3506
    %v4138 = vunpack.c.l.b16 %v3507
    %v4139 = vunpack.c.h.b16 %v3507
    %v4140 = vunpack.c.l.b16 %v3508
    %v4141 = vunpack.c.h.b16 %v3508
    %v4142 = vunpack.c.l.b16 %v3509
    %v4143 = vunpack.c.l.b16 %v3510
    %v4144 = vunpack.c.h.b16 %v3510
    %v4145 = vunpack.c.l.b16 %v3511
    %v4146 = vunpack.c.h.b16 %v3511
    %v4147 = vunpack.c.l.b16 %v3512
    %v4148 = vunpack.c.h.b16 %v3512
    %v4149 = vunpack.c.l.b16 %v3513
    %v4150 = vunpack.c.l.b16 %v3514
    %v4151 = vunpack.c.h.b16 %v3514
    %v4152 = vunpack.c.l.b16 %v3515
    %v4153 = vunpack.c.h.b16 %v3515
    %v4154 = vunpack.c.l.b16 %v3516
    %v4155 = vunpack.c.h.b16 %v3516
    %v4156 = vunpack.c.l.b16 %v3517
    %v4157 = vunpack.c.l.b16 %v3518
    %v4158 = vunpack.c.h.b16 %v3518
    %v4159 = vunpack.c.l.b16 %v3519
    %v4160 = vunpack.c.h.b16 %v3519
    %v4161 = vunpack.c.l.b16 %v3520
    %v4162 = vunpack.c.h.b16 %v3520
    %v4163 = vunpack.c.l.b16 %v3521
    %v4164 = vunpack.c.l.b16 %v3522
    %v4165 = vunpack.c.h.b16 %v3522
    %v4166 = vunpack.c.l.b16 %v3523
    %v4167 = vunpack.c.h.b16 %v3523
    %v4168 = vunpack.c.l.b16 %v3524
    %v4169 = vunpack.c.h.b16 %v3524
    %v4170 = vunpack.c.l.b16 %v3525
    %v4171 = vunpack.c.l.b16 %v3526
    %v4172 = vunpack.c.h.b16 %v3526
    %v4173 = vunpack.c.l.b16 %v3527
    %v4174 = vunpack.c.h.b16 %v3527
    %v4175 = vunpack.c.l.b16 %v3528
    %v4176 = vunpack.c.h.b16 %v3528
    %v4177 = vunpack.c.l.b16 %v3529
    %v4178 = vunpack.c.l.b16 %v3530
    %v4179 = vunpack.c.h.b16 %v3530
    %v4180 = vunpack.c.l.b16 %v3531
    %v4181 = vunpack.c.h.b16 %v3531
    %v4182 = vunpack.c.l.b16 %v3532
    %v4183 = vunpack.c.h.b16 %v3532
    %v4184 = vunpack.c.l.b16 %v3533
    %v4185 = vunpack.c.l.b16 %v3534
    %v4186 = vunpack.c.h.b16 %v3534
    %v4187 = vunpack.c.l.b16 %v3535
    %v4188 = vunpack.c.h.b16 %v3535
    %v4189 = vunpack.c.l.b16 %v3536
    %v4190 = vunpack.c.h.b16 %v3536
    %v4191 = vunpack.c.l.b16 %v3537
    %v4192 = vunpack.c.l.b16 %v3538
    %v4193 = vunpack.c.h.b16 %v3538
    %v4194 = vunpack.c.l.b16 %v3539
    %v4195 = vunpack.c.h.b16 %v3539
    %v4196 = vunpack.c.l.b16 %v3540
    %v4197 = vunpack.c.h.b16 %v3540
    %v4198 = vunpack.c.l.b16 %v3541
    %v4199 = vunpack.c.l.b16 %v3542
    %v4200 = vunpack.c.h.b16 %v3542
    %v4201 = vunpack.c.l.b16 %v3543
    %v4202 = vunpack.c.h.b16 %v3543
    %v4203 = vunpack.c.l.b16 %v3544
    %v4204 = vunpack.c.h.b16 %v3544
    %v4205 = vunpack.c.l.b16 %v3545
    %v4206 = vunpack.c.l.b16 %v3546
    %v4207 = vunpack.c.h.b16 %v3546
    %v4208 = vunpack.c.l.b16 %v3547
    %v4209 = vunpack.c.h.b16 %v3547
    %v4210 = vunpack.c.l.b16 %v3548
    %v4211 = vunpack.c.h.b16 %v3548
    %v4212 = vunpack.c.l.b16 %v3549
    %v4213 = vunpack.c.l.b16 %v3550
    %v4214 = vunpack.c.h.b16 %v3550
    %v4215 = vunpack.c.l.b16 %v3551
    %v4216 = vunpack.c.h.b16 %v3551
    %v4217 = vunpack.c.l.b16 %v3552
    %v4218 = vunpack.c.h.b16 %v3552
    %v4219 = vunpack.c.l.b16 %v3553
    %v4220 = vunpack.c.l.b16 %v3554
    %v4221 = vunpack.c.h.b16 %v3554
    %v4222 = vunpack.c.l.b16 %v3555
    %v4223 = vunpack.c.h.b16 %v3555
    %v4224 = vunpack.c.l.b16 %v3556
    %v4225 = vunpack.c.h.b16 %v3556
    %v4226 = vunpack.c.l.b16 %v3557
    %v4227 = vunpack.c.l.b16 %v3558
    %v4228 = vunpack.c.h.b16 %v3558
    %v4229 = vunpack.c.l.b16 %v3559
    %v4230 = vunpack.c.h.b16 %v3559
    %v4231 = vunpack.c.l.b16 %v3560
    %v4232 = vunpack.c.h.b16 %v3560
    %v4233 = vunpack.c.l.b16 %v3561
    %v4234 = vunpack.c.l.b16 %v3562
    %v4235 = vunpack.c.h.b16 %v3562
    %v4236 = vunpack.c.l.b16 %v3563
    %v4237 = vunpack.c.h.b16 %v3563
    %v4238 = vunpack.c.l.b16 %v3564
    %v4239 = vunpack.c.h.b16 %v3564
    %v4240 = vunpack.c.l.b16 %v3565
    %v4241 = vunpack.c.l.b16 %v3566
    %v4242 = vunpack.c.h.b16 %v3566
    %v4243 = vunpack.c.l.b16 %v3567
    %v4244 = vunpack.c.h.b16 %v3567
    %v4245 = vunpack.c.l.b16 %v3568
    %v4246 = vunpack.c.h.b16 %v3568
    %v4247 = vunpack.c.l.b16 %v3569
    %v4248 = vunpack.c.l.b16 %v3570
    %v4249 = vunpack.c.h.b16 %v3570
    %v4250 = vunpack.c.l.b16 %v3571
    %v4251 = vunpack.c.h.b16 %v3571
    %v4252 = vunpack.c.l.b16 %v3572
    %v4253 = vunpack.c.h.b16 %v3572
    %v4254 = vunpack.c.l.b16 %v3573
    %v4255 = vunpack.c.l.b16 %v3574
    %v4256 = vunpack.c.h.b16 %v3574
    %v4257 = vunpack.c.l.b16 %v3575
    %v4258 = vunpack.c.h.b16 %v3575
    %v4259 = vunpack.c.l.b16 %v3576
    %v4260 = vunpack.c.h.b16 %v3576
    %v4261 = vunpack.c.l.b16 %v3577
    %v4262 = vunpack.c.l.b16 %v3578
    %v4263 = vunpack.c.h.b16 %v3578
    %v4264 = vunpack.c.l.b16 %v3579
    %v4265 = vunpack.c.h.b16 %v3579
    %v4266 = vunpack.c.l.b16 %v3580
    %v4267 = vunpack.c.h.b16 %v3580
    %v4268 = vunpack.c.l.b16 %v3581
    %v4269 = vunpack.c.l.b16 %v3582
    %v4270 = vunpack.c.h.b16 %v3582
    %v4271 = vunpack.c.l.b16 %v3583
    %v4272 = vunpack.c.h.b16 %v3583
    %v4273 = vunpack.c.l.b16 %v3584
    %v4274 = vunpack.c.h.b16 %v3584
    %v4275 = vunpack.c.l.b16 %v3585
    %v4276 = vunpack.c.l.b16 %v3586
    %v4277 = vunpack.c.h.b16 %v3586
    %v4278 = vunpack.c.l.b16 %v3587
    %v4279 = vunpack.c.h.b16 %v3587
    %v4280 = vunpack.c.l.b16 %v3588
    %v4281 = vunpack.c.h.b16 %v3588
    %v4282 = vunpack.c.l.b16 %v3589
    %v4283 = vunpack.c.l.b16 %v3590
    %v4284 = vunpack.c.h.b16 %v3590
    %v4285 = vunpack.c.l.b16 %v3591
    %v4286 = vunpack.c.h.b16 %v3591
    %v4287 = vunpack.c.l.b16 %v3592
    %v4288 = vunpack.c.h.b16 %v3592
    %v4289 = vunpack.c.l.b16 %v3593
    %v4290 = vunpack.c.l.b16 %v3594
    %v4291 = vunpack.c.h.b16 %v3594
    %v4292 = vunpack.c.l.b16 %v3595
    %v4293 = vunpack.c.h.b16 %v3595
    %v4294 = vunpack.c.l.b16 %v3596
    %v4295 = vunpack.c.h.b16 %v3596
    %v4296 = vunpack.c.l.b16 %v3597
    %v4297 = vunpack.c.l.b16 %v3598
    %v4298 = vunpack.c.h.b16 %v3598
    %v4299 = vunpack.c.l.b16 %v3599
    %v4300 = vunpack.c.h.b16 %v3599
    %v4301 = vunpack.c.l.b16 %v3600
    %v4302 = vunpack.c.h.b16 %v3600
    %v4303 = vunpack.c.l.b16 %v3601
    %v4304 = vunpack.c.l.b16 %v3602
    %v4305 = vunpack.c.h.b16 %v3602
    %v4306 = vunpack.c.l.b16 %v3603
    %v4307 = vunpack.c.h.b16 %v3603
    %v4308 = vunpack.c.l.b16 %v3604
    %v4309 = vunpack.c.h.b16 %v3604
    %v4310 = vunpack.c.l.b16 %v3605
    %v4311 = vunpack.c.l.b16 %v3606
    %v4312 = vunpack.c.h.b16 %v3606
    %v4313 = vunpack.c.l.b16 %v3607
    %v4314 = vunpack.c.h.b16 %v3607
    %v4315 = vunpack.c.l.b16 %v3608
    %v4316 = vunpack.c.h.b16 %v3608
    %v4317 = vunpack.c.l.b16 %v3609
    %v4318 = vunpack.c.l.b16 %v3610
    %v4319 = vunpack.c.h.b16 %v3610
    %v4320 = vunpack.c.l.b16 %v3611
    %v4321 = vunpack.c.h.b16 %v3611
    %v4322 = vunpack.c.l.b16 %v3612
    %v4323 = vunpack.c.h.b16 %v3612
    %v4324 = vunpack.c.l.b16 %v3613
    %v4325 = vunpack.c.l.b16 %v3614
    %v4326 = vunpack.c.h.b16 %v3614
    %v4327 = vunpack.c.l.b16 %v3615
    %v4328 = vunpack.c.h.b16 %v3615
    %v4329 = vunpack.c.l.b16 %v3616
    %v4330 = vunpack.c.h.b16 %v3616
    %v4331 = vunpack.c.l.b16 %v3617
    %v4332 = vunpack.c.l.b16 %v3618
    %v4333 = vunpack.c.h.b16 %v3618
    %v4334 = vunpack.c.l.b16 %v3619
    %v4335 = vunpack.c.h.b16 %v3619
    %v4336 = vunpack.c.l.b16 %v3620
    %v4337 = vunpack.c.h.b16 %v3620
    %v4338 = vunpack.c.l.b16 %v3621
    %v4339 = vunpack.c.l.b16 %v3622
    %v4340 = vunpack.c.h.b16 %v3622
    %v4341 = vunpack.c.l.b16 %v3623
    %v4342 = vunpack.c.h.b16 %v3623
    %v4343 = vunpack.c.l.b16 %v3624
    %v4344 = vunpack.c.h.b16 %v3624
    %v4345 = vunpack.c.l.b16 %v3625
    %v4346 = vpack.c.b16 %v3905, %v3898
    %v4347 = vpack.c.b16 %v3906, %v3899
    %v4348 = vpack.c.b16 %v3907, %v3900
    %v4349 = vpack.c.b16 %v3908, %v3901
    %v4350 = vpack.c.b16 %v3909, %v3902
    %v4351 = vpack.c.b16 %v3910, %v3903
    %v4352 = vpack.c.b16 %v3911, %v3904
    %v4353 = vpack.c.b16 %v3919, %v3912
    %v4354 = vpack.c.b16 %v3920, %v3913
    %v4355 = vpack.c.b16 %v3921, %v3914
    %v4356 = vpack.c.b16 %v3922, %v3915
    %v4357 = vpack.c.b16 %v3923, %v3916
    %v4358 = vpack.c.b16 %v3924, %v3917
    %v4359 = vpack.c.b16 %v3925, %v3918
    %v4360 = vpack.c.b16 %v3933, %v3926
    %v4361 = vpack.c.b16 %v3934, %v3927
    %v4362 = vpack.c.b16 %v3935, %v3928
    %v4363 = vpack.c.b16 %v3936, %v3929
    %v4364 = vpack.c.b16 %v3937, %v3930
    %v4365 = vpack.c.b16 %v3938, %v3931
    %v4366 = vpack.c.b16 %v3939, %v3932
    %v4367 = vpack.c.b16 %v3947, %v3940
    %v4368 = vpack.c.b16 %v3948, %v3941
    %v4369 = vpack.c.b16 %v3949, %v3942
    %v4370 = vpack.c.b16 %v3950, %v3943
    %v4371 = vpack.c.b16 %v3951, %v3944
    %v4372 = vpack.c.b16 %v3952, %v3945
    %v4373 = vpack.c.b16 %v3953, %v3946
    %v4374 = vpack.c.b16 %v3961, %v3954
    %v4375 = vpack.c.b16 %v3962, %v3955
    %v4376 = vpack.c.b16 %v3963, %v3956
    %v4377 = vpack.c.b16 %v3964, %v3957
    %v4378 = vpack.c.b16 %v3965, %v3958
    %v4379 = vpack.c.b16 %v3966, %v3959
    %v4380 = vpack.c.b16 %v3967, %v3960
    %v4381 = vpack.c.b16 %v3975, %v3968
    %v4382 = vpack.c.b16 %v3976, %v3969
    %v4383 = vpack.c.b16 %v3977, %v3970
    %v4384 = vpack.c.b16 %v3978, %v3971
    %v4385 = vpack.c.b16 %v3979, %v3972
    %v4386 = vpack.c.b16 %v3980, %v3973
    %v4387 = vpack.c.b16 %v3981, %v3974
    %v4388 = vpack.c.b16 %v3989, %v3982
    %v4389 = vpack.c.b16 %v3990, %v3983
    %v4390 = vpack.c.b16 %v3991, %v3984
    %v4391 = vpack.c.b16 %v3992, %v3985
    %v4392 = vpack.c.b16 %v3993, %v3986
    %v4393 = vpack.c.b16 %v3994, %v3987
    %v4394 = vpack.c.b16 %v3995, %v3988
    %v4395 = vpack.c.b16 %v4003, %v3996
    %v4396 = vpack.c.b16 %v4004, %v3997
    %v4397 = vpack.c.b16 %v4005, %v3998
    %v4398 = vpack.c.b16 %v4006, %v3999
    %v4399 = vpack.c.b16 %v4007, %v4000
    %v4400 = vpack.c.b16 %v4008, %v4001
    %v4401 = vpack.c.b16 %v4009, %v4002
    %v4402 = vpack.c.b16 %v4017, %v4010
    %v4403 = vpack.c.b16 %v4018, %v4011
    %v4404 = vpack.c.b16 %v4019, %v4012
    %v4405 = vpack.c.b16 %v4020, %v4013
    %v4406 = vpack.c.b16 %v4021, %v4014
    %v4407 = vpack.c.b16 %v4022, %v4015
    %v4408 = vpack.c.b16 %v4023, %v4016
    %v4409 = vpack.c.b16 %v4031, %v4024
    %v4410 = vpack.c.b16 %v4032, %v4025
    %v4411 = vpack.c.b16 %v4033, %v4026
    %v4412 = vpack.c.b16 %v4034, %v4027
    %v4413 = vpack.c.b16 %v4035, %v4028
    %v4414 = vpack.c.b16 %v4036, %v4029
    %v4415 = vpack.c.b16 %v4037, %v4030
    %v4416 = vpack.c.b16 %v4045, %v4038
    %v4417 = vpack.c.b16 %v4046, %v4039
    %v4418 = vpack.c.b16 %v4047, %v4040
    %v4419 = vpack.c.b16 %v4048, %v4041
    %v4420 = vpack.c.b16 %v4049, %v4042
    %v4421 = vpack.c.b16 %v4050, %v4043
    %v4422 = vpack.c.b16 %v4051, %v4044
    %v4423 = vpack.c.b16 %v4059, %v4052
    %v4424 = vpack.c.b16 %v4060, %v4053
    %v4425 = vpack.c.b16 %v4061, %v4054
    %v4426 = vpack.c.b16 %v4062, %v4055
    %v4427 = vpack.c.b16 %v4063, %v4056
    %v4428 = vpack.c.b16 %v4064, %v4057
    %v4429 = vpack.c.b16 %v4065, %v4058
    %v4430 = vpack.c.b16 %v4073, %v4066
    %v4431 = vpack.c.b16 %v4074, %v4067
    %v4432 = vpack.c.b16 %v4075, %v4068
    %v4433 = vpack.c.b16 %v4076, %v4069
    %v4434 = vpack.c.b16 %v4077, %v4070
    %v4435 = vpack.c.b16 %v4078, %v4071
    %v4436 = vpack.c.b16 %v4079, %v4072
    %v4437 = vpack.c.b16 %v4087, %v4080
    %v4438 = vpack.c.b16 %v4088, %v4081
    %v4439 = vpack.c.b16 %v4089, %v4082
    %v4440 = vpack.c.b16 %v4090, %v4083
    %v4441 = vpack.c.b16 %v4091, %v4084
    %v4442 = vpack.c.b16 %v4092, %v4085
    %v4443 = vpack.c.b16 %v4093, %v4086
    %v4444 = vpack.c.b16 %v4101, %v4094
    %v4445 = vpack.c.b16 %v4102, %v4095
    %v4446 = vpack.c.b16 %v4103, %v4096
    %v4447 = vpack.c.b16 %v4104, %v4097
    %v4448 = vpack.c.b16 %v4105, %v4098
    %v4449 = vpack.c.b16 %v4106, %v4099
    %v4450 = vpack.c.b16 %v4107, %v4100
    %v4451 = vpack.c.b16 %v4115, %v4108
    %v4452 = vpack.c.b16 %v4116, %v4109
    %v4453 = vpack.c.b16 %v4117, %v4110
    %v4454 = vpack.c.b16 %v4118, %v4111
    %v4455 = vpack.c.b16 %v4119, %v4112
    %v4456 = vpack.c.b16 %v4120, %v4113
    %v4457 = vpack.c.b16 %v4121, %v4114
    %v4458 = vpack.c.b16 %v4129, %v4122
    %v4459 = vpack.c.b16 %v4130, %v4123
    %v4460 = vpack.c.b16 %v4131, %v4124
    %v4461 = vpack.c.b16 %v4132, %v4125
    %v4462 = vpack.c.b16 %v4133, %v4126
    %v4463 = vpack.c.b16 %v4134, %v4127
    %v4464 = vpack.c.b16 %v4135, %v4128
    %v4465 = vpack.c.b16 %v4143, %v4136
    %v4466 = vpack.c.b16 %v4144, %v4137
    %v4467 = vpack.c.b16 %v4145, %v4138
    %v4468 = vpack.c.b16 %v4146, %v4139
    %v4469 = vpack.c.b16 %v4147, %v4140
    %v4470 = vpack.c.b16 %v4148, %v4141
    %v4471 = vpack.c.b16 %v4149, %v4142
    %v4472 = vpack.c.b16 %v4157, %v4150
    %v4473 = vpack.c.b16 %v4158, %v4151
    %v4474 = vpack.c.b16 %v4159, %v4152
    %v4475 = vpack.c.b16 %v4160, %v4153
    %v4476 = vpack.c.b16 %v4161, %v4154
    %v4477 = vpack.c.b16 %v4162, %v4155
    %v4478 = vpack.c.b16 %v4163, %v4156
    %v4479 = vpack.c.b16 %v4171, %v4164
    %v4480 = vpack.c.b16 %v4172, %v4165
    %v4481 = vpack.c.b16 %v4173, %v4166
    %v4482 = vpack.c.b16 %v4174, %v4167
    %v4483 = vpack.c.b16 %v4175, %v4168
    %v4484 = vpack.c.b16 %v4176, %v4169
    %v4485 = vpack.c.b16 %v4177, %v4170
    %v4486 = vpack.c.b16 %v4185, %v4178
    %v4487 = vpack.c.b16 %v4186, %v4179
    %v4488 = vpack.c.b16 %v4187, %v4180
    %v4489 = vpack.c.b16 %v4188, %v4181
    %v4490 = vpack.c.b16 %v4189, %v4182
    %v4491 = vpack.c.b16 %v4190, %v4183
    %v4492 = vpack.c.b16 %v4191, %v4184
    %v4493 = vpack.c.b16 %v4199, %v4192
    %v4494 = vpack.c.b16 %v4200, %v4193
    %v4495 = vpack.c.b16 %v4201, %v4194
    %v4496 = vpack.c.b16 %v4202, %v4195
    %v4497 = vpack.c.b16 %v4203, %v4196
    %v4498 = vpack.c.b16 %v4204, %v4197
    %v4499 = vpack.c.b16 %v4205, %v4198
    %v4500 = vpack.c.b16 %v4213, %v4206
    %v4501 = vpack.c.b16 %v4214, %v4207
    %v4502 = vpack.c.b16 %v4215, %v4208
    %v4503 = vpack.c.b16 %v4216, %v4209
    %v4504 = vpack.c.b16 %v4217, %v4210
    %v4505 = vpack.c.b16 %v4218, %v4211
    %v4506 = vpack.c.b16 %v4219, %v4212
    %v4507 = vpack.c.b16 %v4227, %v4220
    %v4508 = vpack.c.b16 %v4228, %v4221
    %v4509 = vpack.c.b16 %v4229, %v4222
    %v4510 = vpack.c.b16 %v4230, %v4223
    %v4511 = vpack.c.b16 %v4231, %v4224
    %v4512 = vpack.c.b16 %v4232, %v4225
    %v4513 = vpack.c.b16 %v4233, %v4226
    %v4514 = vpack.c.b16 %v4241, %v4234
    %v4515 = vpack.c.b16 %v4242, %v4235
    %v4516 = vpack.c.b16 %v4243, %v4236
    %v4517 = vpack.c.b16 %v4244, %v4237
    %v4518 = vpack.c.b16 %v4245, %v4238
    %v4519 = vpack.c.b16 %v4246, %v4239
    %v4520 = vpack.c.b16 %v4247, %v4240
    %v4521 = vpack.c.b16 %v4255, %v4248
    %v4522 = vpack.c.b16 %v4256, %v4249
    %v4523 = vpack.c.b16 %v4257, %v4250
    %v4524 = vpack.c.b16 %v4258, %v4251
    %v4525 = vpack.c.b16 %v4259, %v4252
    %v4526 = vpack.c.b16 %v4260, %v4253
    %v4527 = vpack.c.b16 %v4261, %v4254
    %v4528 = vpack.c.b16 %v4269, %v4262
    %v4529 = vpack.c.b16 %v4270, %v4263
    %v4530 = vpack.c.b16 %v4271, %v4264
    %v4531 = vpack.c.b16 %v4272, %v4265
    %v4532 = vpack.c.b16 %v4273, %v4266
    %v4533 = vpack.c.b16 %v4274, %v4267
    %v4534 = vpack.c.b16 %v4275, %v4268
    %v4535 = vpack.c.b16 %v4283, %v4276
    %v4536 = vpack.c.b16 %v4284, %v4277
    %v4537 = vpack.c.b16 %v4285, %v4278
    %v4538 = vpack.c.b16 %v4286, %v4279
    %v4539 = vpack.c.b16 %v4287, %v4280
    %v4540 = vpack.c.b16 %v4288, %v4281
    %v4541 = vpack.c.b16 %v4289, %v4282
    %v4542 = vpack.c.b16 %v4297, %v4290
    %v4543 = vpack.c.b16 %v4298, %v4291
    %v4544 = vpack.c.b16 %v4299, %v4292
    %v4545 = vpack.c.b16 %v4300, %v4293
    %v4546 = vpack.c.b16 %v4301, %v4294
    %v4547 = vpack.c.b16 %v4302, %v4295
    %v4548 = vpack.c.b16 %v4303, %v4296
    %v4549 = vpack.c.b16 %v4311, %v4304
    %v4550 = vpack.c.b16 %v4312, %v4305
    %v4551 = vpack.c.b16 %v4313, %v4306
    %v4552 = vpack.c.b16 %v4314, %v4307
    %v4553 = vpack.c.b16 %v4315, %v4308
    %v4554 = vpack.c.b16 %v4316, %v4309
    %v4555 = vpack.c.b16 %v4317, %v4310
    %v4556 = vpack.c.b16 %v4325, %v4318
    %v4557 = vpack.c.b16 %v4326, %v4319
    %v4558 = vpack.c.b16 %v4327, %v4320
    %v4559 = vpack.c.b16 %v4328, %v4321
    %v4560 = vpack.c.b16 %v4329, %v4322
    %v4561 = vpack.c.b16 %v4330, %v4323
    %v4562 = vpack.c.b16 %v4331, %v4324
    %v4563 = vpack.c.b16 %v4339, %v4332
    %v4564 = vpack.c.b16 %v4340, %v4333
    %v4565 = vpack.c.b16 %v4341, %v4334
    %v4566 = vpack.c.b16 %v4342, %v4335
    %v4567 = vpack.c.b16 %v4343, %v4336
    %v4568 = vpack.c.b16 %v4344, %v4337
    %v4569 = vpack.c.b16 %v4345, %v4338
    %4794 = vmatpush.bf16.msra.mxu0 %v4395
    %4795 = vmatpush.bf16.msra.mxu0 %v4388
    %4796 = vmatpush.bf16.msra.mxu0 %v4381
    %4797 = vmatpush.bf16.msra.mxu0 %v4374
    %4798 = vmatpush.bf16.msra.mxu0 %v4367
    %4799 = vmatpush.bf16.msra.mxu0 %v4360
    %4800 = vmatpush.bf16.msra.mxu0 %v4353
    %4801 = vmatpush.bf16.msra.mxu0 %v4346
    %4802 = vmatmul.bf16.gmra.mxu0 %v3366
    %v4803 = vpop.f32.mrf.mxu0
    %v4804 = vadd.f32 %v3628, %v4803
    %v4805 = vpop.f32.mrf.mxu0
    %4806 = vdwg.mxu0
    %4807 = vmatpush.bf16.msra.mxu0 %v4451
    %4808 = vmatpush.bf16.msra.mxu0 %v4444
    %4809 = vmatpush.bf16.msra.mxu0 %v4437
    %4810 = vmatpush.bf16.msra.mxu0 %v4430
    %4811 = vmatpush.bf16.msra.mxu0 %v4423
    %4812 = vmatpush.bf16.msra.mxu0 %v4416
    %4813 = vmatpush.bf16.msra.mxu0 %v4409
    %4814 = vmatpush.bf16.msra.mxu0 %v4402
    %4815 = vmatmul.bf16.gmra.mxu0 %v3367
    %v4816 = vpop.f32.mrf.mxu0
    %v4817 = vadd.f32 %v4804, %v4816
    %v4818 = vpop.f32.mrf.mxu0
    %4819 = vdwg.mxu0
    %4820 = vmatpush.bf16.msra.mxu0 %v4507
    %4821 = vmatpush.bf16.msra.mxu0 %v4500
    %4822 = vmatpush.bf16.msra.mxu0 %v4493
    %4823 = vmatpush.bf16.msra.mxu0 %v4486
    %4824 = vmatpush.bf16.msra.mxu0 %v4479
    %4825 = vmatpush.bf16.msra.mxu0 %v4472
    %4826 = vmatpush.bf16.msra.mxu0 %v4465
    %4827 = vmatpush.bf16.msra.mxu0 %v4458
    %4828 = vmatmul.bf16.gmra.mxu0 %v3368
    %v4829 = vpop.f32.mrf.mxu0
    %v4830 = vadd.f32 %v4817, %v4829
    %v4831 = vpop.f32.mrf.mxu0
    %4832 = vdwg.mxu0
    %4833 = vmatpush.bf16.msra.mxu0 %v4563
    %4834 = vmatpush.bf16.msra.mxu0 %v4556
    %4835 = vmatpush.bf16.msra.mxu0 %v4549
    %4836 = vmatpush.bf16.msra.mxu0 %v4542
    %4837 = vmatpush.bf16.msra.mxu0 %v4535
    %4838 = vmatpush.bf16.msra.mxu0 %v4528
    %4839 = vmatpush.bf16.msra.mxu0 %v4521
    %4840 = vmatpush.bf16.msra.mxu0 %v4514
    %4841 = vmatmul.bf16.gmra.mxu0 %v3369
    %v4842 = vpop.f32.mrf.mxu0
    %v4843 = vadd.f32 %v4830, %v4842
    %v4844 = vpop.f32.mrf.mxu0
    %4845 = vdwg.mxu0
    %4846 = vmatpush.bf16.msra.mxu0 %v4396
    %4847 = vmatpush.bf16.msra.mxu0 %v4389
    %4848 = vmatpush.bf16.msra.mxu0 %v4382
    %4849 = vmatpush.bf16.msra.mxu0 %v4375
    %4850 = vmatpush.bf16.msra.mxu0 %v4368
    %4851 = vmatpush.bf16.msra.mxu0 %v4361
    %4852 = vmatpush.bf16.msra.mxu0 %v4354
    %4853 = vmatpush.bf16.msra.mxu0 %v4347
    %4854 = vmatmul.bf16.gmra.mxu0 %v3366
    %v4855 = vpop.f32.mrf.mxu0
    %v4856 = vadd.f32 %v3629, %v4855
    %v4857 = vpop.f32.mrf.mxu0
    %4858 = vdwg.mxu0
    %4859 = vmatpush.bf16.msra.mxu0 %v4452
    %4860 = vmatpush.bf16.msra.mxu0 %v4445
    %4861 = vmatpush.bf16.msra.mxu0 %v4438
    %4862 = vmatpush.bf16.msra.mxu0 %v4431
    %4863 = vmatpush.bf16.msra.mxu0 %v4424
    %4864 = vmatpush.bf16.msra.mxu0 %v4417
    %4865 = vmatpush.bf16.msra.mxu0 %v4410
    %4866 = vmatpush.bf16.msra.mxu0 %v4403
    %4867 = vmatmul.bf16.gmra.mxu0 %v3367
    %v4868 = vpop.f32.mrf.mxu0
    %v4869 = vadd.f32 %v4856, %v4868
    %v4870 = vpop.f32.mrf.mxu0
    %4871 = vdwg.mxu0
    %4872 = vmatpush.bf16.msra.mxu0 %v4508
    %4873 = vmatpush.bf16.msra.mxu0 %v4501
    %4874 = vmatpush.bf16.msra.mxu0 %v4494
    %4875 = vmatpush.bf16.msra.mxu0 %v4487
    %4876 = vmatpush.bf16.msra.mxu0 %v4480
    %4877 = vmatpush.bf16.msra.mxu0 %v4473
    %4878 = vmatpush.bf16.msra.mxu0 %v4466
    %4879 = vmatpush.bf16.msra.mxu0 %v4459
    %4880 = vmatmul.bf16.gmra.mxu0 %v3368
    %v4881 = vpop.f32.mrf.mxu0
    %v4882 = vadd.f32 %v4869, %v4881
    %v4883 = vpop.f32.mrf.mxu0
    %4884 = vdwg.mxu0
    %4885 = vmatpush.bf16.msra.mxu0 %v4564
    %4886 = vmatpush.bf16.msra.mxu0 %v4557
    %4887 = vmatpush.bf16.msra.mxu0 %v4550
    %4888 = vmatpush.bf16.msra.mxu0 %v4543
    %4889 = vmatpush.bf16.msra.mxu0 %v4536
    %4890 = vmatpush.bf16.msra.mxu0 %v4529
    %4891 = vmatpush.bf16.msra.mxu0 %v4522
    %4892 = vmatpush.bf16.msra.mxu0 %v4515
    %4893 = vmatmul.bf16.gmra.mxu0 %v3369
    %v4894 = vpop.f32.mrf.mxu0
    %v4895 = vadd.f32 %v4882, %v4894
    %v4896 = vpop.f32.mrf.mxu0
    %4897 = vdwg.mxu0
    %4898 = vmatpush.bf16.msra.mxu0 %v4397
    %4899 = vmatpush.bf16.msra.mxu0 %v4390
    %4900 = vmatpush.bf16.msra.mxu0 %v4383
    %4901 = vmatpush.bf16.msra.mxu0 %v4376
    %4902 = vmatpush.bf16.msra.mxu0 %v4369
    %4903 = vmatpush.bf16.msra.mxu0 %v4362
    %4904 = vmatpush.bf16.msra.mxu0 %v4355
    %4905 = vmatpush.bf16.msra.mxu0 %v4348
    %4906 = vmatmul.bf16.gmra.mxu0 %v3366
    %v4907 = vpop.f32.mrf.mxu0
    %v4908 = vadd.f32 %v3630, %v4907
    %v4909 = vpop.f32.mrf.mxu0
    %4910 = vdwg.mxu0
    %4911 = vmatpush.bf16.msra.mxu0 %v4453
    %4912 = vmatpush.bf16.msra.mxu0 %v4446
    %4913 = vmatpush.bf16.msra.mxu0 %v4439
    %4914 = vmatpush.bf16.msra.mxu0 %v4432
    %4915 = vmatpush.bf16.msra.mxu0 %v4425
    %4916 = vmatpush.bf16.msra.mxu0 %v4418
    %4917 = vmatpush.bf16.msra.mxu0 %v4411
    %4918 = vmatpush.bf16.msra.mxu0 %v4404
    %4919 = vmatmul.bf16.gmra.mxu0 %v3367
    %v4920 = vpop.f32.mrf.mxu0
    %v4921 = vadd.f32 %v4908, %v4920
    %v4922 = vpop.f32.mrf.mxu0
    %4923 = vdwg.mxu0
    %4924 = vmatpush.bf16.msra.mxu0 %v4509
    %4925 = vmatpush.bf16.msra.mxu0 %v4502
    %4926 = vmatpush.bf16.msra.mxu0 %v4495
    %4927 = vmatpush.bf16.msra.mxu0 %v4488
    %4928 = vmatpush.bf16.msra.mxu0 %v4481
    %4929 = vmatpush.bf16.msra.mxu0 %v4474
    %4930 = vmatpush.bf16.msra.mxu0 %v4467
    %4931 = vmatpush.bf16.msra.mxu0 %v4460
    %4932 = vmatmul.bf16.gmra.mxu0 %v3368
    %v4933 = vpop.f32.mrf.mxu0
    %v4934 = vadd.f32 %v4921, %v4933
    %v4935 = vpop.f32.mrf.mxu0
    %4936 = vdwg.mxu0
    %4937 = vmatpush.bf16.msra.mxu0 %v4565
    %4938 = vmatpush.bf16.msra.mxu0 %v4558
    %4939 = vmatpush.bf16.msra.mxu0 %v4551
    %4940 = vmatpush.bf16.msra.mxu0 %v4544
    %4941 = vmatpush.bf16.msra.mxu0 %v4537
    %4942 = vmatpush.bf16.msra.mxu0 %v4530
    %4943 = vmatpush.bf16.msra.mxu0 %v4523
    %4944 = vmatpush.bf16.msra.mxu0 %v4516
    %4945 = vmatmul.bf16.gmra.mxu0 %v3369
    %v4946 = vpop.f32.mrf.mxu0
    %v4947 = vadd.f32 %v4934, %v4946
    %v4948 = vpop.f32.mrf.mxu0
    %4949 = vdwg.mxu0
    %4950 = vmatpush.bf16.msra.mxu0 %v4398
    %4951 = vmatpush.bf16.msra.mxu0 %v4391
    %4952 = vmatpush.bf16.msra.mxu0 %v4384
    %4953 = vmatpush.bf16.msra.mxu0 %v4377
    %4954 = vmatpush.bf16.msra.mxu0 %v4370
    %4955 = vmatpush.bf16.msra.mxu0 %v4363
    %4956 = vmatpush.bf16.msra.mxu0 %v4356
    %4957 = vmatpush.bf16.msra.mxu0 %v4349
    %4958 = vmatmul.bf16.gmra.mxu0 %v3366
    %v4959 = vpop.f32.mrf.mxu0
    %v4960 = vadd.f32 %v3631, %v4959
    %v4961 = vpop.f32.mrf.mxu0
    %4962 = vdwg.mxu0
    %4963 = vmatpush.bf16.msra.mxu0 %v4454
    %4964 = vmatpush.bf16.msra.mxu0 %v4447
    %4965 = vmatpush.bf16.msra.mxu0 %v4440
    %4966 = vmatpush.bf16.msra.mxu0 %v4433
    %4967 = vmatpush.bf16.msra.mxu0 %v4426
    %4968 = vmatpush.bf16.msra.mxu0 %v4419
    %4969 = vmatpush.bf16.msra.mxu0 %v4412
    %4970 = vmatpush.bf16.msra.mxu0 %v4405
    %4971 = vmatmul.bf16.gmra.mxu0 %v3367
    %v4972 = vpop.f32.mrf.mxu0
    %v4973 = vadd.f32 %v4960, %v4972
    %v4974 = vpop.f32.mrf.mxu0
    %4975 = vdwg.mxu0
    %4976 = vmatpush.bf16.msra.mxu0 %v4510
    %4977 = vmatpush.bf16.msra.mxu0 %v4503
    %4978 = vmatpush.bf16.msra.mxu0 %v4496
    %4979 = vmatpush.bf16.msra.mxu0 %v4489
    %4980 = vmatpush.bf16.msra.mxu0 %v4482
    %4981 = vmatpush.bf16.msra.mxu0 %v4475
    %4982 = vmatpush.bf16.msra.mxu0 %v4468
    %4983 = vmatpush.bf16.msra.mxu0 %v4461
    %4984 = vmatmul.bf16.gmra.mxu0 %v3368
    %v4985 = vpop.f32.mrf.mxu0
    %v4986 = vadd.f32 %v4973, %v4985
    %v4987 = vpop.f32.mrf.mxu0
    %4988 = vdwg.mxu0
    %4989 = vmatpush.bf16.msra.mxu0 %v4566
    %4990 = vmatpush.bf16.msra.mxu0 %v4559
    %4991 = vmatpush.bf16.msra.mxu0 %v4552
    %4992 = vmatpush.bf16.msra.mxu0 %v4545
    %4993 = vmatpush.bf16.msra.mxu0 %v4538
    %4994 = vmatpush.bf16.msra.mxu0 %v4531
    %4995 = vmatpush.bf16.msra.mxu0 %v4524
    %4996 = vmatpush.bf16.msra.mxu0 %v4517
    %4997 = vmatmul.bf16.gmra.mxu0 %v3369
    %v4998 = vpop.f32.mrf.mxu0
    %v4999 = vadd.f32 %v4986, %v4998
    %v5000 = vpop.f32.mrf.mxu0
    %5001 = vdwg.mxu0
    %5002 = vmatpush.bf16.msra.mxu0 %v4399
    %5003 = vmatpush.bf16.msra.mxu0 %v4392
    %5004 = vmatpush.bf16.msra.mxu0 %v4385
    %5005 = vmatpush.bf16.msra.mxu0 %v4378
    %5006 = vmatpush.bf16.msra.mxu0 %v4371
    %5007 = vmatpush.bf16.msra.mxu0 %v4364
    %5008 = vmatpush.bf16.msra.mxu0 %v4357
    %5009 = vmatpush.bf16.msra.mxu0 %v4350
    %5010 = vmatmul.bf16.gmra.mxu0 %v3366
    %v5011 = vpop.f32.mrf.mxu0
    %v5012 = vadd.f32 %v3632, %v5011
    %v5013 = vpop.f32.mrf.mxu0
    %5014 = vdwg.mxu0
    %5015 = vmatpush.bf16.msra.mxu0 %v4455
    %5016 = vmatpush.bf16.msra.mxu0 %v4448
    %5017 = vmatpush.bf16.msra.mxu0 %v4441
    %5018 = vmatpush.bf16.msra.mxu0 %v4434
    %5019 = vmatpush.bf16.msra.mxu0 %v4427
    %5020 = vmatpush.bf16.msra.mxu0 %v4420
    %5021 = vmatpush.bf16.msra.mxu0 %v4413
    %5022 = vmatpush.bf16.msra.mxu0 %v4406
    %5023 = vmatmul.bf16.gmra.mxu0 %v3367
    %v5024 = vpop.f32.mrf.mxu0
    %v5025 = vadd.f32 %v5012, %v5024
    %v5026 = vpop.f32.mrf.mxu0
    %5027 = vdwg.mxu0
    %5028 = vmatpush.bf16.msra.mxu0 %v4511
    %5029 = vmatpush.bf16.msra.mxu0 %v4504
    %5030 = vmatpush.bf16.msra.mxu0 %v4497
    %5031 = vmatpush.bf16.msra.mxu0 %v4490
    %5032 = vmatpush.bf16.msra.mxu0 %v4483
    %5033 = vmatpush.bf16.msra.mxu0 %v4476
    %5034 = vmatpush.bf16.msra.mxu0 %v4469
    %5035 = vmatpush.bf16.msra.mxu0 %v4462
    %5036 = vmatmul.bf16.gmra.mxu0 %v3368
    %v5037 = vpop.f32.mrf.mxu0
    %v5038 = vadd.f32 %v5025, %v5037
    %v5039 = vpop.f32.mrf.mxu0
    %5040 = vdwg.mxu0
    %5041 = vmatpush.bf16.msra.mxu0 %v4567
    %5042 = vmatpush.bf16.msra.mxu0 %v4560
    %5043 = vmatpush.bf16.msra.mxu0 %v4553
    %5044 = vmatpush.bf16.msra.mxu0 %v4546
    %5045 = vmatpush.bf16.msra.mxu0 %v4539
    %5046 = vmatpush.bf16.msra.mxu0 %v4532
    %5047 = vmatpush.bf16.msra.mxu0 %v4525
    %5048 = vmatpush.bf16.msra.mxu0 %v4518
    %5049 = vmatmul.bf16.gmra.mxu0 %v3369
    %v5050 = vpop.f32.mrf.mxu0
    %v5051 = vadd.f32 %v5038, %v5050
    %v5052 = vpop.f32.mrf.mxu0
    %5053 = vdwg.mxu0
    %5054 = vmatpush.bf16.msra.mxu0 %v4400
    %5055 = vmatpush.bf16.msra.mxu0 %v4393
    %5056 = vmatpush.bf16.msra.mxu0 %v4386
    %5057 = vmatpush.bf16.msra.mxu0 %v4379
    %5058 = vmatpush.bf16.msra.mxu0 %v4372
    %5059 = vmatpush.bf16.msra.mxu0 %v4365
    %5060 = vmatpush.bf16.msra.mxu0 %v4358
    %5061 = vmatpush.bf16.msra.mxu0 %v4351
    %5062 = vmatmul.bf16.gmra.mxu0 %v3366
    %v5063 = vpop.f32.mrf.mxu0
    %v5064 = vadd.f32 %v3633, %v5063
    %v5065 = vpop.f32.mrf.mxu0
    %5066 = vdwg.mxu0
    %5067 = vmatpush.bf16.msra.mxu0 %v4456
    %5068 = vmatpush.bf16.msra.mxu0 %v4449
    %5069 = vmatpush.bf16.msra.mxu0 %v4442
    %5070 = vmatpush.bf16.msra.mxu0 %v4435
    %5071 = vmatpush.bf16.msra.mxu0 %v4428
    %5072 = vmatpush.bf16.msra.mxu0 %v4421
    %5073 = vmatpush.bf16.msra.mxu0 %v4414
    %5074 = vmatpush.bf16.msra.mxu0 %v4407
    %5075 = vmatmul.bf16.gmra.mxu0 %v3367
    %v5076 = vpop.f32.mrf.mxu0
    %v5077 = vadd.f32 %v5064, %v5076
    %v5078 = vpop.f32.mrf.mxu0
    %5079 = vdwg.mxu0
    %5080 = vmatpush.bf16.msra.mxu0 %v4512
    %5081 = vmatpush.bf16.msra.mxu0 %v4505
    %5082 = vmatpush.bf16.msra.mxu0 %v4498
    %5083 = vmatpush.bf16.msra.mxu0 %v4491
    %5084 = vmatpush.bf16.msra.mxu0 %v4484
    %5085 = vmatpush.bf16.msra.mxu0 %v4477
    %5086 = vmatpush.bf16.msra.mxu0 %v4470
    %5087 = vmatpush.bf16.msra.mxu0 %v4463
    %5088 = vmatmul.bf16.gmra.mxu0 %v3368
    %v5089 = vpop.f32.mrf.mxu0
    %v5090 = vadd.f32 %v5077, %v5089
    %v5091 = vpop.f32.mrf.mxu0
    %5092 = vdwg.mxu0
    %5093 = vmatpush.bf16.msra.mxu0 %v4568
    %5094 = vmatpush.bf16.msra.mxu0 %v4561
    %5095 = vmatpush.bf16.msra.mxu0 %v4554
    %5096 = vmatpush.bf16.msra.mxu0 %v4547
    %5097 = vmatpush.bf16.msra.mxu0 %v4540
    %5098 = vmatpush.bf16.msra.mxu0 %v4533
    %5099 = vmatpush.bf16.msra.mxu0 %v4526
    %5100 = vmatpush.bf16.msra.mxu0 %v4519
    %5101 = vmatmul.bf16.gmra.mxu0 %v3369
    %v5102 = vpop.f32.mrf.mxu0
    %v5103 = vadd.f32 %v5090, %v5102
    %v5104 = vpop.f32.mrf.mxu0
    %5105 = vdwg.mxu0
    %5106 = vmatpush.bf16.msra.mxu0 %v4401
    %5107 = vmatpush.bf16.msra.mxu0 %v4394
    %5108 = vmatpush.bf16.msra.mxu0 %v4387
    %5109 = vmatpush.bf16.msra.mxu0 %v4380
    %5110 = vmatpush.bf16.msra.mxu0 %v4373
    %5111 = vmatpush.bf16.msra.mxu0 %v4366
    %5112 = vmatpush.bf16.msra.mxu0 %v4359
    %5113 = vmatpush.bf16.msra.mxu0 %v4352
    %5114 = vmatmul.bf16.gmra.mxu0 %v3366
    %v5115 = vpop.f32.mrf.mxu0
    %v5116 = vadd.f32 %v3634, %v5115
    %v5117 = vpop.f32.mrf.mxu0
    %5118 = vdwg.mxu0
    %5119 = vmatpush.bf16.msra.mxu0 %v4457
    %5120 = vmatpush.bf16.msra.mxu0 %v4450
    %5121 = vmatpush.bf16.msra.mxu0 %v4443
    %5122 = vmatpush.bf16.msra.mxu0 %v4436
    %5123 = vmatpush.bf16.msra.mxu0 %v4429
    %5124 = vmatpush.bf16.msra.mxu0 %v4422
    %5125 = vmatpush.bf16.msra.mxu0 %v4415
    %5126 = vmatpush.bf16.msra.mxu0 %v4408
    %5127 = vmatmul.bf16.gmra.mxu0 %v3367
    %v5128 = vpop.f32.mrf.mxu0
    %v5129 = vadd.f32 %v5116, %v5128
    %v5130 = vpop.f32.mrf.mxu0
    %5131 = vdwg.mxu0
    %5132 = vmatpush.bf16.msra.mxu0 %v4513
    %5133 = vmatpush.bf16.msra.mxu0 %v4506
    %5134 = vmatpush.bf16.msra.mxu0 %v4499
    %5135 = vmatpush.bf16.msra.mxu0 %v4492
    %5136 = vmatpush.bf16.msra.mxu0 %v4485
    %5137 = vmatpush.bf16.msra.mxu0 %v4478
    %5138 = vmatpush.bf16.msra.mxu0 %v4471
    %5139 = vmatpush.bf16.msra.mxu0 %v4464
    %5140 = vmatmul.bf16.gmra.mxu0 %v3368
    %v5141 = vpop.f32.mrf.mxu0
    %v5142 = vadd.f32 %v5129, %v5141
    %v5143 = vpop.f32.mrf.mxu0
    %5144 = vdwg.mxu0
    %5145 = vmatpush.bf16.msra.mxu0 %v4569
    %5146 = vmatpush.bf16.msra.mxu0 %v4562
    %5147 = vmatpush.bf16.msra.mxu0 %v4555
    %5148 = vmatpush.bf16.msra.mxu0 %v4548
    %5149 = vmatpush.bf16.msra.mxu0 %v4541
    %5150 = vmatpush.bf16.msra.mxu0 %v4534
    %5151 = vmatpush.bf16.msra.mxu0 %v4527
    %5152 = vmatpush.bf16.msra.mxu0 %v4520
    %5153 = vmatmul.bf16.gmra.mxu0 %v3369
    %v5154 = vpop.f32.mrf.mxu0
    %v5155 = vadd.f32 %v5142, %v5154
    %v5156 = vpop.f32.mrf.mxu0
    %5157 = vdwg.mxu0
    %v5158 = vxor.u32 %v4843, 2147483648
    %v5159 = vxor.u32 %v4895, 2147483648
    %v5160 = vxor.u32 %v4947, 2147483648
    %v5161 = vxor.u32 %v4999, 2147483648
    %v5162 = vxor.u32 %v5051, 2147483648
    %v5163 = vxor.u32 %v5103, 2147483648
    %v5164 = vxor.u32 %v5155, 2147483648
    %v5165 = vmul.f32 %v5158, 1.442695
    %v5166 = vpow.pop %v5165
    %v5167 = vmul.f32 %v5159, 1.442695
    %v5168 = vpow.pop %v5167
    %v5169 = vmul.f32 %v5160, 1.442695
    %v5170 = vpow.pop %v5169
    %v5171 = vmul.f32 %v5161, 1.442695
    %v5172 = vpow.pop %v5171
    %v5173 = vmul.f32 %v5162, 1.442695
    %v5174 = vpow.pop %v5173
    %v5175 = vmul.f32 %v5163, 1.442695
    %v5176 = vpow.pop %v5175
    %v5177 = vmul.f32 %v5164, 1.442695
    %v5178 = vpow.pop %v5177
    %v5179 = vadd.f32 %v5166, 1.0
    %v5180 = vadd.f32 %v5168, 1.0
    %v5181 = vadd.f32 %v5170, 1.0
    %v5182 = vadd.f32 %v5172, 1.0
    %v5183 = vadd.f32 %v5174, 1.0
    %v5184 = vadd.f32 %v5176, 1.0
    %v5185 = vadd.f32 %v5178, 1.0
    %v5186 = vrcp.pop %v5179
    %v5187 = vmul.f32 %v5179, %v5186
    %v5188 = vsub.f32 1.0, %v5187
    %v5189 = vmul.f32 %v5186, %v5188
    %v5190 = vadd.f32 %v5186, %v5189
    %vm5191 = vweird.f32 %v5179
    %vm5192 = vweird.f32 %v5186
    %vm5193 = vmor %vm5191, %vm5192
    %v5194 = vsel %vm5193, %v5186, %v5190
    %v5195 = vand.u32 2147483647, %v5179
    %vm5196 = vcmp.eq.f32.partialorder %v5195, 8.507059e+37
    %v5197 = vand.u32 %v5179, 2147483648
    %v5198 = vor.u32 1.1754944e-38, %v5197
    %v5199 = vsel %vm5196, %v5198, %v5194
    %v5200 = vmul.f32 1.0, %v5199
    %v5201 = vrcp.pop %v5180
    %v5202 = vmul.f32 %v5180, %v5201
    %v5203 = vsub.f32 1.0, %v5202
    %v5204 = vmul.f32 %v5201, %v5203
    %v5205 = vadd.f32 %v5201, %v5204
    %vm5206 = vweird.f32 %v5180
    %vm5207 = vweird.f32 %v5201
    %vm5208 = vmor %vm5206, %vm5207
    %v5209 = vsel %vm5208, %v5201, %v5205
    %v5210 = vand.u32 2147483647, %v5180
    %vm5211 = vcmp.eq.f32.partialorder %v5210, 8.507059e+37
    %v5212 = vand.u32 %v5180, 2147483648
    %v5213 = vor.u32 1.1754944e-38, %v5212
    %v5214 = vsel %vm5211, %v5213, %v5209
    %v5215 = vmul.f32 1.0, %v5214
    %v5216 = vrcp.pop %v5181
    %v5217 = vmul.f32 %v5181, %v5216
    %v5218 = vsub.f32 1.0, %v5217
    %v5219 = vmul.f32 %v5216, %v5218
    %v5220 = vadd.f32 %v5216, %v5219
    %vm5221 = vweird.f32 %v5181
    %vm5222 = vweird.f32 %v5216
    %vm5223 = vmor %vm5221, %vm5222
    %v5224 = vsel %vm5223, %v5216, %v5220
    %v5225 = vand.u32 2147483647, %v5181
    %vm5226 = vcmp.eq.f32.partialorder %v5225, 8.507059e+37
    %v5227 = vand.u32 %v5181, 2147483648
    %v5228 = vor.u32 1.1754944e-38, %v5227
    %v5229 = vsel %vm5226, %v5228, %v5224
    %v5230 = vmul.f32 1.0, %v5229
    %v5231 = vrcp.pop %v5182
    %v5232 = vmul.f32 %v5182, %v5231
    %v5233 = vsub.f32 1.0, %v5232
    %v5234 = vmul.f32 %v5231, %v5233
    %v5235 = vadd.f32 %v5231, %v5234
    %vm5236 = vweird.f32 %v5182
    %vm5237 = vweird.f32 %v5231
    %vm5238 = vmor %vm5236, %vm5237
    %v5239 = vsel %vm5238, %v5231, %v5235
    %v5240 = vand.u32 2147483647, %v5182
    %vm5241 = vcmp.eq.f32.partialorder %v5240, 8.507059e+37
    %v5242 = vand.u32 %v5182, 2147483648
    %v5243 = vor.u32 1.1754944e-38, %v5242
    %v5244 = vsel %vm5241, %v5243, %v5239
    %v5245 = vmul.f32 1.0, %v5244
    %v5246 = vrcp.pop %v5183
    %v5247 = vmul.f32 %v5183, %v5246
    %v5248 = vsub.f32 1.0, %v5247
    %v5249 = vmul.f32 %v5246, %v5248
    %v5250 = vadd.f32 %v5246, %v5249
    %vm5251 = vweird.f32 %v5183
    %vm5252 = vweird.f32 %v5246
    %vm5253 = vmor %vm5251, %vm5252
    %v5254 = vsel %vm5253, %v5246, %v5250
    %v5255 = vand.u32 2147483647, %v5183
    %vm5256 = vcmp.eq.f32.partialorder %v5255, 8.507059e+37
    %v5257 = vand.u32 %v5183, 2147483648
    %v5258 = vor.u32 1.1754944e-38, %v5257
    %v5259 = vsel %vm5256, %v5258, %v5254
    %v5260 = vmul.f32 1.0, %v5259
    %v5261 = vrcp.pop %v5184
    %v5262 = vmul.f32 %v5184, %v5261
    %v5263 = vsub.f32 1.0, %v5262
    %v5264 = vmul.f32 %v5261, %v5263
    %v5265 = vadd.f32 %v5261, %v5264
    %vm5266 = vweird.f32 %v5184
    %vm5267 = vweird.f32 %v5261
    %vm5268 = vmor %vm5266, %vm5267
    %v5269 = vsel %vm5268, %v5261, %v5265
    %v5270 = vand.u32 2147483647, %v5184
    %vm5271 = vcmp.eq.f32.partialorder %v5270, 8.507059e+37
    %v5272 = vand.u32 %v5184, 2147483648
    %v5273 = vor.u32 1.1754944e-38, %v5272
    %v5274 = vsel %vm5271, %v5273, %v5269
    %v5275 = vmul.f32 1.0, %v5274
    %v5276 = vrcp.pop %v5185
    %v5277 = vmul.f32 %v5185, %v5276
    %v5278 = vsub.f32 1.0, %v5277
    %v5279 = vmul.f32 %v5276, %v5278
    %v5280 = vadd.f32 %v5276, %v5279
    %vm5281 = vweird.f32 %v5185
    %vm5282 = vweird.f32 %v5276
    %vm5283 = vmor %vm5281, %vm5282
    %v5284 = vsel %vm5283, %v5276, %v5280
    %v5285 = vand.u32 2147483647, %v5185
    %vm5286 = vcmp.eq.f32.partialorder %v5285, 8.507059e+37
    %v5287 = vand.u32 %v5185, 2147483648
    %v5288 = vor.u32 1.1754944e-38, %v5287
    %v5289 = vsel %vm5286, %v5288, %v5284
    %v5290 = vmul.f32 1.0, %v5289
    %5291 = vst [vmem:[#allocation22] sm:$0xff] %v5200
    %5292 = vst [vmem:[#allocation22 + $0x8] sm:$0xff] %v5215
    %5293 = vst [vmem:[#allocation22 + $0x10] sm:$0xff] %v5230
    %5294 = vst [vmem:[#allocation22 + $0x18] sm:$0xff] %v5245
    %5295 = vst [vmem:[#allocation22 + $0x20] sm:$0xff] %v5260
    %5296 = vst [vmem:[#allocation22 + $0x28] sm:$0xff] %v5275
    %5297 = vst [vmem:[#allocation22 + $0x30] sm:$0xff] %v5290
    // Predicated region
    $region106: #{tpu_custom_call.1} parent=1 // pred_check
      _
    $region107: #{tpu_custom_call.1} parent=1 // pred_check_branch
      %5299 = sbr.rel (0) target = $region109
    $region108: #{tpu_custom_call.1} parent=1 // pred_region
      %5301 = vsyncadd [#allocation4], 0
      %s5303 = sshll.u32 [#allocation22], 4
      %s5304 = int_to_ptr.vmem [resolvable:$true] %s5303
      %s5305 = sshll.u32 %s14, 4
      %s5306 = int_to_ptr.hbm [resolvable:$true] %s5305
      %5308 = dma.vmem_to_hbm [thread:$0]  %s5304, 896, %s5306, [#allocation4]
    $region109: #{tpu_custom_call.1} parent=1 // pred_fallthru
      _
    // Predicated region
    $region110: #{tpu_custom_call.1} parent=1 // pred_check
      _
    $region111: #{tpu_custom_call.1} parent=1 // pred_check_branch
      %5310 = sbr.rel (0) target = $region113
    $region112: #{tpu_custom_call.1} parent=1 // pred_region
      %5312 = dma.done [#allocation4], 896
    $region113: #{tpu_custom_call.1} parent=1 // pred_fallthru
      _
    %5313 = vsyncpa [#allocation3], 1
    %5314 = vsyncpa [#allocation6], 1
    %5315 = vsyncpa [#allocation9], 1
    %5316 = vsyncpa [#allocation12], 1
    %5317 = vsyncpa [#allocation15], 1
    %5318 = vsyncpa [#allocation18], 1
    %5319 = vsyncpa [#allocation21], 1
    %5320 = vsyncpa [#allocation4], 1

</llo_original>
